<compile_context>
chip_gen: v7x
topology: tpu7x:2x2x1
jax: 0.10.0
libtpu: 0.0.40
codegen_flags: <defaults>
</compile_context>

<pallas_src>
import functools

import jax
import jax.numpy as jnp
import numpy as np
from jax.experimental import pallas as pl
from jax.experimental.pallas import tpu as pltpu


def odmixta_kernel(x_ref, wqkv_ref, bqkv_ref, gamma_ref, beta_ref, o_ref,
                   *, heads, seq_len):
    x = x_ref[...]                       # (G*T, D) float32
    GT, D = x.shape
    T = seq_len
    G = GT // T
    hd = D // heads

    # Fused QKV projection (scale 1/sqrt(hd) pre-folded into the q weight/bias).
    qkv = jnp.dot(x, wqkv_ref[...],
                  preferred_element_type=jnp.float32) + bqkv_ref[...]   # (G*T, 3D)

    head_outs = []
    for h in range(heads):               # static loop over heads
        q_h = qkv[:, h * hd:(h + 1) * hd].reshape(G, T, hd)
        k_h = qkv[:, D + h * hd:D + (h + 1) * hd].reshape(G, T, hd)
        v_h = qkv[:, 2 * D + h * hd:2 * D + (h + 1) * hd].reshape(G, T, hd)

        # scores (already scaled): (G, T, T)
        s = jnp.einsum('gtd,gsd->gts', q_h, k_h,
                       preferred_element_type=jnp.float32)
        # numerically stable softmax over last dim
        s = s - jnp.max(s, axis=-1, keepdims=True)
        e = jnp.exp(s)
        p = e * pl.reciprocal(jnp.sum(e, axis=-1, keepdims=True), approx=True)

        head_outs.append(jnp.einsum('gts,gsd->gtd', p, v_h,
                                    preferred_element_type=jnp.float32))

    h_all = jnp.concatenate(head_outs, axis=-1).reshape(GT, D)   # (G*T, D)

    # TODO(synk): dropout is identity (eval-mode semantics); no RNG applied.

    # Residual + LayerNorm over the feature dim (eps = 1e-5, like nn.LayerNorm).
    r = h_all + x
    mu = jnp.mean(r, axis=-1, keepdims=True)
    var = jnp.mean((r - mu) ** 2, axis=-1, keepdims=True)
    norm = (r - mu) * jax.lax.rsqrt(var + 1e-5)
    o_ref[...] = norm * gamma_ref[...] + beta_ref[...]


def odmixta_layer(x, params, heads, *, num_blocks=None):
    """x: (B, T, D) float32. params: dict of projection / LN params."""
    B, T, D = x.shape
    assert D % heads == 0
    hd = D // heads

    # Keep the grid a small, even number of large steps (v7x: 2 TensorCores).
    if num_blocks is None:
        num_blocks = 2 if B % 2 == 0 else 1
    assert B % num_blocks == 0
    G = B // num_blocks
    GT = G * T

    # Host-side fusion of the three projections; fold the 1/sqrt(hd) score
    # scale into the q columns so the kernel never scales the score tensor.
    scale = 1.0 / (hd ** 0.5)
    wqkv = jnp.concatenate(
        [params["wq"] * scale, params["wk"], params["wv"]], axis=1)   # (D, 3D)
    bqkv = jnp.concatenate(
        [params["bq"] * scale, params["bk"], params["bv"]], axis=1)   # (1, 3D)

    xf = x.reshape(B * T, D)   # free contiguous reshape

    kernel = functools.partial(odmixta_kernel, heads=heads, seq_len=T)
    out = pl.pallas_call(
        kernel,
        out_shape=jax.ShapeDtypeStruct((B * T, D), x.dtype),
        grid=(num_blocks,),
        in_specs=[
            pl.BlockSpec((GT, D), lambda i: (i, 0)),        # x row-slab
            pl.BlockSpec((D, 3 * D), lambda i: (0, 0)),     # fused Wqkv (resident)
            pl.BlockSpec((1, 3 * D), lambda i: (0, 0)),     # fused bias (resident)
            pl.BlockSpec((1, D), lambda i: (0, 0)),         # gamma
            pl.BlockSpec((1, D), lambda i: (0, 0)),         # beta
        ],
        out_specs=pl.BlockSpec((GT, D), lambda i: (i, 0)),
        compiler_params=pltpu.CompilerParams(
            dimension_semantics=("parallel",)),
    )(xf, wqkv, bqkv, params["gamma"], params["beta"])

    return out.reshape(B, T, D)


def odmixta_reference(x, params, heads):
    """Pure-JAX reference matching the PyTorch forward (eval mode)."""
    B, T, D = x.shape
    hd = D // heads
    q = x @ params["wq"] + params["bq"][0]
    k = x @ params["wk"] + params["bk"][0]
    v = x @ params["wv"] + params["bv"][0]
    q = q.reshape(B, T, heads, hd).transpose(0, 2, 1, 3)
    k = k.reshape(B, T, heads, hd).transpose(0, 2, 1, 3)
    v = v.reshape(B, T, heads, hd).transpose(0, 2, 1, 3)
    a = jnp.einsum('bhtd,bhsd->bhts', q, k) / (hd ** 0.5)
    a = jax.nn.softmax(a, axis=-1)
    h = jnp.einsum('bhts,bhsd->bhtd', a, v)
    h = h.transpose(0, 2, 1, 3).reshape(B, T, D)
    r = h + x
    mu = jnp.mean(r, axis=-1, keepdims=True)
    var = jnp.mean((r - mu) ** 2, axis=-1, keepdims=True)
    return (r - mu) / jnp.sqrt(var + 1e-5) * params["gamma"][0] + params["beta"][0]


def init_params(key, d_model):
    """Deterministic init mimicking nn.Linear / nn.LayerNorm shapes.

    Linear weights are stored pre-transposed (in, out) so forward is x @ W + b.
    """
    ks = jax.random.split(key, 8)
    bound = 1.0 / (d_model ** 0.5)
    u = lambda k, shape, lo=-bound, hi=bound: jax.random.uniform(
        k, shape, jnp.float32, lo, hi)
    return {
        "wq": u(ks[0], (d_model, d_model)), "bq": u(ks[1], (1, d_model)),
        "wk": u(ks[2], (d_model, d_model)), "bk": u(ks[3], (1, d_model)),
        "wv": u(ks[4], (d_model, d_model)), "bv": u(ks[5], (1, d_model)),
        # non-trivial LN params so the affine path is actually exercised
        "gamma": u(ks[6], (1, d_model), 0.5, 1.5),
        "beta": u(ks[7], (1, d_model), -0.5, 0.5),
    }


if __name__ == "__main__":
    heads, d_model, seq_len, batch = 4, 32, 16, 8   # hdim = 8

    key = jax.random.PRNGKey(0)
    kx, kp = jax.random.split(key)
    x = jax.random.normal(kx, (batch, seq_len, d_model), jnp.float32)
    params = init_params(kp, d_model)

    out = odmixta_layer(x, params, heads)
    out = jax.block_until_ready(out)

    ref = odmixta_reference(x, params, heads)
    np.testing.assert_allclose(np.asarray(out), np.asarray(ref),
                               rtol=2e-3, atol=2e-3)
    print("KERNEL_OK")
</pallas_src>

<mosaic_0001>
module attributes {stable_mosaic.version = 11 : i64} {
  func.func @odmixta_kernel(%arg0: i32, %arg1: memref<64x32xf32, #tpu.memory_space<vmem>>, %arg2: memref<32x96xf32, #tpu.memory_space<vmem>>, %arg3: memref<1x96xf32, #tpu.memory_space<vmem>>, %arg4: memref<1x32xf32, #tpu.memory_space<vmem>>, %arg5: memref<1x32xf32, #tpu.memory_space<vmem>>, %arg6: memref<64x32xf32, #tpu.memory_space<vmem>>) attributes {dimension_semantics = [#tpu.dimension_semantics<parallel>], iteration_bounds = array<i64: 2>, scalar_prefetch = 0 : i64, scratch_operands = 0 : i64, tpu.core_type = #tpu.core_type<tc>, window_params = [{transform_indices = @transform_0, window_bounds = array<i64: 64, 32>}, {pipeline_mode = #tpu.pipeline_mode<synchronous>, transform_indices = @transform_1, window_bounds = array<i64: 32, 96>}, {pipeline_mode = #tpu.pipeline_mode<synchronous>, transform_indices = @transform_2, window_bounds = array<i64: 1, 96>}, {pipeline_mode = #tpu.pipeline_mode<synchronous>, transform_indices = @transform_3, window_bounds = array<i64: 1, 32>}, {pipeline_mode = #tpu.pipeline_mode<synchronous>, transform_indices = @transform_4, window_bounds = array<i64: 1, 32>}, {transform_indices = @transform_5, window_bounds = array<i64: 64, 32>}]} {
    %c0 = arith.constant 0 : index
    %c0_0 = arith.constant 0 : index
    %0 = vector.load %arg1[%c0, %c0_0] : memref<64x32xf32, #tpu.memory_space<vmem>>, vector<64x32xf32>
    %c0_1 = arith.constant 0 : index
    %c0_2 = arith.constant 0 : index
    %1 = vector.load %arg2[%c0_1, %c0_2] : memref<32x96xf32, #tpu.memory_space<vmem>>, vector<32x96xf32>
    %cst = arith.constant dense<0.000000e+00> : vector<64x96xf32>
    %2 = tpu.matmul %0, %1, %cst {dimension_numbers = #tpu.dot_dimension_numbers<[1], [0], [0], [1], [0, 0, 1, 1], [], []>} : vector<64x32xf32>, vector<32x96xf32>, vector<64x96xf32> -> vector<64x96xf32>
    %c0_3 = arith.constant 0 : index
    %c0_4 = arith.constant 0 : index
    %3 = vector.load %arg3[%c0_3, %c0_4] : memref<1x96xf32, #tpu.memory_space<vmem>>, vector<1x96xf32>
    %4 = vector.broadcast %3 : vector<1x96xf32> to vector<64x96xf32>
    %5 = arith.addf %2, %4 : vector<64x96xf32>
    %6 = vector.extract_strided_slice %5 {offsets = [0, 0], sizes = [64, 8], strides = [1, 1]} : vector<64x96xf32> to vector<64x8xf32>
    %7 = vector.shape_cast %6 : vector<64x8xf32> to vector<4x16x8xf32>
    %8 = vector.extract_strided_slice %5 {offsets = [0, 32], sizes = [64, 8], strides = [1, 1]} : vector<64x96xf32> to vector<64x8xf32>
    %9 = vector.shape_cast %8 : vector<64x8xf32> to vector<4x16x8xf32>
    %10 = vector.extract_strided_slice %5 {offsets = [0, 64], sizes = [64, 8], strides = [1, 1]} : vector<64x96xf32> to vector<64x8xf32>
    %11 = vector.shape_cast %10 : vector<64x8xf32> to vector<4x16x8xf32>
    "tpu.trace_start"() <{level = 10 : i32, message = "gtd,gsd->gts"}> : () -> ()
    %cst_5 = arith.constant dense<0.000000e+00> : vector<4x16x16xf32>
    %12 = tpu.matmul %7, %9, %cst_5 {dimension_numbers = #tpu.dot_dimension_numbers<[2], [2], [1], [1], [0, 0, 0, 1, 1, 1], [0], [0]>} : vector<4x16x8xf32>, vector<4x16x8xf32>, vector<4x16x16xf32> -> vector<4x16x16xf32>
    "tpu.trace_stop"() : () -> ()
    %cst_6 = arith.constant dense<0xFF800000> : vector<4x16xf32>
    %13 = vector.multi_reduction <maximumf>, %12, %cst_6 [2] : vector<4x16x16xf32> to vector<4x16xf32>
    %14 = vector.shape_cast %13 : vector<4x16xf32> to vector<4x16x1xf32>
    %15 = vector.broadcast %14 : vector<4x16x1xf32> to vector<4x16x16xf32>
    %16 = arith.subf %12, %15 : vector<4x16x16xf32>
    %17 = math.exp %16 : vector<4x16x16xf32>
    %cst_7 = arith.constant dense<0.000000e+00> : vector<4x16xf32>
    %18 = vector.multi_reduction <add>, %17, %cst_7 [2] : vector<4x16x16xf32> to vector<4x16xf32>
    %19 = vector.shape_cast %18 : vector<4x16xf32> to vector<4x16x1xf32>
    %20 = tpu.reciprocal %19 {approx = true} : vector<4x16x1xf32> -> vector<4x16x1xf32>
    %21 = vector.broadcast %20 : vector<4x16x1xf32> to vector<4x16x16xf32>
    %22 = arith.mulf %17, %21 : vector<4x16x16xf32>
    "tpu.trace_start"() <{level = 10 : i32, message = "gts,gsd->gtd"}> : () -> ()
    %cst_8 = arith.constant dense<0.000000e+00> : vector<4x16x8xf32>
    %23 = tpu.matmul %22, %11, %cst_8 {dimension_numbers = #tpu.dot_dimension_numbers<[2], [1], [1], [2], [0, 0, 0, 1, 1, 2], [0], [0]>} : vector<4x16x16xf32>, vector<4x16x8xf32>, vector<4x16x8xf32> -> vector<4x16x8xf32>
    "tpu.trace_stop"() : () -> ()
    %24 = vector.extract_strided_slice %5 {offsets = [0, 8], sizes = [64, 8], strides = [1, 1]} : vector<64x96xf32> to vector<64x8xf32>
    %25 = vector.shape_cast %24 : vector<64x8xf32> to vector<4x16x8xf32>
    %26 = vector.extract_strided_slice %5 {offsets = [0, 40], sizes = [64, 8], strides = [1, 1]} : vector<64x96xf32> to vector<64x8xf32>
    %27 = vector.shape_cast %26 : vector<64x8xf32> to vector<4x16x8xf32>
    %28 = vector.extract_strided_slice %5 {offsets = [0, 72], sizes = [64, 8], strides = [1, 1]} : vector<64x96xf32> to vector<64x8xf32>
    %29 = vector.shape_cast %28 : vector<64x8xf32> to vector<4x16x8xf32>
    "tpu.trace_start"() <{level = 10 : i32, message = "gtd,gsd->gts"}> : () -> ()
    %cst_9 = arith.constant dense<0.000000e+00> : vector<4x16x16xf32>
    %30 = tpu.matmul %25, %27, %cst_9 {dimension_numbers = #tpu.dot_dimension_numbers<[2], [2], [1], [1], [0, 0, 0, 1, 1, 1], [0], [0]>} : vector<4x16x8xf32>, vector<4x16x8xf32>, vector<4x16x16xf32> -> vector<4x16x16xf32>
    "tpu.trace_stop"() : () -> ()
    %cst_10 = arith.constant dense<0xFF800000> : vector<4x16xf32>
    %31 = vector.multi_reduction <maximumf>, %30, %cst_10 [2] : vector<4x16x16xf32> to vector<4x16xf32>
    %32 = vector.shape_cast %31 : vector<4x16xf32> to vector<4x16x1xf32>
    %33 = vector.broadcast %32 : vector<4x16x1xf32> to vector<4x16x16xf32>
    %34 = arith.subf %30, %33 : vector<4x16x16xf32>
    %35 = math.exp %34 : vector<4x16x16xf32>
    %cst_11 = arith.constant dense<0.000000e+00> : vector<4x16xf32>
    %36 = vector.multi_reduction <add>, %35, %cst_11 [2] : vector<4x16x16xf32> to vector<4x16xf32>
    %37 = vector.shape_cast %36 : vector<4x16xf32> to vector<4x16x1xf32>
    %38 = tpu.reciprocal %37 {approx = true} : vector<4x16x1xf32> -> vector<4x16x1xf32>
    %39 = vector.broadcast %38 : vector<4x16x1xf32> to vector<4x16x16xf32>
    %40 = arith.mulf %35, %39 : vector<4x16x16xf32>
    "tpu.trace_start"() <{level = 10 : i32, message = "gts,gsd->gtd"}> : () -> ()
    %cst_12 = arith.constant dense<0.000000e+00> : vector<4x16x8xf32>
    %41 = tpu.matmul %40, %29, %cst_12 {dimension_numbers = #tpu.dot_dimension_numbers<[2], [1], [1], [2], [0, 0, 0, 1, 1, 2], [0], [0]>} : vector<4x16x16xf32>, vector<4x16x8xf32>, vector<4x16x8xf32> -> vector<4x16x8xf32>
    "tpu.trace_stop"() : () -> ()
    %42 = vector.extract_strided_slice %5 {offsets = [0, 16], sizes = [64, 8], strides = [1, 1]} : vector<64x96xf32> to vector<64x8xf32>
    %43 = vector.shape_cast %42 : vector<64x8xf32> to vector<4x16x8xf32>
    %44 = vector.extract_strided_slice %5 {offsets = [0, 48], sizes = [64, 8], strides = [1, 1]} : vector<64x96xf32> to vector<64x8xf32>
    %45 = vector.shape_cast %44 : vector<64x8xf32> to vector<4x16x8xf32>
    %46 = vector.extract_strided_slice %5 {offsets = [0, 80], sizes = [64, 8], strides = [1, 1]} : vector<64x96xf32> to vector<64x8xf32>
    %47 = vector.shape_cast %46 : vector<64x8xf32> to vector<4x16x8xf32>
    "tpu.trace_start"() <{level = 10 : i32, message = "gtd,gsd->gts"}> : () -> ()
    %cst_13 = arith.constant dense<0.000000e+00> : vector<4x16x16xf32>
    %48 = tpu.matmul %43, %45, %cst_13 {dimension_numbers = #tpu.dot_dimension_numbers<[2], [2], [1], [1], [0, 0, 0, 1, 1, 1], [0], [0]>} : vector<4x16x8xf32>, vector<4x16x8xf32>, vector<4x16x16xf32> -> vector<4x16x16xf32>
    "tpu.trace_stop"() : () -> ()
    %cst_14 = arith.constant dense<0xFF800000> : vector<4x16xf32>
    %49 = vector.multi_reduction <maximumf>, %48, %cst_14 [2] : vector<4x16x16xf32> to vector<4x16xf32>
    %50 = vector.shape_cast %49 : vector<4x16xf32> to vector<4x16x1xf32>
    %51 = vector.broadcast %50 : vector<4x16x1xf32> to vector<4x16x16xf32>
    %52 = arith.subf %48, %51 : vector<4x16x16xf32>
    %53 = math.exp %52 : vector<4x16x16xf32>
    %cst_15 = arith.constant dense<0.000000e+00> : vector<4x16xf32>
    %54 = vector.multi_reduction <add>, %53, %cst_15 [2] : vector<4x16x16xf32> to vector<4x16xf32>
    %55 = vector.shape_cast %54 : vector<4x16xf32> to vector<4x16x1xf32>
    %56 = tpu.reciprocal %55 {approx = true} : vector<4x16x1xf32> -> vector<4x16x1xf32>
    %57 = vector.broadcast %56 : vector<4x16x1xf32> to vector<4x16x16xf32>
    %58 = arith.mulf %53, %57 : vector<4x16x16xf32>
    "tpu.trace_start"() <{level = 10 : i32, message = "gts,gsd->gtd"}> : () -> ()
    %cst_16 = arith.constant dense<0.000000e+00> : vector<4x16x8xf32>
    %59 = tpu.matmul %58, %47, %cst_16 {dimension_numbers = #tpu.dot_dimension_numbers<[2], [1], [1], [2], [0, 0, 0, 1, 1, 2], [0], [0]>} : vector<4x16x16xf32>, vector<4x16x8xf32>, vector<4x16x8xf32> -> vector<4x16x8xf32>
    "tpu.trace_stop"() : () -> ()
    %60 = vector.extract_strided_slice %5 {offsets = [0, 24], sizes = [64, 8], strides = [1, 1]} : vector<64x96xf32> to vector<64x8xf32>
    %61 = vector.shape_cast %60 : vector<64x8xf32> to vector<4x16x8xf32>
    %62 = vector.extract_strided_slice %5 {offsets = [0, 56], sizes = [64, 8], strides = [1, 1]} : vector<64x96xf32> to vector<64x8xf32>
    %63 = vector.shape_cast %62 : vector<64x8xf32> to vector<4x16x8xf32>
    %64 = vector.extract_strided_slice %5 {offsets = [0, 88], sizes = [64, 8], strides = [1, 1]} : vector<64x96xf32> to vector<64x8xf32>
    %65 = vector.shape_cast %64 : vector<64x8xf32> to vector<4x16x8xf32>
    "tpu.trace_start"() <{level = 10 : i32, message = "gtd,gsd->gts"}> : () -> ()
    %cst_17 = arith.constant dense<0.000000e+00> : vector<4x16x16xf32>
    %66 = tpu.matmul %61, %63, %cst_17 {dimension_numbers = #tpu.dot_dimension_numbers<[2], [2], [1], [1], [0, 0, 0, 1, 1, 1], [0], [0]>} : vector<4x16x8xf32>, vector<4x16x8xf32>, vector<4x16x16xf32> -> vector<4x16x16xf32>
    "tpu.trace_stop"() : () -> ()
    %cst_18 = arith.constant dense<0xFF800000> : vector<4x16xf32>
    %67 = vector.multi_reduction <maximumf>, %66, %cst_18 [2] : vector<4x16x16xf32> to vector<4x16xf32>
    %68 = vector.shape_cast %67 : vector<4x16xf32> to vector<4x16x1xf32>
    %69 = vector.broadcast %68 : vector<4x16x1xf32> to vector<4x16x16xf32>
    %70 = arith.subf %66, %69 : vector<4x16x16xf32>
    %71 = math.exp %70 : vector<4x16x16xf32>
    %cst_19 = arith.constant dense<0.000000e+00> : vector<4x16xf32>
    %72 = vector.multi_reduction <add>, %71, %cst_19 [2] : vector<4x16x16xf32> to vector<4x16xf32>
    %73 = vector.shape_cast %72 : vector<4x16xf32> to vector<4x16x1xf32>
    %74 = tpu.reciprocal %73 {approx = true} : vector<4x16x1xf32> -> vector<4x16x1xf32>
    %75 = vector.broadcast %74 : vector<4x16x1xf32> to vector<4x16x16xf32>
    %76 = arith.mulf %71, %75 : vector<4x16x16xf32>
    "tpu.trace_start"() <{level = 10 : i32, message = "gts,gsd->gtd"}> : () -> ()
    %cst_20 = arith.constant dense<0.000000e+00> : vector<4x16x8xf32>
    %77 = tpu.matmul %76, %65, %cst_20 {dimension_numbers = #tpu.dot_dimension_numbers<[2], [1], [1], [2], [0, 0, 0, 1, 1, 2], [0], [0]>} : vector<4x16x16xf32>, vector<4x16x8xf32>, vector<4x16x8xf32> -> vector<4x16x8xf32>
    "tpu.trace_stop"() : () -> ()
    %78 = tpu.concatenate %23, %41, %59, %77 in 2 : vector<4x16x8xf32>, vector<4x16x8xf32>, vector<4x16x8xf32>, vector<4x16x8xf32> -> vector<4x16x32xf32>
    %79 = vector.shape_cast %78 : vector<4x16x32xf32> to vector<64x32xf32>
    %80 = arith.addf %79, %0 : vector<64x32xf32>
    %cst_21 = arith.constant dense<0.000000e+00> : vector<64xf32>
    %81 = vector.multi_reduction <add>, %80, %cst_21 [1] : vector<64x32xf32> to vector<64xf32>
    %82 = vector.shape_cast %81 : vector<64xf32> to vector<64x1xf32>
    %cst_22 = arith.constant 3.200000e+01 : f32
    %83 = vector.broadcast %cst_22 : f32 to vector<64x1xf32>
    %84 = arith.divf %82, %83 : vector<64x1xf32>
    %85 = vector.broadcast %84 : vector<64x1xf32> to vector<64x32xf32>
    %86 = arith.subf %80, %85 : vector<64x32xf32>
    %87 = arith.mulf %86, %86 : vector<64x32xf32>
    %cst_23 = arith.constant dense<0.000000e+00> : vector<64xf32>
    %88 = vector.multi_reduction <add>, %87, %cst_23 [1] : vector<64x32xf32> to vector<64xf32>
    %89 = vector.shape_cast %88 : vector<64xf32> to vector<64x1xf32>
    %cst_24 = arith.constant 3.200000e+01 : f32
    %90 = vector.broadcast %cst_24 : f32 to vector<64x1xf32>
    %91 = arith.divf %89, %90 : vector<64x1xf32>
    %92 = vector.broadcast %84 : vector<64x1xf32> to vector<64x32xf32>
    %93 = arith.subf %80, %92 : vector<64x32xf32>
    %cst_25 = arith.constant 9.99999974E-6 : f32
    %94 = vector.broadcast %cst_25 : f32 to vector<64x1xf32>
    %95 = arith.addf %91, %94 : vector<64x1xf32>
    %96 = math.rsqrt %95 : vector<64x1xf32>
    %97 = vector.broadcast %96 : vector<64x1xf32> to vector<64x32xf32>
    %98 = arith.mulf %93, %97 : vector<64x32xf32>
    %c0_26 = arith.constant 0 : index
    %c0_27 = arith.constant 0 : index
    %99 = vector.load %arg4[%c0_26, %c0_27] : memref<1x32xf32, #tpu.memory_space<vmem>>, vector<1x32xf32>
    %100 = vector.broadcast %99 : vector<1x32xf32> to vector<64x32xf32>
    %101 = arith.mulf %98, %100 : vector<64x32xf32>
    %c0_28 = arith.constant 0 : index
    %c0_29 = arith.constant 0 : index
    %102 = vector.load %arg5[%c0_28, %c0_29] : memref<1x32xf32, #tpu.memory_space<vmem>>, vector<1x32xf32>
    %103 = vector.broadcast %102 : vector<1x32xf32> to vector<64x32xf32>
    %104 = arith.addf %101, %103 : vector<64x32xf32>
    %c0_30 = arith.constant 0 : index
    %c0_31 = arith.constant 0 : index
    %105 = vector.load %arg6[%c0_30, %c0_31] : memref<64x32xf32, #tpu.memory_space<vmem>>, vector<64x32xf32>
    tpu.vector_store %arg6[%c0_30, %c0_31], %104 {strides = array<i32>} : memref<64x32xf32, #tpu.memory_space<vmem>>, vector<64x32xf32>,
    return
  }
  func.func @transform_0(%arg0: i32) -> (i32, i32) {
    %c0_i32 = arith.constant 0 : i32
    %c0_i32_0 = arith.constant 0 : i32
    return %arg0, %c0_i32 : i32, i32
  }
  func.func @transform_1(%arg0: i32) -> (i32, i32) {
    %c0_i32 = arith.constant 0 : i32
    %c0_i32_0 = arith.constant 0 : i32
    %c0_i32_1 = arith.constant 0 : i32
    return %c0_i32, %c0_i32_0 : i32, i32
  }
  func.func @transform_2(%arg0: i32) -> (i32, i32) {
    %c0_i32 = arith.constant 0 : i32
    %c0_i32_0 = arith.constant 0 : i32
    %c0_i32_1 = arith.constant 0 : i32
    return %c0_i32, %c0_i32_0 : i32, i32
  }
  func.func @transform_3(%arg0: i32) -> (i32, i32) {
    %c0_i32 = arith.constant 0 : i32
    %c0_i32_0 = arith.constant 0 : i32
    %c0_i32_1 = arith.constant 0 : i32
    return %c0_i32, %c0_i32_0 : i32, i32
  }
  func.func @transform_4(%arg0: i32) -> (i32, i32) {
    %c0_i32 = arith.constant 0 : i32
    %c0_i32_0 = arith.constant 0 : i32
    %c0_i32_1 = arith.constant 0 : i32
    return %c0_i32, %c0_i32_0 : i32, i32
  }
  func.func @transform_5(%arg0: i32) -> (i32, i32) {
    %c0_i32 = arith.constant 0 : i32
    %c0_i32_0 = arith.constant 0 : i32
    return %arg0, %c0_i32 : i32, i32
  }
}

</mosaic_0001>

<llo_original>
// kernel: tpu_custom_call.1
$region0: #{tpu_custom_call.1}
  #allocation0 [shape = 'u32[]', space=smem, size = 0x4, offset = 0x4, fixed_abs, tag = 'smem constant byte address 0x4 - core index']
  #allocation1 [shape = 'u32[144,128]{1,0:T(1,128)}', space=vmem, size = 0x12000, scoped, tag = 'internal scratch']
  %s0 = inlined_call_operand.vmem [shape: f32[128,32], index: 0, kind: input, shape index: {}]
  %s1 = inlined_call_operand.vmem [shape: f32[32,96], index: 1, kind: input, shape index: {}]
  %s2 = inlined_call_operand.vmem [shape: f32[1,96], index: 2, kind: input, shape index: {}]
  %s3 = inlined_call_operand.vmem [shape: f32[1,32], index: 3, kind: input, shape index: {}]
  %s4 = inlined_call_operand.vmem [shape: f32[1,32], index: 4, kind: input, shape index: {}]
  %s5 = inlined_call_operand.vmem [shape: f32[128,32], index: 5, kind: output, shape index: {}]
  %s6 = sld [smem:[#allocation0]]
  $region53: #{tpu_custom_call.1} parent=0
    _
  %s8 = ssub.s32 1, %s6
  %s9 = scalar_select 0, %s8, %s6
  loop: start=0, step=1, limit=4
  $region2: #{tpu_custom_call.1} parent=0 // loop_pre_header
    _
  $region3: #{tpu_custom_call.1} parent=0 // loop_header
    %s11 = sphi 0, %s15
    %p12 = scmp.ge.s32.totalorder %s11, 4
    %s21 = sphi 0, %s23
    %s24 = sphi 0, %s21
    %s25 = sphi 0, %s24
    %s41 = sphi 0, %s25
    %s45 = sphi 0, %s45
    %s47 = sphi 0, %s45
    %s48 = sphi 0, %s47
    %s62 = sphi 0, %s48
    %s66 = sphi 0, %s66
    %s68 = sphi 0, %s66
    %s69 = sphi 0, %s68
    %s83 = sphi 0, %s69
    %s87 = sphi 0, %s87
    %s89 = sphi 0, %s87
    %s90 = sphi 0, %s89
    %s104 = sphi 0, %s90
    %s108 = sphi 0, %s108
    %s110 = sphi 0, %s108
    %s111 = sphi 0, %s110
    %s125 = sphi 0, %s111
    %s131 = sphi 0, %s133
    %s134 = sphi 0, %s131
    %s135 = sphi 0, %s134
    %s151 = sphi 0, %s135
  $region4: #{tpu_custom_call.1} parent=0 // loop_header_branch
    %14 = sbr.rel (%p12) target = $region8
  $region5: #{tpu_custom_call.1} parent=0 // loop_body
    %s16 = ssub.s32 %s11, 1
    %s17 = ssub.s32 %s11, 2
    %s18 = sadd.s32 %s11, 1
    %s19 = ssub.s32 %s11, %s18
    %p20 = scmp.eq.s32.totalorder %s19, 0
    %s22 = sadd.s32 %s21, 1
    %s23 = scalar_select %p20, %s21, %s22
    %p26 = pneg %p20
    %p27 = scmp.eq.s32.totalorder %s11, 1
    %p28 = por %p26, %p27
    %p29 = scmp.ne.s32.totalorder %s21, %s24
    %p30 = scmp.eq.s32.totalorder %s11, 0
    %p31 = por %p29, %p30
    %p32 = scmp.ne.s32.totalorder %s21, %s24
    %p33 = scmp.eq.s32.totalorder %s16, 1
    %p34 = por %p32, %p33
    %p35 = scmp.ne.s32.totalorder %s24, %s25
    %p36 = scmp.eq.s32.totalorder %s16, 0
    %p37 = por %p35, %p36
    %p38 = scmp.ne.s32.totalorder %s24, %s25
    %p39 = scmp.eq.s32.totalorder %s17, 1
    %p40 = por %p38, %p39
    %p42 = scmp.ne.s32.totalorder %s25, %s41
    %p43 = scmp.eq.s32.totalorder %s17, 0
    %p44 = por %p42, %p43
    %s46 = sadd.s32 %s45, 1
    %p49 = scmp.eq.s32.totalorder %s11, 1
    %p50 = scmp.ne.s32.totalorder %s45, %s47
    %p51 = scmp.eq.s32.totalorder %s11, 0
    %p52 = por %p50, %p51
    %p53 = scmp.ne.s32.totalorder %s45, %s47
    %p54 = scmp.eq.s32.totalorder %s16, 1
    %p55 = por %p53, %p54
    %p56 = scmp.ne.s32.totalorder %s47, %s48
    %p57 = scmp.eq.s32.totalorder %s16, 0
    %p58 = por %p56, %p57
    %p59 = scmp.ne.s32.totalorder %s47, %s48
    %p60 = scmp.eq.s32.totalorder %s17, 1
    %p61 = por %p59, %p60
    %p63 = scmp.ne.s32.totalorder %s48, %s62
    %p64 = scmp.eq.s32.totalorder %s17, 0
    %p65 = por %p63, %p64
    %s67 = sadd.s32 %s66, 1
    %p70 = scmp.eq.s32.totalorder %s11, 1
    %p71 = scmp.ne.s32.totalorder %s66, %s68
    %p72 = scmp.eq.s32.totalorder %s11, 0
    %p73 = por %p71, %p72
    %p74 = scmp.ne.s32.totalorder %s66, %s68
    %p75 = scmp.eq.s32.totalorder %s16, 1
    %p76 = por %p74, %p75
    %p77 = scmp.ne.s32.totalorder %s68, %s69
    %p78 = scmp.eq.s32.totalorder %s16, 0
    %p79 = por %p77, %p78
    %p80 = scmp.ne.s32.totalorder %s68, %s69
    %p81 = scmp.eq.s32.totalorder %s17, 1
    %p82 = por %p80, %p81
    %p84 = scmp.ne.s32.totalorder %s69, %s83
    %p85 = scmp.eq.s32.totalorder %s17, 0
    %p86 = por %p84, %p85
    %s88 = sadd.s32 %s87, 1
    %p91 = scmp.eq.s32.totalorder %s11, 1
    %p92 = scmp.ne.s32.totalorder %s87, %s89
    %p93 = scmp.eq.s32.totalorder %s11, 0
    %p94 = por %p92, %p93
    %p95 = scmp.ne.s32.totalorder %s87, %s89
    %p96 = scmp.eq.s32.totalorder %s16, 1
    %p97 = por %p95, %p96
    %p98 = scmp.ne.s32.totalorder %s89, %s90
    %p99 = scmp.eq.s32.totalorder %s16, 0
    %p100 = por %p98, %p99
    %p101 = scmp.ne.s32.totalorder %s89, %s90
    %p102 = scmp.eq.s32.totalorder %s17, 1
    %p103 = por %p101, %p102
    %p105 = scmp.ne.s32.totalorder %s90, %s104
    %p106 = scmp.eq.s32.totalorder %s17, 0
    %p107 = por %p105, %p106
    %s109 = sadd.s32 %s108, 1
    %p112 = scmp.eq.s32.totalorder %s11, 1
    %p113 = scmp.ne.s32.totalorder %s108, %s110
    %p114 = scmp.eq.s32.totalorder %s11, 0
    %p115 = por %p113, %p114
    %p116 = scmp.ne.s32.totalorder %s108, %s110
    %p117 = scmp.eq.s32.totalorder %s16, 1
    %p118 = por %p116, %p117
    %p119 = scmp.ne.s32.totalorder %s110, %s111
    %p120 = scmp.eq.s32.totalorder %s16, 0
    %p121 = por %p119, %p120
    %p122 = scmp.ne.s32.totalorder %s110, %s111
    %p123 = scmp.eq.s32.totalorder %s17, 1
    %p124 = por %p122, %p123
    %p126 = scmp.ne.s32.totalorder %s111, %s125
    %p127 = scmp.eq.s32.totalorder %s17, 0
    %p128 = por %p126, %p127
    %s129 = ssub.s32 %s11, %s18
    %p130 = scmp.eq.s32.totalorder %s129, 0
    %s132 = sadd.s32 %s131, 1
    %s133 = scalar_select %p130, %s131, %s132
    %p136 = pneg %p130
    %p137 = scmp.eq.s32.totalorder %s11, 1
    %p138 = por %p136, %p137
    %p139 = scmp.ne.s32.totalorder %s131, %s134
    %p140 = scmp.eq.s32.totalorder %s11, 0
    %p141 = por %p139, %p140
    %p142 = scmp.ne.s32.totalorder %s131, %s134
    %p143 = scmp.eq.s32.totalorder %s16, 1
    %p144 = por %p142, %p143
    %p145 = scmp.ne.s32.totalorder %s134, %s135
    %p146 = scmp.eq.s32.totalorder %s16, 0
    %p147 = por %p145, %p146
    %p148 = scmp.ne.s32.totalorder %s134, %s135
    %p149 = scmp.eq.s32.totalorder %s17, 1
    %p150 = por %p148, %p149
    %p152 = scmp.ne.s32.totalorder %s135, %s151
    %p153 = scmp.eq.s32.totalorder %s17, 0
    %p154 = por %p152, %p153
    %p155 = scmp.le.s32.totalorder 1, %s11
    %p156 = scmp.lt.s32.totalorder %s11, 3
    %p157 = pnand %p155, %p156
    %p158 = pneg %p157
    // Predicated region
    $region9: #{tpu_custom_call.1} parent=5 // pred_check
      _
    $region10: #{tpu_custom_call.1} parent=5 // pred_check_branch
      %160 = sbr.rel (%p157) target = $region12
    $region11: #{tpu_custom_call.1} parent=5 // pred_region
      %s161 = ssub.s32 %s11, 1
      // Predicated region
      $region13: #{tpu_custom_call.1} parent=11 // pred_check
        %p162 = pneg %p58
      $region14: #{tpu_custom_call.1} parent=11 // pred_check_branch
        %164 = sbr.rel (%p162) target = $region16
      $region15: #{tpu_custom_call.1} parent=11 // pred_region
        _
      $region16: #{tpu_custom_call.1} parent=11 // pred_fallthru
        _
      // Predicated region
      $region17: #{tpu_custom_call.1} parent=11 // pred_check
        %p165 = pneg %p79
      $region18: #{tpu_custom_call.1} parent=11 // pred_check_branch
        %167 = sbr.rel (%p165) target = $region20
      $region19: #{tpu_custom_call.1} parent=11 // pred_region
        _
      $region20: #{tpu_custom_call.1} parent=11 // pred_fallthru
        _
      // Predicated region
      $region21: #{tpu_custom_call.1} parent=11 // pred_check
        %p168 = pneg %p100
      $region22: #{tpu_custom_call.1} parent=11 // pred_check_branch
        %170 = sbr.rel (%p168) target = $region24
      $region23: #{tpu_custom_call.1} parent=11 // pred_region
        _
      $region24: #{tpu_custom_call.1} parent=11 // pred_fallthru
        _
      // Predicated region
      $region25: #{tpu_custom_call.1} parent=11 // pred_check
        %p171 = pneg %p121
      $region26: #{tpu_custom_call.1} parent=11 // pred_check_branch
        %173 = sbr.rel (%p171) target = $region28
      $region27: #{tpu_custom_call.1} parent=11 // pred_region
        _
      $region28: #{tpu_custom_call.1} parent=11 // pred_fallthru
        _
    $region12: #{tpu_custom_call.1} parent=5 // pred_fallthru
      _
    %p174 = scmp.lt.s32.totalorder %s11, 2
    // Predicated region
    $region29: #{tpu_custom_call.1} parent=5 // pred_check
      %p175 = pneg %p174
    $region30: #{tpu_custom_call.1} parent=5 // pred_check_branch
      %177 = sbr.rel (%p175) target = $region32
    $region31: #{tpu_custom_call.1} parent=5 // pred_region
      // Predicated region
      $region33: #{tpu_custom_call.1} parent=31 // pred_check
        %p178 = pneg %p31
      $region34: #{tpu_custom_call.1} parent=31 // pred_check_branch
        %180 = sbr.rel (%p178) target = $region36
      $region35: #{tpu_custom_call.1} parent=31 // pred_region
        %s181 = smul.u32 8, %s11
        %p182 = scmp.lt.s32.totalorder %s181, 15
        %s183 = scalar_select %p182, %s181, 15
        %s184 = smul.addr %s183, 8
        %s185 = scalar_lea.vmem %s0, %s184
        %s186 = smul.u32 8, %s11
      $region36: #{tpu_custom_call.1} parent=31 // pred_fallthru
        _
    $region32: #{tpu_custom_call.1} parent=5 // pred_fallthru
      _
    %p187 = scmp.le.s32.totalorder 1, %s11
    %p188 = scmp.lt.s32.totalorder %s11, 3
    %p189 = pnand %p187, %p188
    %p190 = pneg %p189
    // Predicated region
    $region37: #{tpu_custom_call.1} parent=5 // pred_check
      _
    $region38: #{tpu_custom_call.1} parent=5 // pred_check_branch
      %192 = sbr.rel (%p189) target = $region40
    $region39: #{tpu_custom_call.1} parent=5 // pred_region
      %s193 = ssub.s32 %s11, 1
      %s194 = smul.u32 8, %s16
      %p195 = scmp.lt.s32.totalorder %s194, 15
      %s196 = scalar_select %p195, %s194, 15
      %s197 = smul.addr %s196, 8
      %s198 = scalar_lea.vmem %s0, %s197
      %p199 = pneg %p37
      %p200 = pneg %p34
      %p201 = pneg %p58
      %p202 = pneg %p55
      %p203 = pneg %p79
      %p204 = pneg %p76
      %p205 = pneg %p100
      %p206 = pneg %p97
      %p207 = pneg %p121
      %p208 = pneg %p118
      %p209 = pneg %p147
      %p210 = pneg %p144
      %s211 = smul.u32 8, %s16
      %p212 = scmp.lt.s32.totalorder %s211, 15
      %s213 = scalar_select %p212, %s211, 15
      %s214 = smul.addr %s213, 8
      %s215 = scalar_lea.vmem %s5, %s214
      %s216 = smul.u32 8, %s16
      %p217 = scmp.lt.s32.totalorder %s216, 15
      %s218 = scalar_select %p217, %s216, 15
      %s219 = smul.addr %s218, 8
      %s220 = scalar_lea.vmem %s0, %s219
      %s221 = smul.u32 8, %s16
      %s222 = smul.u32 8, %s16
      %p223 = scmp.lt.s32.totalorder %s222, 15
      %s224 = scalar_select %p223, %s222, 15
      %s225 = smul.addr %s224, 8
      %s226 = scalar_lea.vmem %s5, %s225
      %s227 = smul.u32 8, %s16
      %v228 = vld [vmem:[%s220] sm:$0xff]
      %v229 = vld [vmem:[%s220 + $0x8] sm:$0xff]
      %v230 = vld [vmem:[%s220 + $0x10] sm:$0xff]
      %v231 = vld [vmem:[%s220 + $0x18] sm:$0xff]
      %v232 = vld [vmem:[%s220 + $0x20] sm:$0xff]
      %v233 = vld [vmem:[%s220 + $0x28] sm:$0xff]
      %v234 = vld [vmem:[%s220 + $0x30] sm:$0xff]
      %v235 = vld [vmem:[%s220 + $0x38] sm:$0xff]
      %v236 = vld [vmem:[%s1] sm:$0xff]
      %v237 = vld [vmem:[%s1 + $0x8] sm:$0xff]
      %v238 = vld [vmem:[%s1 + $0x10] sm:$0xff]
      %v239 = vld [vmem:[%s1 + $0x18] sm:$0xff]
      %v240 = vld [vmem:[%s2] sm:$0x1]
      %v242 = vlaneseq
      %v243 = vshrl.u32 %v242, 7
      %v244 = vsub.s32 0, %v243
      %v245 = vrot.slane %v240, %v244
      %vm247 = vcmask 261120
      %v249 = vsel %vm247, %v228, 0
      %v252 = vsel %vm247, %v229, 0
      %v255 = vsel %vm247, %v230, 0
      %v258 = vsel %vm247, %v231, 0
      %v261 = vsel %vm247, %v232, 0
      %v264 = vsel %vm247, %v233, 0
      %v267 = vsel %vm247, %v234, 0
      %v270 = vsel %vm247, %v235, 0
      %272 = vmatprep.subr.mxu0 0.0
      %273 = vmatpush1.msra.mxu0 %v236
      %274 = vmatprep.subr.mxu0 0.0
      %275 = vmatpush1.msra.mxu0 %v237
      %276 = vmatprep.subr.mxu0 0.0
      %277 = vmatpush1.msra.mxu0 %v238
      %278 = vmatprep.subr.mxu0 0.0
      %279 = vmatpush1.msra.mxu0 %v239
      %280 = vmatprep.subr.mxu0 0.0
      %281 = vmatpush1.msra.mxu0 0.0
      %282 = vmatprep.subr.mxu0 0.0
      %283 = vmatpush1.msra.mxu0 0.0
      %284 = vmatprep.subr.mxu0 0.0
      %285 = vmatpush1.msra.mxu0 0.0
      %286 = vmatprep.subr.mxu0 0.0
      %287 = vmatpush1.msra.mxu0 0.0
      %288 = vmatprep.subr.mxu0 0.0
      %289 = vmatpush1.msra.mxu0 0.0
      %290 = vmatprep.subr.mxu0 0.0
      %291 = vmatpush1.msra.mxu0 0.0
      %292 = vmatprep.subr.mxu0 0.0
      %293 = vmatpush1.msra.mxu0 0.0
      %294 = vmatprep.subr.mxu0 0.0
      %295 = vmatpush1.msra.mxu0 0.0
      %296 = vmatprep.subr.mxu0 0.0
      %297 = vmatpush1.msra.mxu0 0.0
      %298 = vmatprep.subr.mxu0 0.0
      %299 = vmatpush1.msra.mxu0 0.0
      %300 = vmatprep.subr.mxu0 0.0
      %301 = vmatpush1.msra.mxu0 0.0
      %302 = vmatprep.subr.mxu0 0.0
      %303 = vmatpush1.msra.mxu0 0.0
      %304 = vmatprep.subr.mxu0 0.0
      %305 = vmatpush1.msra.mxu0 0.0
      %306 = vmatprep.subr.mxu0 0.0
      %307 = vmatpush1.msra.mxu0 0.0
      %308 = vmatprep.subr.mxu0 0.0
      %309 = vmatpush1.msra.mxu0 0.0
      %310 = vmatprep.subr.mxu0 0.0
      %311 = vmatpush1.msra.mxu0 0.0
      %312 = vmatprep.subr.mxu0 0.0
      %313 = vmatpush1.msra.mxu0 0.0
      %314 = vmatprep.subr.mxu0 0.0
      %315 = vmatpush1.msra.mxu0 0.0
      %316 = vmatprep.subr.mxu0 0.0
      %317 = vmatpush1.msra.mxu0 0.0
      %318 = vmatprep.subr.mxu0 0.0
      %319 = vmatpush1.msra.mxu0 0.0
      %320 = vmatprep.subr.mxu0 0.0
      %321 = vmatpush1.msra.mxu0 0.0
      %322 = vmatprep.subr.mxu0 0.0
      %323 = vmatpush1.msra.mxu0 0.0
      %324 = vmatprep.subr.mxu0 0.0
      %325 = vmatpush1.msra.mxu0 0.0
      %326 = vmatprep.subr.mxu0 0.0
      %327 = vmatpush1.msra.mxu0 0.0
      %328 = vmatprep.subr.mxu0 0.0
      %329 = vmatpush1.msra.mxu0 0.0
      %330 = vmatprep.subr.mxu0 0.0
      %331 = vmatpush1.msra.mxu0 0.0
      %332 = vmatprep.subr.mxu0 0.0
      %333 = vmatpush1.msra.mxu0 0.0
      %334 = vmatprep.subr.mxu0 0.0
      %335 = vmatpush1.msra.mxu0 0.0
      %336 = vmatprep.mubr.f32.mxu0 0.0
      %337 = vmatmul.mubr.f32.gmra.mrb[0].mxu0 %v249
      %v338 = vpop.f32.mrb[0].mxu0
      %v339 = vadd.f32 %v245, %v338
      %v340 = vpop.f32.mrb[0].mxu0
      %341 = vmatprep.mubr.f32.mxu0 0.0
      %342 = vmatmul.mubr.f32.gmra.mrb[0].mxu0 %v252
      %v343 = vpop.f32.mrb[0].mxu0
      %v344 = vadd.f32 %v245, %v343
      %v345 = vpop.f32.mrb[0].mxu0
      %346 = vmatprep.mubr.f32.mxu0 0.0
      %347 = vmatmul.mubr.f32.gmra.mrb[0].mxu0 %v255
      %v348 = vpop.f32.mrb[0].mxu0
      %v349 = vadd.f32 %v245, %v348
      %v350 = vpop.f32.mrb[0].mxu0
      %351 = vmatprep.mubr.f32.mxu0 0.0
      %352 = vmatmul.mubr.f32.gmra.mrb[0].mxu0 %v258
      %v353 = vpop.f32.mrb[0].mxu0
      %v354 = vadd.f32 %v245, %v353
      %v355 = vpop.f32.mrb[0].mxu0
      %356 = vmatprep.mubr.f32.mxu0 0.0
      %357 = vmatmul.mubr.f32.gmra.mrb[0].mxu0 %v261
      %v358 = vpop.f32.mrb[0].mxu0
      %v359 = vadd.f32 %v245, %v358
      %v360 = vpop.f32.mrb[0].mxu0
      %361 = vmatprep.mubr.f32.mxu0 0.0
      %362 = vmatmul.mubr.f32.gmra.mrb[0].mxu0 %v264
      %v363 = vpop.f32.mrb[0].mxu0
      %v364 = vadd.f32 %v245, %v363
      %v365 = vpop.f32.mrb[0].mxu0
      %366 = vmatprep.mubr.f32.mxu0 0.0
      %367 = vmatmul.mubr.f32.gmra.mrb[0].mxu0 %v267
      %v368 = vpop.f32.mrb[0].mxu0
      %v369 = vadd.f32 %v245, %v368
      %v370 = vpop.f32.mrb[0].mxu0
      %371 = vmatprep.mubr.f32.mxu0 0.0
      %372 = vmatmul.mubr.f32.gmra.mrb[0].mxu0 %v270
      %v373 = vpop.f32.mrb[0].mxu0
      %v374 = vadd.f32 %v245, %v373
      %v375 = vpop.f32.mrb[0].mxu0
      %376 = vdwg.mxu0
      %379 = vrot.lane.b32.xlu0 %v339, 96
      %v380 = vpop.permute.xlu0 %379
      %381 = vrot.lane.b32.xlu0 %v344, 96
      %v382 = vpop.permute.xlu0 %381
      %vm383 = vcmask 64512
      %v384 = vsel %vm383, %v339, 0
      %v386 = vsel %vm383, %v344, 0
      %v388 = vsel %vm383, %v380, 0
      %v390 = vsel %vm383, %v382, 0
      %392 = vmatprep.subr.mxu0 0.0
      %393 = vmatpush1.xpose.msra.mxu0 %v388
      %394 = vmatprep.subr.mxu0 0.0
      %395 = vmatpush1.xpose.msra.mxu0 %v390
      %396 = vmatprep.subr.mxu0 0.0
      %397 = vmatpush1.xpose.msra.mxu0 0.0
      %398 = vmatprep.subr.mxu0 0.0
      %399 = vmatpush1.xpose.msra.mxu0 0.0
      %400 = vmatprep.subr.mxu0 0.0
      %401 = vmatpush1.xpose.msra.mxu0 0.0
      %402 = vmatprep.subr.mxu0 0.0
      %403 = vmatpush1.xpose.msra.mxu0 0.0
      %404 = vmatprep.subr.mxu0 0.0
      %405 = vmatpush1.xpose.msra.mxu0 0.0
      %406 = vmatprep.subr.mxu0 0.0
      %407 = vmatpush1.xpose.msra.mxu0 0.0
      %408 = vmatprep.subr.mxu0 0.0
      %409 = vmatpush1.xpose.msra.mxu0 0.0
      %410 = vmatprep.subr.mxu0 0.0
      %411 = vmatpush1.xpose.msra.mxu0 0.0
      %412 = vmatprep.subr.mxu0 0.0
      %413 = vmatpush1.xpose.msra.mxu0 0.0
      %414 = vmatprep.subr.mxu0 0.0
      %415 = vmatpush1.xpose.msra.mxu0 0.0
      %416 = vmatprep.subr.mxu0 0.0
      %417 = vmatpush1.xpose.msra.mxu0 0.0
      %418 = vmatprep.subr.mxu0 0.0
      %419 = vmatpush1.xpose.msra.mxu0 0.0
      %420 = vmatprep.subr.mxu0 0.0
      %421 = vmatpush1.xpose.msra.mxu0 0.0
      %422 = vmatprep.subr.mxu0 0.0
      %423 = vmatpush1.xpose.msra.mxu0 0.0
      %424 = vmatprep.subr.mxu0 0.0
      %425 = vmatpush1.xpose.msra.mxu0 0.0
      %426 = vmatprep.subr.mxu0 0.0
      %427 = vmatpush1.xpose.msra.mxu0 0.0
      %428 = vmatprep.subr.mxu0 0.0
      %429 = vmatpush1.xpose.msra.mxu0 0.0
      %430 = vmatprep.subr.mxu0 0.0
      %431 = vmatpush1.xpose.msra.mxu0 0.0
      %432 = vmatprep.subr.mxu0 0.0
      %433 = vmatpush1.xpose.msra.mxu0 0.0
      %434 = vmatprep.subr.mxu0 0.0
      %435 = vmatpush1.xpose.msra.mxu0 0.0
      %436 = vmatprep.subr.mxu0 0.0
      %437 = vmatpush1.xpose.msra.mxu0 0.0
      %438 = vmatprep.subr.mxu0 0.0
      %439 = vmatpush1.xpose.msra.mxu0 0.0
      %440 = vmatprep.subr.mxu0 0.0
      %441 = vmatpush1.xpose.msra.mxu0 0.0
      %442 = vmatprep.subr.mxu0 0.0
      %443 = vmatpush1.xpose.msra.mxu0 0.0
      %444 = vmatprep.subr.mxu0 0.0
      %445 = vmatpush1.xpose.msra.mxu0 0.0
      %446 = vmatprep.subr.mxu0 0.0
      %447 = vmatpush1.xpose.msra.mxu0 0.0
      %448 = vmatprep.subr.mxu0 0.0
      %449 = vmatpush1.xpose.msra.mxu0 0.0
      %450 = vmatprep.subr.mxu0 0.0
      %451 = vmatpush1.xpose.msra.mxu0 0.0
      %452 = vmatprep.subr.mxu0 0.0
      %453 = vmatpush1.xpose.msra.mxu0 0.0
      %454 = vmatprep.subr.mxu0 0.0
      %455 = vmatpush1.xpose.msra.mxu0 0.0
      %456 = vmatprep.mubr.f32.mxu0 0.0
      %457 = vmatmul.mubr.f32.gmra.mrb[0].mxu0 %v384
      %v458 = vpop.f32.mrb[0].mxu0
      %v459 = vadd.f32 0.0, %v458
      %v460 = vpop.f32.mrb[0].mxu0
      %461 = vmatprep.mubr.f32.mxu0 0.0
      %462 = vmatmul.mubr.f32.gmra.mrb[0].mxu0 %v386
      %v463 = vpop.f32.mrb[0].mxu0
      %v464 = vadd.f32 0.0, %v463
      %v465 = vpop.f32.mrb[0].mxu0
      %466 = vdwg.mxu0
      %469 = vrot.lane.b32.xlu0 %v349, 96
      %v470 = vpop.permute.xlu0 %469
      %471 = vrot.lane.b32.xlu0 %v354, 96
      %v472 = vpop.permute.xlu0 %471
      %v473 = vsel %vm383, %v349, 0
      %v475 = vsel %vm383, %v354, 0
      %v477 = vsel %vm383, %v470, 0
      %v479 = vsel %vm383, %v472, 0
      %481 = vmatprep.subr.mxu0 0.0
      %482 = vmatpush1.xpose.msra.mxu0 %v477
      %483 = vmatprep.subr.mxu0 0.0
      %484 = vmatpush1.xpose.msra.mxu0 %v479
      %485 = vmatprep.subr.mxu0 0.0
      %486 = vmatpush1.xpose.msra.mxu0 0.0
      %487 = vmatprep.subr.mxu0 0.0
      %488 = vmatpush1.xpose.msra.mxu0 0.0
      %489 = vmatprep.subr.mxu0 0.0
      %490 = vmatpush1.xpose.msra.mxu0 0.0
      %491 = vmatprep.subr.mxu0 0.0
      %492 = vmatpush1.xpose.msra.mxu0 0.0
      %493 = vmatprep.subr.mxu0 0.0
      %494 = vmatpush1.xpose.msra.mxu0 0.0
      %495 = vmatprep.subr.mxu0 0.0
      %496 = vmatpush1.xpose.msra.mxu0 0.0
      %497 = vmatprep.subr.mxu0 0.0
      %498 = vmatpush1.xpose.msra.mxu0 0.0
      %499 = vmatprep.subr.mxu0 0.0
      %500 = vmatpush1.xpose.msra.mxu0 0.0
      %501 = vmatprep.subr.mxu0 0.0
      %502 = vmatpush1.xpose.msra.mxu0 0.0
      %503 = vmatprep.subr.mxu0 0.0
      %504 = vmatpush1.xpose.msra.mxu0 0.0
      %505 = vmatprep.subr.mxu0 0.0
      %506 = vmatpush1.xpose.msra.mxu0 0.0
      %507 = vmatprep.subr.mxu0 0.0
      %508 = vmatpush1.xpose.msra.mxu0 0.0
      %509 = vmatprep.subr.mxu0 0.0
      %510 = vmatpush1.xpose.msra.mxu0 0.0
      %511 = vmatprep.subr.mxu0 0.0
      %512 = vmatpush1.xpose.msra.mxu0 0.0
      %513 = vmatprep.subr.mxu0 0.0
      %514 = vmatpush1.xpose.msra.mxu0 0.0
      %515 = vmatprep.subr.mxu0 0.0
      %516 = vmatpush1.xpose.msra.mxu0 0.0
      %517 = vmatprep.subr.mxu0 0.0
      %518 = vmatpush1.xpose.msra.mxu0 0.0
      %519 = vmatprep.subr.mxu0 0.0
      %520 = vmatpush1.xpose.msra.mxu0 0.0
      %521 = vmatprep.subr.mxu0 0.0
      %522 = vmatpush1.xpose.msra.mxu0 0.0
      %523 = vmatprep.subr.mxu0 0.0
      %524 = vmatpush1.xpose.msra.mxu0 0.0
      %525 = vmatprep.subr.mxu0 0.0
      %526 = vmatpush1.xpose.msra.mxu0 0.0
      %527 = vmatprep.subr.mxu0 0.0
      %528 = vmatpush1.xpose.msra.mxu0 0.0
      %529 = vmatprep.subr.mxu0 0.0
      %530 = vmatpush1.xpose.msra.mxu0 0.0
      %531 = vmatprep.subr.mxu0 0.0
      %532 = vmatpush1.xpose.msra.mxu0 0.0
      %533 = vmatprep.subr.mxu0 0.0
      %534 = vmatpush1.xpose.msra.mxu0 0.0
      %535 = vmatprep.subr.mxu0 0.0
      %536 = vmatpush1.xpose.msra.mxu0 0.0
      %537 = vmatprep.subr.mxu0 0.0
      %538 = vmatpush1.xpose.msra.mxu0 0.0
      %539 = vmatprep.subr.mxu0 0.0
      %540 = vmatpush1.xpose.msra.mxu0 0.0
      %541 = vmatprep.subr.mxu0 0.0
      %542 = vmatpush1.xpose.msra.mxu0 0.0
      %543 = vmatprep.subr.mxu0 0.0
      %544 = vmatpush1.xpose.msra.mxu0 0.0
      %545 = vmatprep.mubr.f32.mxu0 0.0
      %546 = vmatmul.mubr.f32.gmra.mrb[0].mxu0 %v473
      %v547 = vpop.f32.mrb[0].mxu0
      %v548 = vadd.f32 0.0, %v547
      %v549 = vpop.f32.mrb[0].mxu0
      %550 = vmatprep.mubr.f32.mxu0 0.0
      %551 = vmatmul.mubr.f32.gmra.mrb[0].mxu0 %v475
      %v552 = vpop.f32.mrb[0].mxu0
      %v553 = vadd.f32 0.0, %v552
      %v554 = vpop.f32.mrb[0].mxu0
      %555 = vdwg.mxu0
      %558 = vrot.lane.b32.xlu0 %v359, 96
      %v559 = vpop.permute.xlu0 %558
      %560 = vrot.lane.b32.xlu0 %v364, 96
      %v561 = vpop.permute.xlu0 %560
      %v562 = vsel %vm383, %v359, 0
      %v564 = vsel %vm383, %v364, 0
      %v566 = vsel %vm383, %v559, 0
      %v568 = vsel %vm383, %v561, 0
      %570 = vmatprep.subr.mxu0 0.0
      %571 = vmatpush1.xpose.msra.mxu0 %v566
      %572 = vmatprep.subr.mxu0 0.0
      %573 = vmatpush1.xpose.msra.mxu0 %v568
      %574 = vmatprep.subr.mxu0 0.0
      %575 = vmatpush1.xpose.msra.mxu0 0.0
      %576 = vmatprep.subr.mxu0 0.0
      %577 = vmatpush1.xpose.msra.mxu0 0.0
      %578 = vmatprep.subr.mxu0 0.0
      %579 = vmatpush1.xpose.msra.mxu0 0.0
      %580 = vmatprep.subr.mxu0 0.0
      %581 = vmatpush1.xpose.msra.mxu0 0.0
      %582 = vmatprep.subr.mxu0 0.0
      %583 = vmatpush1.xpose.msra.mxu0 0.0
      %584 = vmatprep.subr.mxu0 0.0
      %585 = vmatpush1.xpose.msra.mxu0 0.0
      %586 = vmatprep.subr.mxu0 0.0
      %587 = vmatpush1.xpose.msra.mxu0 0.0
      %588 = vmatprep.subr.mxu0 0.0
      %589 = vmatpush1.xpose.msra.mxu0 0.0
      %590 = vmatprep.subr.mxu0 0.0
      %591 = vmatpush1.xpose.msra.mxu0 0.0
      %592 = vmatprep.subr.mxu0 0.0
      %593 = vmatpush1.xpose.msra.mxu0 0.0
      %594 = vmatprep.subr.mxu0 0.0
      %595 = vmatpush1.xpose.msra.mxu0 0.0
      %596 = vmatprep.subr.mxu0 0.0
      %597 = vmatpush1.xpose.msra.mxu0 0.0
      %598 = vmatprep.subr.mxu0 0.0
      %599 = vmatpush1.xpose.msra.mxu0 0.0
      %600 = vmatprep.subr.mxu0 0.0
      %601 = vmatpush1.xpose.msra.mxu0 0.0
      %602 = vmatprep.subr.mxu0 0.0
      %603 = vmatpush1.xpose.msra.mxu0 0.0
      %604 = vmatprep.subr.mxu0 0.0
      %605 = vmatpush1.xpose.msra.mxu0 0.0
      %606 = vmatprep.subr.mxu0 0.0
      %607 = vmatpush1.xpose.msra.mxu0 0.0
      %608 = vmatprep.subr.mxu0 0.0
      %609 = vmatpush1.xpose.msra.mxu0 0.0
      %610 = vmatprep.subr.mxu0 0.0
      %611 = vmatpush1.xpose.msra.mxu0 0.0
      %612 = vmatprep.subr.mxu0 0.0
      %613 = vmatpush1.xpose.msra.mxu0 0.0
      %614 = vmatprep.subr.mxu0 0.0
      %615 = vmatpush1.xpose.msra.mxu0 0.0
      %616 = vmatprep.subr.mxu0 0.0
      %617 = vmatpush1.xpose.msra.mxu0 0.0
      %618 = vmatprep.subr.mxu0 0.0
      %619 = vmatpush1.xpose.msra.mxu0 0.0
      %620 = vmatprep.subr.mxu0 0.0
      %621 = vmatpush1.xpose.msra.mxu0 0.0
      %622 = vmatprep.subr.mxu0 0.0
      %623 = vmatpush1.xpose.msra.mxu0 0.0
      %624 = vmatprep.subr.mxu0 0.0
      %625 = vmatpush1.xpose.msra.mxu0 0.0
      %626 = vmatprep.subr.mxu0 0.0
      %627 = vmatpush1.xpose.msra.mxu0 0.0
      %628 = vmatprep.subr.mxu0 0.0
      %629 = vmatpush1.xpose.msra.mxu0 0.0
      %630 = vmatprep.subr.mxu0 0.0
      %631 = vmatpush1.xpose.msra.mxu0 0.0
      %632 = vmatprep.subr.mxu0 0.0
      %633 = vmatpush1.xpose.msra.mxu0 0.0
      %634 = vmatprep.mubr.f32.mxu0 0.0
      %635 = vmatmul.mubr.f32.gmra.mrb[0].mxu0 %v562
      %v636 = vpop.f32.mrb[0].mxu0
      %v637 = vadd.f32 0.0, %v636
      %v638 = vpop.f32.mrb[0].mxu0
      %639 = vmatprep.mubr.f32.mxu0 0.0
      %640 = vmatmul.mubr.f32.gmra.mrb[0].mxu0 %v564
      %v641 = vpop.f32.mrb[0].mxu0
      %v642 = vadd.f32 0.0, %v641
      %v643 = vpop.f32.mrb[0].mxu0
      %644 = vdwg.mxu0
      %647 = vrot.lane.b32.xlu0 %v369, 96
      %v648 = vpop.permute.xlu0 %647
      %649 = vrot.lane.b32.xlu0 %v374, 96
      %v650 = vpop.permute.xlu0 %649
      %v651 = vsel %vm383, %v369, 0
      %v653 = vsel %vm383, %v374, 0
      %v655 = vsel %vm383, %v648, 0
      %v657 = vsel %vm383, %v650, 0
      %659 = vmatprep.subr.mxu0 0.0
      %660 = vmatpush1.xpose.msra.mxu0 %v655
      %661 = vmatprep.subr.mxu0 0.0
      %662 = vmatpush1.xpose.msra.mxu0 %v657
      %663 = vmatprep.subr.mxu0 0.0
      %664 = vmatpush1.xpose.msra.mxu0 0.0
      %665 = vmatprep.subr.mxu0 0.0
      %666 = vmatpush1.xpose.msra.mxu0 0.0
      %667 = vmatprep.subr.mxu0 0.0
      %668 = vmatpush1.xpose.msra.mxu0 0.0
      %669 = vmatprep.subr.mxu0 0.0
      %670 = vmatpush1.xpose.msra.mxu0 0.0
      %671 = vmatprep.subr.mxu0 0.0
      %672 = vmatpush1.xpose.msra.mxu0 0.0
      %673 = vmatprep.subr.mxu0 0.0
      %674 = vmatpush1.xpose.msra.mxu0 0.0
      %675 = vmatprep.subr.mxu0 0.0
      %676 = vmatpush1.xpose.msra.mxu0 0.0
      %677 = vmatprep.subr.mxu0 0.0
      %678 = vmatpush1.xpose.msra.mxu0 0.0
      %679 = vmatprep.subr.mxu0 0.0
      %680 = vmatpush1.xpose.msra.mxu0 0.0
      %681 = vmatprep.subr.mxu0 0.0
      %682 = vmatpush1.xpose.msra.mxu0 0.0
      %683 = vmatprep.subr.mxu0 0.0
      %684 = vmatpush1.xpose.msra.mxu0 0.0
      %685 = vmatprep.subr.mxu0 0.0
      %686 = vmatpush1.xpose.msra.mxu0 0.0
      %687 = vmatprep.subr.mxu0 0.0
      %688 = vmatpush1.xpose.msra.mxu0 0.0
      %689 = vmatprep.subr.mxu0 0.0
      %690 = vmatpush1.xpose.msra.mxu0 0.0
      %691 = vmatprep.subr.mxu0 0.0
      %692 = vmatpush1.xpose.msra.mxu0 0.0
      %693 = vmatprep.subr.mxu0 0.0
      %694 = vmatpush1.xpose.msra.mxu0 0.0
      %695 = vmatprep.subr.mxu0 0.0
      %696 = vmatpush1.xpose.msra.mxu0 0.0
      %697 = vmatprep.subr.mxu0 0.0
      %698 = vmatpush1.xpose.msra.mxu0 0.0
      %699 = vmatprep.subr.mxu0 0.0
      %700 = vmatpush1.xpose.msra.mxu0 0.0
      %701 = vmatprep.subr.mxu0 0.0
      %702 = vmatpush1.xpose.msra.mxu0 0.0
      %703 = vmatprep.subr.mxu0 0.0
      %704 = vmatpush1.xpose.msra.mxu0 0.0
      %705 = vmatprep.subr.mxu0 0.0
      %706 = vmatpush1.xpose.msra.mxu0 0.0
      %707 = vmatprep.subr.mxu0 0.0
      %708 = vmatpush1.xpose.msra.mxu0 0.0
      %709 = vmatprep.subr.mxu0 0.0
      %710 = vmatpush1.xpose.msra.mxu0 0.0
      %711 = vmatprep.subr.mxu0 0.0
      %712 = vmatpush1.xpose.msra.mxu0 0.0
      %713 = vmatprep.subr.mxu0 0.0
      %714 = vmatpush1.xpose.msra.mxu0 0.0
      %715 = vmatprep.subr.mxu0 0.0
      %716 = vmatpush1.xpose.msra.mxu0 0.0
      %717 = vmatprep.subr.mxu0 0.0
      %718 = vmatpush1.xpose.msra.mxu0 0.0
      %719 = vmatprep.subr.mxu0 0.0
      %720 = vmatpush1.xpose.msra.mxu0 0.0
      %721 = vmatprep.subr.mxu0 0.0
      %722 = vmatpush1.xpose.msra.mxu0 0.0
      %723 = vmatprep.mubr.f32.mxu0 0.0
      %724 = vmatmul.mubr.f32.gmra.mrb[0].mxu0 %v651
      %v725 = vpop.f32.mrb[0].mxu0
      %v726 = vadd.f32 0.0, %v725
      %v727 = vpop.f32.mrb[0].mxu0
      %728 = vmatprep.mubr.f32.mxu0 0.0
      %729 = vmatmul.mubr.f32.gmra.mrb[0].mxu0 %v653
      %v730 = vpop.f32.mrb[0].mxu0
      %v731 = vadd.f32 0.0, %v730
      %v732 = vpop.f32.mrb[0].mxu0
      %733 = vdwg.mxu0
      %vm734 = vcmask 130048
      %v735 = vsel %vm734, %v459, -inf
      %736 = vmax.xlane.f32.xlu0 %v735
      %v737 = vpop.xlane.xlu0 %736
      %v738 = vsel %vm734, %v464, -inf
      %739 = vmax.xlane.f32.xlu0 %v738
      %v740 = vpop.xlane.xlu0 %739
      %v741 = vsel %vm734, %v548, -inf
      %742 = vmax.xlane.f32.xlu0 %v741
      %v743 = vpop.xlane.xlu0 %742
      %v744 = vsel %vm734, %v553, -inf
      %745 = vmax.xlane.f32.xlu0 %v744
      %v746 = vpop.xlane.xlu0 %745
      %v747 = vsel %vm734, %v637, -inf
      %748 = vmax.xlane.f32.xlu0 %v747
      %v749 = vpop.xlane.xlu0 %748
      %v750 = vsel %vm734, %v642, -inf
      %751 = vmax.xlane.f32.xlu0 %v750
      %v752 = vpop.xlane.xlu0 %751
      %v753 = vsel %vm734, %v726, -inf
      %754 = vmax.xlane.f32.xlu0 %v753
      %v755 = vpop.xlane.xlu0 %754
      %v756 = vsel %vm734, %v731, -inf
      %757 = vmax.xlane.f32.xlu0 %v756
      %v758 = vpop.xlane.xlu0 %757
      %v759 = vsub.f32 %v459, %v737
      %v760 = vsub.f32 %v464, %v740
      %v761 = vsub.f32 %v548, %v743
      %v762 = vsub.f32 %v553, %v746
      %v763 = vsub.f32 %v637, %v749
      %v764 = vsub.f32 %v642, %v752
      %v765 = vsub.f32 %v726, %v755
      %v766 = vsub.f32 %v731, %v758
      %v767 = vmul.f32 %v759, 1.442695
      %v768 = vpow.pop %v767
      %v769 = vmul.f32 %v760, 1.442695
      %v770 = vpow.pop %v769
      %v771 = vmul.f32 %v761, 1.442695
      %v772 = vpow.pop %v771
      %v773 = vmul.f32 %v762, 1.442695
      %v774 = vpow.pop %v773
      %v775 = vmul.f32 %v763, 1.442695
      %v776 = vpow.pop %v775
      %v777 = vmul.f32 %v764, 1.442695
      %v778 = vpow.pop %v777
      %v779 = vmul.f32 %v765, 1.442695
      %v780 = vpow.pop %v779
      %v781 = vmul.f32 %v766, 1.442695
      %v782 = vpow.pop %v781
      %v783 = vsel %vm734, %v768, 0.0
      %784 = vadd.xlane.f32.xlu0 %v783
      %v785 = vpop.xlane.xlu0 %784
      %v786 = vsel %vm734, %v770, 0.0
      %787 = vadd.xlane.f32.xlu0 %v786
      %v788 = vpop.xlane.xlu0 %787
      %v789 = vsel %vm734, %v772, 0.0
      %790 = vadd.xlane.f32.xlu0 %v789
      %v791 = vpop.xlane.xlu0 %790
      %v792 = vsel %vm734, %v774, 0.0
      %793 = vadd.xlane.f32.xlu0 %v792
      %v794 = vpop.xlane.xlu0 %793
      %v795 = vsel %vm734, %v776, 0.0
      %796 = vadd.xlane.f32.xlu0 %v795
      %v797 = vpop.xlane.xlu0 %796
      %v798 = vsel %vm734, %v778, 0.0
      %799 = vadd.xlane.f32.xlu0 %v798
      %v800 = vpop.xlane.xlu0 %799
      %v801 = vsel %vm734, %v780, 0.0
      %802 = vadd.xlane.f32.xlu0 %v801
      %v803 = vpop.xlane.xlu0 %802
      %v804 = vsel %vm734, %v782, 0.0
      %805 = vadd.xlane.f32.xlu0 %v804
      %v806 = vpop.xlane.xlu0 %805
      %v807 = vrcp.pop %v785
      %v808 = vrcp.pop %v788
      %v809 = vrcp.pop %v791
      %v810 = vrcp.pop %v794
      %v811 = vrcp.pop %v797
      %v812 = vrcp.pop %v800
      %v813 = vrcp.pop %v803
      %v814 = vrcp.pop %v806
      %v815 = vmul.f32 %v768, %v807
      %v816 = vmul.f32 %v770, %v808
      %v817 = vmul.f32 %v772, %v809
      %v818 = vmul.f32 %v774, %v810
      %v819 = vmul.f32 %v776, %v811
      %v820 = vmul.f32 %v778, %v812
      %v821 = vmul.f32 %v780, %v813
      %v822 = vmul.f32 %v782, %v814
      %823 = vrot.lane.b32.xlu0 %v339, 64
      %v824 = vpop.permute.xlu0 %823
      %825 = vrot.lane.b32.xlu0 %v344, 64
      %v826 = vpop.permute.xlu0 %825
      %v830 = vsel %vm734, %v815, 0
      %v833 = vsel %vm734, %v816, 0
      %835 = vmatprep.subr.mxu0 0.0
      %836 = vmatpush1.msra.mxu0 %v824
      %837 = vmatprep.subr.mxu0 0.0
      %838 = vmatpush1.msra.mxu0 %v826
      %839 = vmatprep.subr.mxu0 0.0
      %840 = vmatpush1.msra.mxu0 0.0
      %841 = vmatprep.subr.mxu0 0.0
      %842 = vmatpush1.msra.mxu0 0.0
      %843 = vmatprep.subr.mxu0 0.0
      %844 = vmatpush1.msra.mxu0 0.0
      %845 = vmatprep.subr.mxu0 0.0
      %846 = vmatpush1.msra.mxu0 0.0
      %847 = vmatprep.subr.mxu0 0.0
      %848 = vmatpush1.msra.mxu0 0.0
      %849 = vmatprep.subr.mxu0 0.0
      %850 = vmatpush1.msra.mxu0 0.0
      %851 = vmatprep.subr.mxu0 0.0
      %852 = vmatpush1.msra.mxu0 0.0
      %853 = vmatprep.subr.mxu0 0.0
      %854 = vmatpush1.msra.mxu0 0.0
      %855 = vmatprep.subr.mxu0 0.0
      %856 = vmatpush1.msra.mxu0 0.0
      %857 = vmatprep.subr.mxu0 0.0
      %858 = vmatpush1.msra.mxu0 0.0
      %859 = vmatprep.subr.mxu0 0.0
      %860 = vmatpush1.msra.mxu0 0.0
      %861 = vmatprep.subr.mxu0 0.0
      %862 = vmatpush1.msra.mxu0 0.0
      %863 = vmatprep.subr.mxu0 0.0
      %864 = vmatpush1.msra.mxu0 0.0
      %865 = vmatprep.subr.mxu0 0.0
      %866 = vmatpush1.msra.mxu0 0.0
      %867 = vmatprep.subr.mxu0 0.0
      %868 = vmatpush1.msra.mxu0 0.0
      %869 = vmatprep.subr.mxu0 0.0
      %870 = vmatpush1.msra.mxu0 0.0
      %871 = vmatprep.subr.mxu0 0.0
      %872 = vmatpush1.msra.mxu0 0.0
      %873 = vmatprep.subr.mxu0 0.0
      %874 = vmatpush1.msra.mxu0 0.0
      %875 = vmatprep.subr.mxu0 0.0
      %876 = vmatpush1.msra.mxu0 0.0
      %877 = vmatprep.subr.mxu0 0.0
      %878 = vmatpush1.msra.mxu0 0.0
      %879 = vmatprep.subr.mxu0 0.0
      %880 = vmatpush1.msra.mxu0 0.0
      %881 = vmatprep.subr.mxu0 0.0
      %882 = vmatpush1.msra.mxu0 0.0
      %883 = vmatprep.subr.mxu0 0.0
      %884 = vmatpush1.msra.mxu0 0.0
      %885 = vmatprep.subr.mxu0 0.0
      %886 = vmatpush1.msra.mxu0 0.0
      %887 = vmatprep.subr.mxu0 0.0
      %888 = vmatpush1.msra.mxu0 0.0
      %889 = vmatprep.subr.mxu0 0.0
      %890 = vmatpush1.msra.mxu0 0.0
      %891 = vmatprep.subr.mxu0 0.0
      %892 = vmatpush1.msra.mxu0 0.0
      %893 = vmatprep.subr.mxu0 0.0
      %894 = vmatpush1.msra.mxu0 0.0
      %895 = vmatprep.subr.mxu0 0.0
      %896 = vmatpush1.msra.mxu0 0.0
      %897 = vmatprep.subr.mxu0 0.0
      %898 = vmatpush1.msra.mxu0 0.0
      %899 = vmatprep.mubr.f32.mxu0 0.0
      %900 = vmatmul.mubr.f32.gmra.mrb[0].mxu0 %v830
      %v901 = vpop.f32.mrb[0].mxu0
      %v902 = vadd.f32 0.0, %v901
      %v903 = vpop.f32.mrb[0].mxu0
      %904 = vmatprep.mubr.f32.mxu0 0.0
      %905 = vmatmul.mubr.f32.gmra.mrb[0].mxu0 %v833
      %v906 = vpop.f32.mrb[0].mxu0
      %v907 = vadd.f32 0.0, %v906
      %v908 = vpop.f32.mrb[0].mxu0
      %909 = vdwg.mxu0
      %910 = vrot.lane.b32.xlu0 %v349, 64
      %v911 = vpop.permute.xlu0 %910
      %912 = vrot.lane.b32.xlu0 %v354, 64
      %v913 = vpop.permute.xlu0 %912
      %v917 = vsel %vm734, %v817, 0
      %v920 = vsel %vm734, %v818, 0
      %922 = vmatprep.subr.mxu0 0.0
      %923 = vmatpush1.msra.mxu0 %v911
      %924 = vmatprep.subr.mxu0 0.0
      %925 = vmatpush1.msra.mxu0 %v913
      %926 = vmatprep.subr.mxu0 0.0
      %927 = vmatpush1.msra.mxu0 0.0
      %928 = vmatprep.subr.mxu0 0.0
      %929 = vmatpush1.msra.mxu0 0.0
      %930 = vmatprep.subr.mxu0 0.0
      %931 = vmatpush1.msra.mxu0 0.0
      %932 = vmatprep.subr.mxu0 0.0
      %933 = vmatpush1.msra.mxu0 0.0
      %934 = vmatprep.subr.mxu0 0.0
      %935 = vmatpush1.msra.mxu0 0.0
      %936 = vmatprep.subr.mxu0 0.0
      %937 = vmatpush1.msra.mxu0 0.0
      %938 = vmatprep.subr.mxu0 0.0
      %939 = vmatpush1.msra.mxu0 0.0
      %940 = vmatprep.subr.mxu0 0.0
      %941 = vmatpush1.msra.mxu0 0.0
      %942 = vmatprep.subr.mxu0 0.0
      %943 = vmatpush1.msra.mxu0 0.0
      %944 = vmatprep.subr.mxu0 0.0
      %945 = vmatpush1.msra.mxu0 0.0
      %946 = vmatprep.subr.mxu0 0.0
      %947 = vmatpush1.msra.mxu0 0.0
      %948 = vmatprep.subr.mxu0 0.0
      %949 = vmatpush1.msra.mxu0 0.0
      %950 = vmatprep.subr.mxu0 0.0
      %951 = vmatpush1.msra.mxu0 0.0
      %952 = vmatprep.subr.mxu0 0.0
      %953 = vmatpush1.msra.mxu0 0.0
      %954 = vmatprep.subr.mxu0 0.0
      %955 = vmatpush1.msra.mxu0 0.0
      %956 = vmatprep.subr.mxu0 0.0
      %957 = vmatpush1.msra.mxu0 0.0
      %958 = vmatprep.subr.mxu0 0.0
      %959 = vmatpush1.msra.mxu0 0.0
      %960 = vmatprep.subr.mxu0 0.0
      %961 = vmatpush1.msra.mxu0 0.0
      %962 = vmatprep.subr.mxu0 0.0
      %963 = vmatpush1.msra.mxu0 0.0
      %964 = vmatprep.subr.mxu0 0.0
      %965 = vmatpush1.msra.mxu0 0.0
      %966 = vmatprep.subr.mxu0 0.0
      %967 = vmatpush1.msra.mxu0 0.0
      %968 = vmatprep.subr.mxu0 0.0
      %969 = vmatpush1.msra.mxu0 0.0
      %970 = vmatprep.subr.mxu0 0.0
      %971 = vmatpush1.msra.mxu0 0.0
      %972 = vmatprep.subr.mxu0 0.0
      %973 = vmatpush1.msra.mxu0 0.0
      %974 = vmatprep.subr.mxu0 0.0
      %975 = vmatpush1.msra.mxu0 0.0
      %976 = vmatprep.subr.mxu0 0.0
      %977 = vmatpush1.msra.mxu0 0.0
      %978 = vmatprep.subr.mxu0 0.0
      %979 = vmatpush1.msra.mxu0 0.0
      %980 = vmatprep.subr.mxu0 0.0
      %981 = vmatpush1.msra.mxu0 0.0
      %982 = vmatprep.subr.mxu0 0.0
      %983 = vmatpush1.msra.mxu0 0.0
      %984 = vmatprep.subr.mxu0 0.0
      %985 = vmatpush1.msra.mxu0 0.0
      %986 = vmatprep.mubr.f32.mxu0 0.0
      %987 = vmatmul.mubr.f32.gmra.mrb[0].mxu0 %v917
      %v988 = vpop.f32.mrb[0].mxu0
      %v989 = vadd.f32 0.0, %v988
      %v990 = vpop.f32.mrb[0].mxu0
      %991 = vmatprep.mubr.f32.mxu0 0.0
      %992 = vmatmul.mubr.f32.gmra.mrb[0].mxu0 %v920
      %v993 = vpop.f32.mrb[0].mxu0
      %v994 = vadd.f32 0.0, %v993
      %v995 = vpop.f32.mrb[0].mxu0
      %996 = vdwg.mxu0
      %997 = vrot.lane.b32.xlu0 %v359, 64
      %v998 = vpop.permute.xlu0 %997
      %999 = vrot.lane.b32.xlu0 %v364, 64
      %v1000 = vpop.permute.xlu0 %999
      %v1004 = vsel %vm734, %v819, 0
      %v1007 = vsel %vm734, %v820, 0
      %1009 = vmatprep.subr.mxu0 0.0
      %1010 = vmatpush1.msra.mxu0 %v998
      %1011 = vmatprep.subr.mxu0 0.0
      %1012 = vmatpush1.msra.mxu0 %v1000
      %1013 = vmatprep.subr.mxu0 0.0
      %1014 = vmatpush1.msra.mxu0 0.0
      %1015 = vmatprep.subr.mxu0 0.0
      %1016 = vmatpush1.msra.mxu0 0.0
      %1017 = vmatprep.subr.mxu0 0.0
      %1018 = vmatpush1.msra.mxu0 0.0
      %1019 = vmatprep.subr.mxu0 0.0
      %1020 = vmatpush1.msra.mxu0 0.0
      %1021 = vmatprep.subr.mxu0 0.0
      %1022 = vmatpush1.msra.mxu0 0.0
      %1023 = vmatprep.subr.mxu0 0.0
      %1024 = vmatpush1.msra.mxu0 0.0
      %1025 = vmatprep.subr.mxu0 0.0
      %1026 = vmatpush1.msra.mxu0 0.0
      %1027 = vmatprep.subr.mxu0 0.0
      %1028 = vmatpush1.msra.mxu0 0.0
      %1029 = vmatprep.subr.mxu0 0.0
      %1030 = vmatpush1.msra.mxu0 0.0
      %1031 = vmatprep.subr.mxu0 0.0
      %1032 = vmatpush1.msra.mxu0 0.0
      %1033 = vmatprep.subr.mxu0 0.0
      %1034 = vmatpush1.msra.mxu0 0.0
      %1035 = vmatprep.subr.mxu0 0.0
      %1036 = vmatpush1.msra.mxu0 0.0
      %1037 = vmatprep.subr.mxu0 0.0
      %1038 = vmatpush1.msra.mxu0 0.0
      %1039 = vmatprep.subr.mxu0 0.0
      %1040 = vmatpush1.msra.mxu0 0.0
      %1041 = vmatprep.subr.mxu0 0.0
      %1042 = vmatpush1.msra.mxu0 0.0
      %1043 = vmatprep.subr.mxu0 0.0
      %1044 = vmatpush1.msra.mxu0 0.0
      %1045 = vmatprep.subr.mxu0 0.0
      %1046 = vmatpush1.msra.mxu0 0.0
      %1047 = vmatprep.subr.mxu0 0.0
      %1048 = vmatpush1.msra.mxu0 0.0
      %1049 = vmatprep.subr.mxu0 0.0
      %1050 = vmatpush1.msra.mxu0 0.0
      %1051 = vmatprep.subr.mxu0 0.0
      %1052 = vmatpush1.msra.mxu0 0.0
      %1053 = vmatprep.subr.mxu0 0.0
      %1054 = vmatpush1.msra.mxu0 0.0
      %1055 = vmatprep.subr.mxu0 0.0
      %1056 = vmatpush1.msra.mxu0 0.0
      %1057 = vmatprep.subr.mxu0 0.0
      %1058 = vmatpush1.msra.mxu0 0.0
      %1059 = vmatprep.subr.mxu0 0.0
      %1060 = vmatpush1.msra.mxu0 0.0
      %1061 = vmatprep.subr.mxu0 0.0
      %1062 = vmatpush1.msra.mxu0 0.0
      %1063 = vmatprep.subr.mxu0 0.0
      %1064 = vmatpush1.msra.mxu0 0.0
      %1065 = vmatprep.subr.mxu0 0.0
      %1066 = vmatpush1.msra.mxu0 0.0
      %1067 = vmatprep.subr.mxu0 0.0
      %1068 = vmatpush1.msra.mxu0 0.0
      %1069 = vmatprep.subr.mxu0 0.0
      %1070 = vmatpush1.msra.mxu0 0.0
      %1071 = vmatprep.subr.mxu0 0.0
      %1072 = vmatpush1.msra.mxu0 0.0
      %1073 = vmatprep.mubr.f32.mxu0 0.0
      %1074 = vmatmul.mubr.f32.gmra.mrb[0].mxu0 %v1004
      %v1075 = vpop.f32.mrb[0].mxu0
      %v1076 = vadd.f32 0.0, %v1075
      %v1077 = vpop.f32.mrb[0].mxu0
      %1078 = vmatprep.mubr.f32.mxu0 0.0
      %1079 = vmatmul.mubr.f32.gmra.mrb[0].mxu0 %v1007
      %v1080 = vpop.f32.mrb[0].mxu0
      %v1081 = vadd.f32 0.0, %v1080
      %v1082 = vpop.f32.mrb[0].mxu0
      %1083 = vdwg.mxu0
      %1084 = vrot.lane.b32.xlu0 %v369, 64
      %v1085 = vpop.permute.xlu0 %1084
      %1086 = vrot.lane.b32.xlu0 %v374, 64
      %v1087 = vpop.permute.xlu0 %1086
      %v1091 = vsel %vm734, %v821, 0
      %v1094 = vsel %vm734, %v822, 0
      %1096 = vmatprep.subr.mxu0 0.0
      %1097 = vmatpush1.msra.mxu0 %v1085
      %1098 = vmatprep.subr.mxu0 0.0
      %1099 = vmatpush1.msra.mxu0 %v1087
      %1100 = vmatprep.subr.mxu0 0.0
      %1101 = vmatpush1.msra.mxu0 0.0
      %1102 = vmatprep.subr.mxu0 0.0
      %1103 = vmatpush1.msra.mxu0 0.0
      %1104 = vmatprep.subr.mxu0 0.0
      %1105 = vmatpush1.msra.mxu0 0.0
      %1106 = vmatprep.subr.mxu0 0.0
      %1107 = vmatpush1.msra.mxu0 0.0
      %1108 = vmatprep.subr.mxu0 0.0
      %1109 = vmatpush1.msra.mxu0 0.0
      %1110 = vmatprep.subr.mxu0 0.0
      %1111 = vmatpush1.msra.mxu0 0.0
      %1112 = vmatprep.subr.mxu0 0.0
      %1113 = vmatpush1.msra.mxu0 0.0
      %1114 = vmatprep.subr.mxu0 0.0
      %1115 = vmatpush1.msra.mxu0 0.0
      %1116 = vmatprep.subr.mxu0 0.0
      %1117 = vmatpush1.msra.mxu0 0.0
      %1118 = vmatprep.subr.mxu0 0.0
      %1119 = vmatpush1.msra.mxu0 0.0
      %1120 = vmatprep.subr.mxu0 0.0
      %1121 = vmatpush1.msra.mxu0 0.0
      %1122 = vmatprep.subr.mxu0 0.0
      %1123 = vmatpush1.msra.mxu0 0.0
      %1124 = vmatprep.subr.mxu0 0.0
      %1125 = vmatpush1.msra.mxu0 0.0
      %1126 = vmatprep.subr.mxu0 0.0
      %1127 = vmatpush1.msra.mxu0 0.0
      %1128 = vmatprep.subr.mxu0 0.0
      %1129 = vmatpush1.msra.mxu0 0.0
      %1130 = vmatprep.subr.mxu0 0.0
      %1131 = vmatpush1.msra.mxu0 0.0
      %1132 = vmatprep.subr.mxu0 0.0
      %1133 = vmatpush1.msra.mxu0 0.0
      %1134 = vmatprep.subr.mxu0 0.0
      %1135 = vmatpush1.msra.mxu0 0.0
      %1136 = vmatprep.subr.mxu0 0.0
      %1137 = vmatpush1.msra.mxu0 0.0
      %1138 = vmatprep.subr.mxu0 0.0
      %1139 = vmatpush1.msra.mxu0 0.0
      %1140 = vmatprep.subr.mxu0 0.0
      %1141 = vmatpush1.msra.mxu0 0.0
      %1142 = vmatprep.subr.mxu0 0.0
      %1143 = vmatpush1.msra.mxu0 0.0
      %1144 = vmatprep.subr.mxu0 0.0
      %1145 = vmatpush1.msra.mxu0 0.0
      %1146 = vmatprep.subr.mxu0 0.0
      %1147 = vmatpush1.msra.mxu0 0.0
      %1148 = vmatprep.subr.mxu0 0.0
      %1149 = vmatpush1.msra.mxu0 0.0
      %1150 = vmatprep.subr.mxu0 0.0
      %1151 = vmatpush1.msra.mxu0 0.0
      %1152 = vmatprep.subr.mxu0 0.0
      %1153 = vmatpush1.msra.mxu0 0.0
      %1154 = vmatprep.subr.mxu0 0.0
      %1155 = vmatpush1.msra.mxu0 0.0
      %1156 = vmatprep.subr.mxu0 0.0
      %1157 = vmatpush1.msra.mxu0 0.0
      %1158 = vmatprep.subr.mxu0 0.0
      %1159 = vmatpush1.msra.mxu0 0.0
      %1160 = vmatprep.mubr.f32.mxu0 0.0
      %1161 = vmatmul.mubr.f32.gmra.mrb[0].mxu0 %v1091
      %v1162 = vpop.f32.mrb[0].mxu0
      %v1163 = vadd.f32 0.0, %v1162
      %v1164 = vpop.f32.mrb[0].mxu0
      %1165 = vmatprep.mubr.f32.mxu0 0.0
      %1166 = vmatmul.mubr.f32.gmra.mrb[0].mxu0 %v1094
      %v1167 = vpop.f32.mrb[0].mxu0
      %v1168 = vadd.f32 0.0, %v1167
      %v1169 = vpop.f32.mrb[0].mxu0
      %1170 = vdwg.mxu0
      %1171 = vrot.lane.b32.xlu0 %v339, 120
      %v1172 = vpop.permute.xlu0 %1171
      %1173 = vrot.lane.b32.xlu0 %v344, 120
      %v1174 = vpop.permute.xlu0 %1173
      %1175 = vrot.lane.b32.xlu0 %v339, 88
      %v1176 = vpop.permute.xlu0 %1175
      %1177 = vrot.lane.b32.xlu0 %v344, 88
      %v1178 = vpop.permute.xlu0 %1177
      %v1179 = vsel %vm383, %v1172, 0
      %v1181 = vsel %vm383, %v1174, 0
      %v1183 = vsel %vm383, %v1176, 0
      %v1185 = vsel %vm383, %v1178, 0
      %1187 = vmatprep.subr.mxu0 0.0
      %1188 = vmatpush1.xpose.msra.mxu0 %v1183
      %1189 = vmatprep.subr.mxu0 0.0
      %1190 = vmatpush1.xpose.msra.mxu0 %v1185
      %1191 = vmatprep.subr.mxu0 0.0
      %1192 = vmatpush1.xpose.msra.mxu0 0.0
      %1193 = vmatprep.subr.mxu0 0.0
      %1194 = vmatpush1.xpose.msra.mxu0 0.0
      %1195 = vmatprep.subr.mxu0 0.0
      %1196 = vmatpush1.xpose.msra.mxu0 0.0
      %1197 = vmatprep.subr.mxu0 0.0
      %1198 = vmatpush1.xpose.msra.mxu0 0.0
      %1199 = vmatprep.subr.mxu0 0.0
      %1200 = vmatpush1.xpose.msra.mxu0 0.0
      %1201 = vmatprep.subr.mxu0 0.0
      %1202 = vmatpush1.xpose.msra.mxu0 0.0
      %1203 = vmatprep.subr.mxu0 0.0
      %1204 = vmatpush1.xpose.msra.mxu0 0.0
      %1205 = vmatprep.subr.mxu0 0.0
      %1206 = vmatpush1.xpose.msra.mxu0 0.0
      %1207 = vmatprep.subr.mxu0 0.0
      %1208 = vmatpush1.xpose.msra.mxu0 0.0
      %1209 = vmatprep.subr.mxu0 0.0
      %1210 = vmatpush1.xpose.msra.mxu0 0.0
      %1211 = vmatprep.subr.mxu0 0.0
      %1212 = vmatpush1.xpose.msra.mxu0 0.0
      %1213 = vmatprep.subr.mxu0 0.0
      %1214 = vmatpush1.xpose.msra.mxu0 0.0
      %1215 = vmatprep.subr.mxu0 0.0
      %1216 = vmatpush1.xpose.msra.mxu0 0.0
      %1217 = vmatprep.subr.mxu0 0.0
      %1218 = vmatpush1.xpose.msra.mxu0 0.0
      %1219 = vmatprep.subr.mxu0 0.0
      %1220 = vmatpush1.xpose.msra.mxu0 0.0
      %1221 = vmatprep.subr.mxu0 0.0
      %1222 = vmatpush1.xpose.msra.mxu0 0.0
      %1223 = vmatprep.subr.mxu0 0.0
      %1224 = vmatpush1.xpose.msra.mxu0 0.0
      %1225 = vmatprep.subr.mxu0 0.0
      %1226 = vmatpush1.xpose.msra.mxu0 0.0
      %1227 = vmatprep.subr.mxu0 0.0
      %1228 = vmatpush1.xpose.msra.mxu0 0.0
      %1229 = vmatprep.subr.mxu0 0.0
      %1230 = vmatpush1.xpose.msra.mxu0 0.0
      %1231 = vmatprep.subr.mxu0 0.0
      %1232 = vmatpush1.xpose.msra.mxu0 0.0
      %1233 = vmatprep.subr.mxu0 0.0
      %1234 = vmatpush1.xpose.msra.mxu0 0.0
      %1235 = vmatprep.subr.mxu0 0.0
      %1236 = vmatpush1.xpose.msra.mxu0 0.0
      %1237 = vmatprep.subr.mxu0 0.0
      %1238 = vmatpush1.xpose.msra.mxu0 0.0
      %1239 = vmatprep.subr.mxu0 0.0
      %1240 = vmatpush1.xpose.msra.mxu0 0.0
      %1241 = vmatprep.subr.mxu0 0.0
      %1242 = vmatpush1.xpose.msra.mxu0 0.0
      %1243 = vmatprep.subr.mxu0 0.0
      %1244 = vmatpush1.xpose.msra.mxu0 0.0
      %1245 = vmatprep.subr.mxu0 0.0
      %1246 = vmatpush1.xpose.msra.mxu0 0.0
      %1247 = vmatprep.subr.mxu0 0.0
      %1248 = vmatpush1.xpose.msra.mxu0 0.0
      %1249 = vmatprep.subr.mxu0 0.0
      %1250 = vmatpush1.xpose.msra.mxu0 0.0
      %1251 = vmatprep.mubr.f32.mxu0 0.0
      %1252 = vmatmul.mubr.f32.gmra.mrb[0].mxu0 %v1179
      %v1253 = vpop.f32.mrb[0].mxu0
      %v1254 = vadd.f32 0.0, %v1253
      %v1255 = vpop.f32.mrb[0].mxu0
      %1256 = vmatprep.mubr.f32.mxu0 0.0
      %1257 = vmatmul.mubr.f32.gmra.mrb[0].mxu0 %v1181
      %v1258 = vpop.f32.mrb[0].mxu0
      %v1259 = vadd.f32 0.0, %v1258
      %v1260 = vpop.f32.mrb[0].mxu0
      %1261 = vdwg.mxu0
      %1262 = vrot.lane.b32.xlu0 %v349, 120
      %v1263 = vpop.permute.xlu0 %1262
      %1264 = vrot.lane.b32.xlu0 %v354, 120
      %v1265 = vpop.permute.xlu0 %1264
      %1266 = vrot.lane.b32.xlu0 %v349, 88
      %v1267 = vpop.permute.xlu0 %1266
      %1268 = vrot.lane.b32.xlu0 %v354, 88
      %v1269 = vpop.permute.xlu0 %1268
      %v1270 = vsel %vm383, %v1263, 0
      %v1272 = vsel %vm383, %v1265, 0
      %v1274 = vsel %vm383, %v1267, 0
      %v1276 = vsel %vm383, %v1269, 0
      %1278 = vmatprep.subr.mxu0 0.0
      %1279 = vmatpush1.xpose.msra.mxu0 %v1274
      %1280 = vmatprep.subr.mxu0 0.0
      %1281 = vmatpush1.xpose.msra.mxu0 %v1276
      %1282 = vmatprep.subr.mxu0 0.0
      %1283 = vmatpush1.xpose.msra.mxu0 0.0
      %1284 = vmatprep.subr.mxu0 0.0
      %1285 = vmatpush1.xpose.msra.mxu0 0.0
      %1286 = vmatprep.subr.mxu0 0.0
      %1287 = vmatpush1.xpose.msra.mxu0 0.0
      %1288 = vmatprep.subr.mxu0 0.0
      %1289 = vmatpush1.xpose.msra.mxu0 0.0
      %1290 = vmatprep.subr.mxu0 0.0
      %1291 = vmatpush1.xpose.msra.mxu0 0.0
      %1292 = vmatprep.subr.mxu0 0.0
      %1293 = vmatpush1.xpose.msra.mxu0 0.0
      %1294 = vmatprep.subr.mxu0 0.0
      %1295 = vmatpush1.xpose.msra.mxu0 0.0
      %1296 = vmatprep.subr.mxu0 0.0
      %1297 = vmatpush1.xpose.msra.mxu0 0.0
      %1298 = vmatprep.subr.mxu0 0.0
      %1299 = vmatpush1.xpose.msra.mxu0 0.0
      %1300 = vmatprep.subr.mxu0 0.0
      %1301 = vmatpush1.xpose.msra.mxu0 0.0
      %1302 = vmatprep.subr.mxu0 0.0
      %1303 = vmatpush1.xpose.msra.mxu0 0.0
      %1304 = vmatprep.subr.mxu0 0.0
      %1305 = vmatpush1.xpose.msra.mxu0 0.0
      %1306 = vmatprep.subr.mxu0 0.0
      %1307 = vmatpush1.xpose.msra.mxu0 0.0
      %1308 = vmatprep.subr.mxu0 0.0
      %1309 = vmatpush1.xpose.msra.mxu0 0.0
      %1310 = vmatprep.subr.mxu0 0.0
      %1311 = vmatpush1.xpose.msra.mxu0 0.0
      %1312 = vmatprep.subr.mxu0 0.0
      %1313 = vmatpush1.xpose.msra.mxu0 0.0
      %1314 = vmatprep.subr.mxu0 0.0
      %1315 = vmatpush1.xpose.msra.mxu0 0.0
      %1316 = vmatprep.subr.mxu0 0.0
      %1317 = vmatpush1.xpose.msra.mxu0 0.0
      %1318 = vmatprep.subr.mxu0 0.0
      %1319 = vmatpush1.xpose.msra.mxu0 0.0
      %1320 = vmatprep.subr.mxu0 0.0
      %1321 = vmatpush1.xpose.msra.mxu0 0.0
      %1322 = vmatprep.subr.mxu0 0.0
      %1323 = vmatpush1.xpose.msra.mxu0 0.0
      %1324 = vmatprep.subr.mxu0 0.0
      %1325 = vmatpush1.xpose.msra.mxu0 0.0
      %1326 = vmatprep.subr.mxu0 0.0
      %1327 = vmatpush1.xpose.msra.mxu0 0.0
      %1328 = vmatprep.subr.mxu0 0.0
      %1329 = vmatpush1.xpose.msra.mxu0 0.0
      %1330 = vmatprep.subr.mxu0 0.0
      %1331 = vmatpush1.xpose.msra.mxu0 0.0
      %1332 = vmatprep.subr.mxu0 0.0
      %1333 = vmatpush1.xpose.msra.mxu0 0.0
      %1334 = vmatprep.subr.mxu0 0.0
      %1335 = vmatpush1.xpose.msra.mxu0 0.0
      %1336 = vmatprep.subr.mxu0 0.0
      %1337 = vmatpush1.xpose.msra.mxu0 0.0
      %1338 = vmatprep.subr.mxu0 0.0
      %1339 = vmatpush1.xpose.msra.mxu0 0.0
      %1340 = vmatprep.subr.mxu0 0.0
      %1341 = vmatpush1.xpose.msra.mxu0 0.0
      %1342 = vmatprep.mubr.f32.mxu0 0.0
      %1343 = vmatmul.mubr.f32.gmra.mrb[0].mxu0 %v1270
      %v1344 = vpop.f32.mrb[0].mxu0
      %v1345 = vadd.f32 0.0, %v1344
      %v1346 = vpop.f32.mrb[0].mxu0
      %1347 = vmatprep.mubr.f32.mxu0 0.0
      %1348 = vmatmul.mubr.f32.gmra.mrb[0].mxu0 %v1272
      %v1349 = vpop.f32.mrb[0].mxu0
      %v1350 = vadd.f32 0.0, %v1349
      %v1351 = vpop.f32.mrb[0].mxu0
      %1352 = vdwg.mxu0
      %1353 = vrot.lane.b32.xlu0 %v359, 120
      %v1354 = vpop.permute.xlu0 %1353
      %1355 = vrot.lane.b32.xlu0 %v364, 120
      %v1356 = vpop.permute.xlu0 %1355
      %1357 = vrot.lane.b32.xlu0 %v359, 88
      %v1358 = vpop.permute.xlu0 %1357
      %1359 = vrot.lane.b32.xlu0 %v364, 88
      %v1360 = vpop.permute.xlu0 %1359
      %v1361 = vsel %vm383, %v1354, 0
      %v1363 = vsel %vm383, %v1356, 0
      %v1365 = vsel %vm383, %v1358, 0
      %v1367 = vsel %vm383, %v1360, 0
      %1369 = vmatprep.subr.mxu0 0.0
      %1370 = vmatpush1.xpose.msra.mxu0 %v1365
      %1371 = vmatprep.subr.mxu0 0.0
      %1372 = vmatpush1.xpose.msra.mxu0 %v1367
      %1373 = vmatprep.subr.mxu0 0.0
      %1374 = vmatpush1.xpose.msra.mxu0 0.0
      %1375 = vmatprep.subr.mxu0 0.0
      %1376 = vmatpush1.xpose.msra.mxu0 0.0
      %1377 = vmatprep.subr.mxu0 0.0
      %1378 = vmatpush1.xpose.msra.mxu0 0.0
      %1379 = vmatprep.subr.mxu0 0.0
      %1380 = vmatpush1.xpose.msra.mxu0 0.0
      %1381 = vmatprep.subr.mxu0 0.0
      %1382 = vmatpush1.xpose.msra.mxu0 0.0
      %1383 = vmatprep.subr.mxu0 0.0
      %1384 = vmatpush1.xpose.msra.mxu0 0.0
      %1385 = vmatprep.subr.mxu0 0.0
      %1386 = vmatpush1.xpose.msra.mxu0 0.0
      %1387 = vmatprep.subr.mxu0 0.0
      %1388 = vmatpush1.xpose.msra.mxu0 0.0
      %1389 = vmatprep.subr.mxu0 0.0
      %1390 = vmatpush1.xpose.msra.mxu0 0.0
      %1391 = vmatprep.subr.mxu0 0.0
      %1392 = vmatpush1.xpose.msra.mxu0 0.0
      %1393 = vmatprep.subr.mxu0 0.0
      %1394 = vmatpush1.xpose.msra.mxu0 0.0
      %1395 = vmatprep.subr.mxu0 0.0
      %1396 = vmatpush1.xpose.msra.mxu0 0.0
      %1397 = vmatprep.subr.mxu0 0.0
      %1398 = vmatpush1.xpose.msra.mxu0 0.0
      %1399 = vmatprep.subr.mxu0 0.0
      %1400 = vmatpush1.xpose.msra.mxu0 0.0
      %1401 = vmatprep.subr.mxu0 0.0
      %1402 = vmatpush1.xpose.msra.mxu0 0.0
      %1403 = vmatprep.subr.mxu0 0.0
      %1404 = vmatpush1.xpose.msra.mxu0 0.0
      %1405 = vmatprep.subr.mxu0 0.0
      %1406 = vmatpush1.xpose.msra.mxu0 0.0
      %1407 = vmatprep.subr.mxu0 0.0
      %1408 = vmatpush1.xpose.msra.mxu0 0.0
      %1409 = vmatprep.subr.mxu0 0.0
      %1410 = vmatpush1.xpose.msra.mxu0 0.0
      %1411 = vmatprep.subr.mxu0 0.0
      %1412 = vmatpush1.xpose.msra.mxu0 0.0
      %1413 = vmatprep.subr.mxu0 0.0
      %1414 = vmatpush1.xpose.msra.mxu0 0.0
      %1415 = vmatprep.subr.mxu0 0.0
      %1416 = vmatpush1.xpose.msra.mxu0 0.0
      %1417 = vmatprep.subr.mxu0 0.0
      %1418 = vmatpush1.xpose.msra.mxu0 0.0
      %1419 = vmatprep.subr.mxu0 0.0
      %1420 = vmatpush1.xpose.msra.mxu0 0.0
      %1421 = vmatprep.subr.mxu0 0.0
      %1422 = vmatpush1.xpose.msra.mxu0 0.0
      %1423 = vmatprep.subr.mxu0 0.0
      %1424 = vmatpush1.xpose.msra.mxu0 0.0
      %1425 = vmatprep.subr.mxu0 0.0
      %1426 = vmatpush1.xpose.msra.mxu0 0.0
      %1427 = vmatprep.subr.mxu0 0.0
      %1428 = vmatpush1.xpose.msra.mxu0 0.0
      %1429 = vmatprep.subr.mxu0 0.0
      %1430 = vmatpush1.xpose.msra.mxu0 0.0
      %1431 = vmatprep.subr.mxu0 0.0
      %1432 = vmatpush1.xpose.msra.mxu0 0.0
      %1433 = vmatprep.mubr.f32.mxu0 0.0
      %1434 = vmatmul.mubr.f32.gmra.mrb[0].mxu0 %v1361
      %v1435 = vpop.f32.mrb[0].mxu0
      %v1436 = vadd.f32 0.0, %v1435
      %v1437 = vpop.f32.mrb[0].mxu0
      %1438 = vmatprep.mubr.f32.mxu0 0.0
      %1439 = vmatmul.mubr.f32.gmra.mrb[0].mxu0 %v1363
      %v1440 = vpop.f32.mrb[0].mxu0
      %v1441 = vadd.f32 0.0, %v1440
      %v1442 = vpop.f32.mrb[0].mxu0
      %1443 = vdwg.mxu0
      %1444 = vrot.lane.b32.xlu0 %v369, 120
      %v1445 = vpop.permute.xlu0 %1444
      %1446 = vrot.lane.b32.xlu0 %v374, 120
      %v1447 = vpop.permute.xlu0 %1446
      %1448 = vrot.lane.b32.xlu0 %v369, 88
      %v1449 = vpop.permute.xlu0 %1448
      %1450 = vrot.lane.b32.xlu0 %v374, 88
      %v1451 = vpop.permute.xlu0 %1450
      %v1452 = vsel %vm383, %v1445, 0
      %v1454 = vsel %vm383, %v1447, 0
      %v1456 = vsel %vm383, %v1449, 0
      %v1458 = vsel %vm383, %v1451, 0
      %1460 = vmatprep.subr.mxu0 0.0
      %1461 = vmatpush1.xpose.msra.mxu0 %v1456
      %1462 = vmatprep.subr.mxu0 0.0
      %1463 = vmatpush1.xpose.msra.mxu0 %v1458
      %1464 = vmatprep.subr.mxu0 0.0
      %1465 = vmatpush1.xpose.msra.mxu0 0.0
      %1466 = vmatprep.subr.mxu0 0.0
      %1467 = vmatpush1.xpose.msra.mxu0 0.0
      %1468 = vmatprep.subr.mxu0 0.0
      %1469 = vmatpush1.xpose.msra.mxu0 0.0
      %1470 = vmatprep.subr.mxu0 0.0
      %1471 = vmatpush1.xpose.msra.mxu0 0.0
      %1472 = vmatprep.subr.mxu0 0.0
      %1473 = vmatpush1.xpose.msra.mxu0 0.0
      %1474 = vmatprep.subr.mxu0 0.0
      %1475 = vmatpush1.xpose.msra.mxu0 0.0
      %1476 = vmatprep.subr.mxu0 0.0
      %1477 = vmatpush1.xpose.msra.mxu0 0.0
      %1478 = vmatprep.subr.mxu0 0.0
      %1479 = vmatpush1.xpose.msra.mxu0 0.0
      %1480 = vmatprep.subr.mxu0 0.0
      %1481 = vmatpush1.xpose.msra.mxu0 0.0
      %1482 = vmatprep.subr.mxu0 0.0
      %1483 = vmatpush1.xpose.msra.mxu0 0.0
      %1484 = vmatprep.subr.mxu0 0.0
      %1485 = vmatpush1.xpose.msra.mxu0 0.0
      %1486 = vmatprep.subr.mxu0 0.0
      %1487 = vmatpush1.xpose.msra.mxu0 0.0
      %1488 = vmatprep.subr.mxu0 0.0
      %1489 = vmatpush1.xpose.msra.mxu0 0.0
      %1490 = vmatprep.subr.mxu0 0.0
      %1491 = vmatpush1.xpose.msra.mxu0 0.0
      %1492 = vmatprep.subr.mxu0 0.0
      %1493 = vmatpush1.xpose.msra.mxu0 0.0
      %1494 = vmatprep.subr.mxu0 0.0
      %1495 = vmatpush1.xpose.msra.mxu0 0.0
      %1496 = vmatprep.subr.mxu0 0.0
      %1497 = vmatpush1.xpose.msra.mxu0 0.0
      %1498 = vmatprep.subr.mxu0 0.0
      %1499 = vmatpush1.xpose.msra.mxu0 0.0
      %1500 = vmatprep.subr.mxu0 0.0
      %1501 = vmatpush1.xpose.msra.mxu0 0.0
      %1502 = vmatprep.subr.mxu0 0.0
      %1503 = vmatpush1.xpose.msra.mxu0 0.0
      %1504 = vmatprep.subr.mxu0 0.0
      %1505 = vmatpush1.xpose.msra.mxu0 0.0
      %1506 = vmatprep.subr.mxu0 0.0
      %1507 = vmatpush1.xpose.msra.mxu0 0.0
      %1508 = vmatprep.subr.mxu0 0.0
      %1509 = vmatpush1.xpose.msra.mxu0 0.0
      %1510 = vmatprep.subr.mxu0 0.0
      %1511 = vmatpush1.xpose.msra.mxu0 0.0
      %1512 = vmatprep.subr.mxu0 0.0
      %1513 = vmatpush1.xpose.msra.mxu0 0.0
      %1514 = vmatprep.subr.mxu0 0.0
      %1515 = vmatpush1.xpose.msra.mxu0 0.0
      %1516 = vmatprep.subr.mxu0 0.0
      %1517 = vmatpush1.xpose.msra.mxu0 0.0
      %1518 = vmatprep.subr.mxu0 0.0
      %1519 = vmatpush1.xpose.msra.mxu0 0.0
      %1520 = vmatprep.subr.mxu0 0.0
      %1521 = vmatpush1.xpose.msra.mxu0 0.0
      %1522 = vmatprep.subr.mxu0 0.0
      %1523 = vmatpush1.xpose.msra.mxu0 0.0
      %1524 = vmatprep.mubr.f32.mxu0 0.0
      %1525 = vmatmul.mubr.f32.gmra.mrb[0].mxu0 %v1452
      %v1526 = vpop.f32.mrb[0].mxu0
      %v1527 = vadd.f32 0.0, %v1526
      %v1528 = vpop.f32.mrb[0].mxu0
      %1529 = vmatprep.mubr.f32.mxu0 0.0
      %1530 = vmatmul.mubr.f32.gmra.mrb[0].mxu0 %v1454
      %v1531 = vpop.f32.mrb[0].mxu0
      %v1532 = vadd.f32 0.0, %v1531
      %v1533 = vpop.f32.mrb[0].mxu0
      %1534 = vdwg.mxu0
      %v1535 = vsel %vm734, %v1254, -inf
      %1536 = vmax.xlane.f32.xlu0 %v1535
      %v1537 = vpop.xlane.xlu0 %1536
      %v1538 = vsel %vm734, %v1259, -inf
      %1539 = vmax.xlane.f32.xlu0 %v1538
      %v1540 = vpop.xlane.xlu0 %1539
      %v1541 = vsel %vm734, %v1345, -inf
      %1542 = vmax.xlane.f32.xlu0 %v1541
      %v1543 = vpop.xlane.xlu0 %1542
      %v1544 = vsel %vm734, %v1350, -inf
      %1545 = vmax.xlane.f32.xlu0 %v1544
      %v1546 = vpop.xlane.xlu0 %1545
      %v1547 = vsel %vm734, %v1436, -inf
      %1548 = vmax.xlane.f32.xlu0 %v1547
      %v1549 = vpop.xlane.xlu0 %1548
      %v1550 = vsel %vm734, %v1441, -inf
      %1551 = vmax.xlane.f32.xlu0 %v1550
      %v1552 = vpop.xlane.xlu0 %1551
      %v1553 = vsel %vm734, %v1527, -inf
      %1554 = vmax.xlane.f32.xlu0 %v1553
      %v1555 = vpop.xlane.xlu0 %1554
      %v1556 = vsel %vm734, %v1532, -inf
      %1557 = vmax.xlane.f32.xlu0 %v1556
      %v1558 = vpop.xlane.xlu0 %1557
      %v1559 = vsub.f32 %v1254, %v1537
      %v1560 = vsub.f32 %v1259, %v1540
      %v1561 = vsub.f32 %v1345, %v1543
      %v1562 = vsub.f32 %v1350, %v1546
      %v1563 = vsub.f32 %v1436, %v1549
      %v1564 = vsub.f32 %v1441, %v1552
      %v1565 = vsub.f32 %v1527, %v1555
      %v1566 = vsub.f32 %v1532, %v1558
      %v1567 = vmul.f32 %v1559, 1.442695
      %v1568 = vpow.pop %v1567
      %v1569 = vmul.f32 %v1560, 1.442695
      %v1570 = vpow.pop %v1569
      %v1571 = vmul.f32 %v1561, 1.442695
      %v1572 = vpow.pop %v1571
      %v1573 = vmul.f32 %v1562, 1.442695
      %v1574 = vpow.pop %v1573
      %v1575 = vmul.f32 %v1563, 1.442695
      %v1576 = vpow.pop %v1575
      %v1577 = vmul.f32 %v1564, 1.442695
      %v1578 = vpow.pop %v1577
      %v1579 = vmul.f32 %v1565, 1.442695
      %v1580 = vpow.pop %v1579
      %v1581 = vmul.f32 %v1566, 1.442695
      %v1582 = vpow.pop %v1581
      %v1583 = vsel %vm734, %v1568, 0.0
      %1584 = vadd.xlane.f32.xlu0 %v1583
      %v1585 = vpop.xlane.xlu0 %1584
      %v1586 = vsel %vm734, %v1570, 0.0
      %1587 = vadd.xlane.f32.xlu0 %v1586
      %v1588 = vpop.xlane.xlu0 %1587
      %v1589 = vsel %vm734, %v1572, 0.0
      %1590 = vadd.xlane.f32.xlu0 %v1589
      %v1591 = vpop.xlane.xlu0 %1590
      %v1592 = vsel %vm734, %v1574, 0.0
      %1593 = vadd.xlane.f32.xlu0 %v1592
      %v1594 = vpop.xlane.xlu0 %1593
      %v1595 = vsel %vm734, %v1576, 0.0
      %1596 = vadd.xlane.f32.xlu0 %v1595
      %v1597 = vpop.xlane.xlu0 %1596
      %v1598 = vsel %vm734, %v1578, 0.0
      %1599 = vadd.xlane.f32.xlu0 %v1598
      %v1600 = vpop.xlane.xlu0 %1599
      %v1601 = vsel %vm734, %v1580, 0.0
      %1602 = vadd.xlane.f32.xlu0 %v1601
      %v1603 = vpop.xlane.xlu0 %1602
      %v1604 = vsel %vm734, %v1582, 0.0
      %1605 = vadd.xlane.f32.xlu0 %v1604
      %v1606 = vpop.xlane.xlu0 %1605
      %v1607 = vrcp.pop %v1585
      %v1608 = vrcp.pop %v1588
      %v1609 = vrcp.pop %v1591
      %v1610 = vrcp.pop %v1594
      %v1611 = vrcp.pop %v1597
      %v1612 = vrcp.pop %v1600
      %v1613 = vrcp.pop %v1603
      %v1614 = vrcp.pop %v1606
      %v1615 = vmul.f32 %v1568, %v1607
      %v1616 = vmul.f32 %v1570, %v1608
      %v1617 = vmul.f32 %v1572, %v1609
      %v1618 = vmul.f32 %v1574, %v1610
      %v1619 = vmul.f32 %v1576, %v1611
      %v1620 = vmul.f32 %v1578, %v1612
      %v1621 = vmul.f32 %v1580, %v1613
      %v1622 = vmul.f32 %v1582, %v1614
      %1623 = vrot.lane.b32.xlu0 %v339, 56
      %v1624 = vpop.permute.xlu0 %1623
      %1625 = vrot.lane.b32.xlu0 %v344, 56
      %v1626 = vpop.permute.xlu0 %1625
      %v1630 = vsel %vm734, %v1615, 0
      %v1633 = vsel %vm734, %v1616, 0
      %1635 = vmatprep.subr.mxu0 0.0
      %1636 = vmatpush1.msra.mxu0 %v1624
      %1637 = vmatprep.subr.mxu0 0.0
      %1638 = vmatpush1.msra.mxu0 %v1626
      %1639 = vmatprep.subr.mxu0 0.0
      %1640 = vmatpush1.msra.mxu0 0.0
      %1641 = vmatprep.subr.mxu0 0.0
      %1642 = vmatpush1.msra.mxu0 0.0
      %1643 = vmatprep.subr.mxu0 0.0
      %1644 = vmatpush1.msra.mxu0 0.0
      %1645 = vmatprep.subr.mxu0 0.0
      %1646 = vmatpush1.msra.mxu0 0.0
      %1647 = vmatprep.subr.mxu0 0.0
      %1648 = vmatpush1.msra.mxu0 0.0
      %1649 = vmatprep.subr.mxu0 0.0
      %1650 = vmatpush1.msra.mxu0 0.0
      %1651 = vmatprep.subr.mxu0 0.0
      %1652 = vmatpush1.msra.mxu0 0.0
      %1653 = vmatprep.subr.mxu0 0.0
      %1654 = vmatpush1.msra.mxu0 0.0
      %1655 = vmatprep.subr.mxu0 0.0
      %1656 = vmatpush1.msra.mxu0 0.0
      %1657 = vmatprep.subr.mxu0 0.0
      %1658 = vmatpush1.msra.mxu0 0.0
      %1659 = vmatprep.subr.mxu0 0.0
      %1660 = vmatpush1.msra.mxu0 0.0
      %1661 = vmatprep.subr.mxu0 0.0
      %1662 = vmatpush1.msra.mxu0 0.0
      %1663 = vmatprep.subr.mxu0 0.0
      %1664 = vmatpush1.msra.mxu0 0.0
      %1665 = vmatprep.subr.mxu0 0.0
      %1666 = vmatpush1.msra.mxu0 0.0
      %1667 = vmatprep.subr.mxu0 0.0
      %1668 = vmatpush1.msra.mxu0 0.0
      %1669 = vmatprep.subr.mxu0 0.0
      %1670 = vmatpush1.msra.mxu0 0.0
      %1671 = vmatprep.subr.mxu0 0.0
      %1672 = vmatpush1.msra.mxu0 0.0
      %1673 = vmatprep.subr.mxu0 0.0
      %1674 = vmatpush1.msra.mxu0 0.0
      %1675 = vmatprep.subr.mxu0 0.0
      %1676 = vmatpush1.msra.mxu0 0.0
      %1677 = vmatprep.subr.mxu0 0.0
      %1678 = vmatpush1.msra.mxu0 0.0
      %1679 = vmatprep.subr.mxu0 0.0
      %1680 = vmatpush1.msra.mxu0 0.0
      %1681 = vmatprep.subr.mxu0 0.0
      %1682 = vmatpush1.msra.mxu0 0.0
      %1683 = vmatprep.subr.mxu0 0.0
      %1684 = vmatpush1.msra.mxu0 0.0
      %1685 = vmatprep.subr.mxu0 0.0
      %1686 = vmatpush1.msra.mxu0 0.0
      %1687 = vmatprep.subr.mxu0 0.0
      %1688 = vmatpush1.msra.mxu0 0.0
      %1689 = vmatprep.subr.mxu0 0.0
      %1690 = vmatpush1.msra.mxu0 0.0
      %1691 = vmatprep.subr.mxu0 0.0
      %1692 = vmatpush1.msra.mxu0 0.0
      %1693 = vmatprep.subr.mxu0 0.0
      %1694 = vmatpush1.msra.mxu0 0.0
      %1695 = vmatprep.subr.mxu0 0.0
      %1696 = vmatpush1.msra.mxu0 0.0
      %1697 = vmatprep.subr.mxu0 0.0
      %1698 = vmatpush1.msra.mxu0 0.0
      %1699 = vmatprep.mubr.f32.mxu0 0.0
      %1700 = vmatmul.mubr.f32.gmra.mrb[0].mxu0 %v1630
      %v1701 = vpop.f32.mrb[0].mxu0
      %v1702 = vadd.f32 0.0, %v1701
      %v1703 = vpop.f32.mrb[0].mxu0
      %1704 = vmatprep.mubr.f32.mxu0 0.0
      %1705 = vmatmul.mubr.f32.gmra.mrb[0].mxu0 %v1633
      %v1706 = vpop.f32.mrb[0].mxu0
      %v1707 = vadd.f32 0.0, %v1706
      %v1708 = vpop.f32.mrb[0].mxu0
      %1709 = vdwg.mxu0
      %1710 = vrot.lane.b32.xlu0 %v349, 56
      %v1711 = vpop.permute.xlu0 %1710
      %1712 = vrot.lane.b32.xlu0 %v354, 56
      %v1713 = vpop.permute.xlu0 %1712
      %v1717 = vsel %vm734, %v1617, 0
      %v1720 = vsel %vm734, %v1618, 0
      %1722 = vmatprep.subr.mxu0 0.0
      %1723 = vmatpush1.msra.mxu0 %v1711
      %1724 = vmatprep.subr.mxu0 0.0
      %1725 = vmatpush1.msra.mxu0 %v1713
      %1726 = vmatprep.subr.mxu0 0.0
      %1727 = vmatpush1.msra.mxu0 0.0
      %1728 = vmatprep.subr.mxu0 0.0
      %1729 = vmatpush1.msra.mxu0 0.0
      %1730 = vmatprep.subr.mxu0 0.0
      %1731 = vmatpush1.msra.mxu0 0.0
      %1732 = vmatprep.subr.mxu0 0.0
      %1733 = vmatpush1.msra.mxu0 0.0
      %1734 = vmatprep.subr.mxu0 0.0
      %1735 = vmatpush1.msra.mxu0 0.0
      %1736 = vmatprep.subr.mxu0 0.0
      %1737 = vmatpush1.msra.mxu0 0.0
      %1738 = vmatprep.subr.mxu0 0.0
      %1739 = vmatpush1.msra.mxu0 0.0
      %1740 = vmatprep.subr.mxu0 0.0
      %1741 = vmatpush1.msra.mxu0 0.0
      %1742 = vmatprep.subr.mxu0 0.0
      %1743 = vmatpush1.msra.mxu0 0.0
      %1744 = vmatprep.subr.mxu0 0.0
      %1745 = vmatpush1.msra.mxu0 0.0
      %1746 = vmatprep.subr.mxu0 0.0
      %1747 = vmatpush1.msra.mxu0 0.0
      %1748 = vmatprep.subr.mxu0 0.0
      %1749 = vmatpush1.msra.mxu0 0.0
      %1750 = vmatprep.subr.mxu0 0.0
      %1751 = vmatpush1.msra.mxu0 0.0
      %1752 = vmatprep.subr.mxu0 0.0
      %1753 = vmatpush1.msra.mxu0 0.0
      %1754 = vmatprep.subr.mxu0 0.0
      %1755 = vmatpush1.msra.mxu0 0.0
      %1756 = vmatprep.subr.mxu0 0.0
      %1757 = vmatpush1.msra.mxu0 0.0
      %1758 = vmatprep.subr.mxu0 0.0
      %1759 = vmatpush1.msra.mxu0 0.0
      %1760 = vmatprep.subr.mxu0 0.0
      %1761 = vmatpush1.msra.mxu0 0.0
      %1762 = vmatprep.subr.mxu0 0.0
      %1763 = vmatpush1.msra.mxu0 0.0
      %1764 = vmatprep.subr.mxu0 0.0
      %1765 = vmatpush1.msra.mxu0 0.0
      %1766 = vmatprep.subr.mxu0 0.0
      %1767 = vmatpush1.msra.mxu0 0.0
      %1768 = vmatprep.subr.mxu0 0.0
      %1769 = vmatpush1.msra.mxu0 0.0
      %1770 = vmatprep.subr.mxu0 0.0
      %1771 = vmatpush1.msra.mxu0 0.0
      %1772 = vmatprep.subr.mxu0 0.0
      %1773 = vmatpush1.msra.mxu0 0.0
      %1774 = vmatprep.subr.mxu0 0.0
      %1775 = vmatpush1.msra.mxu0 0.0
      %1776 = vmatprep.subr.mxu0 0.0
      %1777 = vmatpush1.msra.mxu0 0.0
      %1778 = vmatprep.subr.mxu0 0.0
      %1779 = vmatpush1.msra.mxu0 0.0
      %1780 = vmatprep.subr.mxu0 0.0
      %1781 = vmatpush1.msra.mxu0 0.0
      %1782 = vmatprep.subr.mxu0 0.0
      %1783 = vmatpush1.msra.mxu0 0.0
      %1784 = vmatprep.subr.mxu0 0.0
      %1785 = vmatpush1.msra.mxu0 0.0
      %1786 = vmatprep.mubr.f32.mxu0 0.0
      %1787 = vmatmul.mubr.f32.gmra.mrb[0].mxu0 %v1717
      %v1788 = vpop.f32.mrb[0].mxu0
      %v1789 = vadd.f32 0.0, %v1788
      %v1790 = vpop.f32.mrb[0].mxu0
      %1791 = vmatprep.mubr.f32.mxu0 0.0
      %1792 = vmatmul.mubr.f32.gmra.mrb[0].mxu0 %v1720
      %v1793 = vpop.f32.mrb[0].mxu0
      %v1794 = vadd.f32 0.0, %v1793
      %v1795 = vpop.f32.mrb[0].mxu0
      %1796 = vdwg.mxu0
      %1797 = vrot.lane.b32.xlu0 %v359, 56
      %v1798 = vpop.permute.xlu0 %1797
      %1799 = vrot.lane.b32.xlu0 %v364, 56
      %v1800 = vpop.permute.xlu0 %1799
      %v1804 = vsel %vm734, %v1619, 0
      %v1807 = vsel %vm734, %v1620, 0
      %1809 = vmatprep.subr.mxu0 0.0
      %1810 = vmatpush1.msra.mxu0 %v1798
      %1811 = vmatprep.subr.mxu0 0.0
      %1812 = vmatpush1.msra.mxu0 %v1800
      %1813 = vmatprep.subr.mxu0 0.0
      %1814 = vmatpush1.msra.mxu0 0.0
      %1815 = vmatprep.subr.mxu0 0.0
      %1816 = vmatpush1.msra.mxu0 0.0
      %1817 = vmatprep.subr.mxu0 0.0
      %1818 = vmatpush1.msra.mxu0 0.0
      %1819 = vmatprep.subr.mxu0 0.0
      %1820 = vmatpush1.msra.mxu0 0.0
      %1821 = vmatprep.subr.mxu0 0.0
      %1822 = vmatpush1.msra.mxu0 0.0
      %1823 = vmatprep.subr.mxu0 0.0
      %1824 = vmatpush1.msra.mxu0 0.0
      %1825 = vmatprep.subr.mxu0 0.0
      %1826 = vmatpush1.msra.mxu0 0.0
      %1827 = vmatprep.subr.mxu0 0.0
      %1828 = vmatpush1.msra.mxu0 0.0
      %1829 = vmatprep.subr.mxu0 0.0
      %1830 = vmatpush1.msra.mxu0 0.0
      %1831 = vmatprep.subr.mxu0 0.0
      %1832 = vmatpush1.msra.mxu0 0.0
      %1833 = vmatprep.subr.mxu0 0.0
      %1834 = vmatpush1.msra.mxu0 0.0
      %1835 = vmatprep.subr.mxu0 0.0
      %1836 = vmatpush1.msra.mxu0 0.0
      %1837 = vmatprep.subr.mxu0 0.0
      %1838 = vmatpush1.msra.mxu0 0.0
      %1839 = vmatprep.subr.mxu0 0.0
      %1840 = vmatpush1.msra.mxu0 0.0
      %1841 = vmatprep.subr.mxu0 0.0
      %1842 = vmatpush1.msra.mxu0 0.0
      %1843 = vmatprep.subr.mxu0 0.0
      %1844 = vmatpush1.msra.mxu0 0.0
      %1845 = vmatprep.subr.mxu0 0.0
      %1846 = vmatpush1.msra.mxu0 0.0
      %1847 = vmatprep.subr.mxu0 0.0
      %1848 = vmatpush1.msra.mxu0 0.0
      %1849 = vmatprep.subr.mxu0 0.0
      %1850 = vmatpush1.msra.mxu0 0.0
      %1851 = vmatprep.subr.mxu0 0.0
      %1852 = vmatpush1.msra.mxu0 0.0
      %1853 = vmatprep.subr.mxu0 0.0
      %1854 = vmatpush1.msra.mxu0 0.0
      %1855 = vmatprep.subr.mxu0 0.0
      %1856 = vmatpush1.msra.mxu0 0.0
      %1857 = vmatprep.subr.mxu0 0.0
      %1858 = vmatpush1.msra.mxu0 0.0
      %1859 = vmatprep.subr.mxu0 0.0
      %1860 = vmatpush1.msra.mxu0 0.0
      %1861 = vmatprep.subr.mxu0 0.0
      %1862 = vmatpush1.msra.mxu0 0.0
      %1863 = vmatprep.subr.mxu0 0.0
      %1864 = vmatpush1.msra.mxu0 0.0
      %1865 = vmatprep.subr.mxu0 0.0
      %1866 = vmatpush1.msra.mxu0 0.0
      %1867 = vmatprep.subr.mxu0 0.0
      %1868 = vmatpush1.msra.mxu0 0.0
      %1869 = vmatprep.subr.mxu0 0.0
      %1870 = vmatpush1.msra.mxu0 0.0
      %1871 = vmatprep.subr.mxu0 0.0
      %1872 = vmatpush1.msra.mxu0 0.0
      %1873 = vmatprep.mubr.f32.mxu0 0.0
      %1874 = vmatmul.mubr.f32.gmra.mrb[0].mxu0 %v1804
      %v1875 = vpop.f32.mrb[0].mxu0
      %v1876 = vadd.f32 0.0, %v1875
      %v1877 = vpop.f32.mrb[0].mxu0
      %1878 = vmatprep.mubr.f32.mxu0 0.0
      %1879 = vmatmul.mubr.f32.gmra.mrb[0].mxu0 %v1807
      %v1880 = vpop.f32.mrb[0].mxu0
      %v1881 = vadd.f32 0.0, %v1880
      %v1882 = vpop.f32.mrb[0].mxu0
      %1883 = vdwg.mxu0
      %1884 = vrot.lane.b32.xlu0 %v369, 56
      %v1885 = vpop.permute.xlu0 %1884
      %1886 = vrot.lane.b32.xlu0 %v374, 56
      %v1887 = vpop.permute.xlu0 %1886
      %v1891 = vsel %vm734, %v1621, 0
      %v1894 = vsel %vm734, %v1622, 0
      %1896 = vmatprep.subr.mxu0 0.0
      %1897 = vmatpush1.msra.mxu0 %v1885
      %1898 = vmatprep.subr.mxu0 0.0
      %1899 = vmatpush1.msra.mxu0 %v1887
      %1900 = vmatprep.subr.mxu0 0.0
      %1901 = vmatpush1.msra.mxu0 0.0
      %1902 = vmatprep.subr.mxu0 0.0
      %1903 = vmatpush1.msra.mxu0 0.0
      %1904 = vmatprep.subr.mxu0 0.0
      %1905 = vmatpush1.msra.mxu0 0.0
      %1906 = vmatprep.subr.mxu0 0.0
      %1907 = vmatpush1.msra.mxu0 0.0
      %1908 = vmatprep.subr.mxu0 0.0
      %1909 = vmatpush1.msra.mxu0 0.0
      %1910 = vmatprep.subr.mxu0 0.0
      %1911 = vmatpush1.msra.mxu0 0.0
      %1912 = vmatprep.subr.mxu0 0.0
      %1913 = vmatpush1.msra.mxu0 0.0
      %1914 = vmatprep.subr.mxu0 0.0
      %1915 = vmatpush1.msra.mxu0 0.0
      %1916 = vmatprep.subr.mxu0 0.0
      %1917 = vmatpush1.msra.mxu0 0.0
      %1918 = vmatprep.subr.mxu0 0.0
      %1919 = vmatpush1.msra.mxu0 0.0
      %1920 = vmatprep.subr.mxu0 0.0
      %1921 = vmatpush1.msra.mxu0 0.0
      %1922 = vmatprep.subr.mxu0 0.0
      %1923 = vmatpush1.msra.mxu0 0.0
      %1924 = vmatprep.subr.mxu0 0.0
      %1925 = vmatpush1.msra.mxu0 0.0
      %1926 = vmatprep.subr.mxu0 0.0
      %1927 = vmatpush1.msra.mxu0 0.0
      %1928 = vmatprep.subr.mxu0 0.0
      %1929 = vmatpush1.msra.mxu0 0.0
      %1930 = vmatprep.subr.mxu0 0.0
      %1931 = vmatpush1.msra.mxu0 0.0
      %1932 = vmatprep.subr.mxu0 0.0
      %1933 = vmatpush1.msra.mxu0 0.0
      %1934 = vmatprep.subr.mxu0 0.0
      %1935 = vmatpush1.msra.mxu0 0.0
      %1936 = vmatprep.subr.mxu0 0.0
      %1937 = vmatpush1.msra.mxu0 0.0
      %1938 = vmatprep.subr.mxu0 0.0
      %1939 = vmatpush1.msra.mxu0 0.0
      %1940 = vmatprep.subr.mxu0 0.0
      %1941 = vmatpush1.msra.mxu0 0.0
      %1942 = vmatprep.subr.mxu0 0.0
      %1943 = vmatpush1.msra.mxu0 0.0
      %1944 = vmatprep.subr.mxu0 0.0
      %1945 = vmatpush1.msra.mxu0 0.0
      %1946 = vmatprep.subr.mxu0 0.0
      %1947 = vmatpush1.msra.mxu0 0.0
      %1948 = vmatprep.subr.mxu0 0.0
      %1949 = vmatpush1.msra.mxu0 0.0
      %1950 = vmatprep.subr.mxu0 0.0
      %1951 = vmatpush1.msra.mxu0 0.0
      %1952 = vmatprep.subr.mxu0 0.0
      %1953 = vmatpush1.msra.mxu0 0.0
      %1954 = vmatprep.subr.mxu0 0.0
      %1955 = vmatpush1.msra.mxu0 0.0
      %1956 = vmatprep.subr.mxu0 0.0
      %1957 = vmatpush1.msra.mxu0 0.0
      %1958 = vmatprep.subr.mxu0 0.0
      %1959 = vmatpush1.msra.mxu0 0.0
      %1960 = vmatprep.mubr.f32.mxu0 0.0
      %1961 = vmatmul.mubr.f32.gmra.mrb[0].mxu0 %v1891
      %v1962 = vpop.f32.mrb[0].mxu0
      %v1963 = vadd.f32 0.0, %v1962
      %v1964 = vpop.f32.mrb[0].mxu0
      %1965 = vmatprep.mubr.f32.mxu0 0.0
      %1966 = vmatmul.mubr.f32.gmra.mrb[0].mxu0 %v1894
      %v1967 = vpop.f32.mrb[0].mxu0
      %v1968 = vadd.f32 0.0, %v1967
      %v1969 = vpop.f32.mrb[0].mxu0
      %1970 = vdwg.mxu0
      %1971 = vrot.lane.b32.xlu0 %v339, 112
      %v1972 = vpop.permute.xlu0 %1971
      %1973 = vrot.lane.b32.xlu0 %v344, 112
      %v1974 = vpop.permute.xlu0 %1973
      %1975 = vrot.lane.b32.xlu0 %v339, 80
      %v1976 = vpop.permute.xlu0 %1975
      %1977 = vrot.lane.b32.xlu0 %v344, 80
      %v1978 = vpop.permute.xlu0 %1977
      %v1979 = vsel %vm383, %v1972, 0
      %v1981 = vsel %vm383, %v1974, 0
      %v1983 = vsel %vm383, %v1976, 0
      %v1985 = vsel %vm383, %v1978, 0
      %1987 = vmatprep.subr.mxu0 0.0
      %1988 = vmatpush1.xpose.msra.mxu0 %v1983
      %1989 = vmatprep.subr.mxu0 0.0
      %1990 = vmatpush1.xpose.msra.mxu0 %v1985
      %1991 = vmatprep.subr.mxu0 0.0
      %1992 = vmatpush1.xpose.msra.mxu0 0.0
      %1993 = vmatprep.subr.mxu0 0.0
      %1994 = vmatpush1.xpose.msra.mxu0 0.0
      %1995 = vmatprep.subr.mxu0 0.0
      %1996 = vmatpush1.xpose.msra.mxu0 0.0
      %1997 = vmatprep.subr.mxu0 0.0
      %1998 = vmatpush1.xpose.msra.mxu0 0.0
      %1999 = vmatprep.subr.mxu0 0.0
      %2000 = vmatpush1.xpose.msra.mxu0 0.0
      %2001 = vmatprep.subr.mxu0 0.0
      %2002 = vmatpush1.xpose.msra.mxu0 0.0
      %2003 = vmatprep.subr.mxu0 0.0
      %2004 = vmatpush1.xpose.msra.mxu0 0.0
      %2005 = vmatprep.subr.mxu0 0.0
      %2006 = vmatpush1.xpose.msra.mxu0 0.0
      %2007 = vmatprep.subr.mxu0 0.0
      %2008 = vmatpush1.xpose.msra.mxu0 0.0
      %2009 = vmatprep.subr.mxu0 0.0
      %2010 = vmatpush1.xpose.msra.mxu0 0.0
      %2011 = vmatprep.subr.mxu0 0.0
      %2012 = vmatpush1.xpose.msra.mxu0 0.0
      %2013 = vmatprep.subr.mxu0 0.0
      %2014 = vmatpush1.xpose.msra.mxu0 0.0
      %2015 = vmatprep.subr.mxu0 0.0
      %2016 = vmatpush1.xpose.msra.mxu0 0.0
      %2017 = vmatprep.subr.mxu0 0.0
      %2018 = vmatpush1.xpose.msra.mxu0 0.0
      %2019 = vmatprep.subr.mxu0 0.0
      %2020 = vmatpush1.xpose.msra.mxu0 0.0
      %2021 = vmatprep.subr.mxu0 0.0
      %2022 = vmatpush1.xpose.msra.mxu0 0.0
      %2023 = vmatprep.subr.mxu0 0.0
      %2024 = vmatpush1.xpose.msra.mxu0 0.0
      %2025 = vmatprep.subr.mxu0 0.0
      %2026 = vmatpush1.xpose.msra.mxu0 0.0
      %2027 = vmatprep.subr.mxu0 0.0
      %2028 = vmatpush1.xpose.msra.mxu0 0.0
      %2029 = vmatprep.subr.mxu0 0.0
      %2030 = vmatpush1.xpose.msra.mxu0 0.0
      %2031 = vmatprep.subr.mxu0 0.0
      %2032 = vmatpush1.xpose.msra.mxu0 0.0
      %2033 = vmatprep.subr.mxu0 0.0
      %2034 = vmatpush1.xpose.msra.mxu0 0.0
      %2035 = vmatprep.subr.mxu0 0.0
      %2036 = vmatpush1.xpose.msra.mxu0 0.0
      %2037 = vmatprep.subr.mxu0 0.0
      %2038 = vmatpush1.xpose.msra.mxu0 0.0
      %2039 = vmatprep.subr.mxu0 0.0
      %2040 = vmatpush1.xpose.msra.mxu0 0.0
      %2041 = vmatprep.subr.mxu0 0.0
      %2042 = vmatpush1.xpose.msra.mxu0 0.0
      %2043 = vmatprep.subr.mxu0 0.0
      %2044 = vmatpush1.xpose.msra.mxu0 0.0
      %2045 = vmatprep.subr.mxu0 0.0
      %2046 = vmatpush1.xpose.msra.mxu0 0.0
      %2047 = vmatprep.subr.mxu0 0.0
      %2048 = vmatpush1.xpose.msra.mxu0 0.0
      %2049 = vmatprep.subr.mxu0 0.0
      %2050 = vmatpush1.xpose.msra.mxu0 0.0
      %2051 = vmatprep.mubr.f32.mxu0 0.0
      %2052 = vmatmul.mubr.f32.gmra.mrb[0].mxu0 %v1979
      %v2053 = vpop.f32.mrb[0].mxu0
      %v2054 = vadd.f32 0.0, %v2053
      %v2055 = vpop.f32.mrb[0].mxu0
      %2056 = vmatprep.mubr.f32.mxu0 0.0
      %2057 = vmatmul.mubr.f32.gmra.mrb[0].mxu0 %v1981
      %v2058 = vpop.f32.mrb[0].mxu0
      %v2059 = vadd.f32 0.0, %v2058
      %v2060 = vpop.f32.mrb[0].mxu0
      %2061 = vdwg.mxu0
      %2062 = vrot.lane.b32.xlu0 %v349, 112
      %v2063 = vpop.permute.xlu0 %2062
      %2064 = vrot.lane.b32.xlu0 %v354, 112
      %v2065 = vpop.permute.xlu0 %2064
      %2066 = vrot.lane.b32.xlu0 %v349, 80
      %v2067 = vpop.permute.xlu0 %2066
      %2068 = vrot.lane.b32.xlu0 %v354, 80
      %v2069 = vpop.permute.xlu0 %2068
      %v2070 = vsel %vm383, %v2063, 0
      %v2072 = vsel %vm383, %v2065, 0
      %v2074 = vsel %vm383, %v2067, 0
      %v2076 = vsel %vm383, %v2069, 0
      %2078 = vmatprep.subr.mxu0 0.0
      %2079 = vmatpush1.xpose.msra.mxu0 %v2074
      %2080 = vmatprep.subr.mxu0 0.0
      %2081 = vmatpush1.xpose.msra.mxu0 %v2076
      %2082 = vmatprep.subr.mxu0 0.0
      %2083 = vmatpush1.xpose.msra.mxu0 0.0
      %2084 = vmatprep.subr.mxu0 0.0
      %2085 = vmatpush1.xpose.msra.mxu0 0.0
      %2086 = vmatprep.subr.mxu0 0.0
      %2087 = vmatpush1.xpose.msra.mxu0 0.0
      %2088 = vmatprep.subr.mxu0 0.0
      %2089 = vmatpush1.xpose.msra.mxu0 0.0
      %2090 = vmatprep.subr.mxu0 0.0
      %2091 = vmatpush1.xpose.msra.mxu0 0.0
      %2092 = vmatprep.subr.mxu0 0.0
      %2093 = vmatpush1.xpose.msra.mxu0 0.0
      %2094 = vmatprep.subr.mxu0 0.0
      %2095 = vmatpush1.xpose.msra.mxu0 0.0
      %2096 = vmatprep.subr.mxu0 0.0
      %2097 = vmatpush1.xpose.msra.mxu0 0.0
      %2098 = vmatprep.subr.mxu0 0.0
      %2099 = vmatpush1.xpose.msra.mxu0 0.0
      %2100 = vmatprep.subr.mxu0 0.0
      %2101 = vmatpush1.xpose.msra.mxu0 0.0
      %2102 = vmatprep.subr.mxu0 0.0
      %2103 = vmatpush1.xpose.msra.mxu0 0.0
      %2104 = vmatprep.subr.mxu0 0.0
      %2105 = vmatpush1.xpose.msra.mxu0 0.0
      %2106 = vmatprep.subr.mxu0 0.0
      %2107 = vmatpush1.xpose.msra.mxu0 0.0
      %2108 = vmatprep.subr.mxu0 0.0
      %2109 = vmatpush1.xpose.msra.mxu0 0.0
      %2110 = vmatprep.subr.mxu0 0.0
      %2111 = vmatpush1.xpose.msra.mxu0 0.0
      %2112 = vmatprep.subr.mxu0 0.0
      %2113 = vmatpush1.xpose.msra.mxu0 0.0
      %2114 = vmatprep.subr.mxu0 0.0
      %2115 = vmatpush1.xpose.msra.mxu0 0.0
      %2116 = vmatprep.subr.mxu0 0.0
      %2117 = vmatpush1.xpose.msra.mxu0 0.0
      %2118 = vmatprep.subr.mxu0 0.0
      %2119 = vmatpush1.xpose.msra.mxu0 0.0
      %2120 = vmatprep.subr.mxu0 0.0
      %2121 = vmatpush1.xpose.msra.mxu0 0.0
      %2122 = vmatprep.subr.mxu0 0.0
      %2123 = vmatpush1.xpose.msra.mxu0 0.0
      %2124 = vmatprep.subr.mxu0 0.0
      %2125 = vmatpush1.xpose.msra.mxu0 0.0
      %2126 = vmatprep.subr.mxu0 0.0
      %2127 = vmatpush1.xpose.msra.mxu0 0.0
      %2128 = vmatprep.subr.mxu0 0.0
      %2129 = vmatpush1.xpose.msra.mxu0 0.0
      %2130 = vmatprep.subr.mxu0 0.0
      %2131 = vmatpush1.xpose.msra.mxu0 0.0
      %2132 = vmatprep.subr.mxu0 0.0
      %2133 = vmatpush1.xpose.msra.mxu0 0.0
      %2134 = vmatprep.subr.mxu0 0.0
      %2135 = vmatpush1.xpose.msra.mxu0 0.0
      %2136 = vmatprep.subr.mxu0 0.0
      %2137 = vmatpush1.xpose.msra.mxu0 0.0
      %2138 = vmatprep.subr.mxu0 0.0
      %2139 = vmatpush1.xpose.msra.mxu0 0.0
      %2140 = vmatprep.subr.mxu0 0.0
      %2141 = vmatpush1.xpose.msra.mxu0 0.0
      %2142 = vmatprep.mubr.f32.mxu0 0.0
      %2143 = vmatmul.mubr.f32.gmra.mrb[0].mxu0 %v2070
      %v2144 = vpop.f32.mrb[0].mxu0
      %v2145 = vadd.f32 0.0, %v2144
      %v2146 = vpop.f32.mrb[0].mxu0
      %2147 = vmatprep.mubr.f32.mxu0 0.0
      %2148 = vmatmul.mubr.f32.gmra.mrb[0].mxu0 %v2072
      %v2149 = vpop.f32.mrb[0].mxu0
      %v2150 = vadd.f32 0.0, %v2149
      %v2151 = vpop.f32.mrb[0].mxu0
      %2152 = vdwg.mxu0
      %2153 = vrot.lane.b32.xlu0 %v359, 112
      %v2154 = vpop.permute.xlu0 %2153
      %2155 = vrot.lane.b32.xlu0 %v364, 112
      %v2156 = vpop.permute.xlu0 %2155
      %2157 = vrot.lane.b32.xlu0 %v359, 80
      %v2158 = vpop.permute.xlu0 %2157
      %2159 = vrot.lane.b32.xlu0 %v364, 80
      %v2160 = vpop.permute.xlu0 %2159
      %v2161 = vsel %vm383, %v2154, 0
      %v2163 = vsel %vm383, %v2156, 0
      %v2165 = vsel %vm383, %v2158, 0
      %v2167 = vsel %vm383, %v2160, 0
      %2169 = vmatprep.subr.mxu0 0.0
      %2170 = vmatpush1.xpose.msra.mxu0 %v2165
      %2171 = vmatprep.subr.mxu0 0.0
      %2172 = vmatpush1.xpose.msra.mxu0 %v2167
      %2173 = vmatprep.subr.mxu0 0.0
      %2174 = vmatpush1.xpose.msra.mxu0 0.0
      %2175 = vmatprep.subr.mxu0 0.0
      %2176 = vmatpush1.xpose.msra.mxu0 0.0
      %2177 = vmatprep.subr.mxu0 0.0
      %2178 = vmatpush1.xpose.msra.mxu0 0.0
      %2179 = vmatprep.subr.mxu0 0.0
      %2180 = vmatpush1.xpose.msra.mxu0 0.0
      %2181 = vmatprep.subr.mxu0 0.0
      %2182 = vmatpush1.xpose.msra.mxu0 0.0
      %2183 = vmatprep.subr.mxu0 0.0
      %2184 = vmatpush1.xpose.msra.mxu0 0.0
      %2185 = vmatprep.subr.mxu0 0.0
      %2186 = vmatpush1.xpose.msra.mxu0 0.0
      %2187 = vmatprep.subr.mxu0 0.0
      %2188 = vmatpush1.xpose.msra.mxu0 0.0
      %2189 = vmatprep.subr.mxu0 0.0
      %2190 = vmatpush1.xpose.msra.mxu0 0.0
      %2191 = vmatprep.subr.mxu0 0.0
      %2192 = vmatpush1.xpose.msra.mxu0 0.0
      %2193 = vmatprep.subr.mxu0 0.0
      %2194 = vmatpush1.xpose.msra.mxu0 0.0
      %2195 = vmatprep.subr.mxu0 0.0
      %2196 = vmatpush1.xpose.msra.mxu0 0.0
      %2197 = vmatprep.subr.mxu0 0.0
      %2198 = vmatpush1.xpose.msra.mxu0 0.0
      %2199 = vmatprep.subr.mxu0 0.0
      %2200 = vmatpush1.xpose.msra.mxu0 0.0
      %2201 = vmatprep.subr.mxu0 0.0
      %2202 = vmatpush1.xpose.msra.mxu0 0.0
      %2203 = vmatprep.subr.mxu0 0.0
      %2204 = vmatpush1.xpose.msra.mxu0 0.0
      %2205 = vmatprep.subr.mxu0 0.0
      %2206 = vmatpush1.xpose.msra.mxu0 0.0
      %2207 = vmatprep.subr.mxu0 0.0
      %2208 = vmatpush1.xpose.msra.mxu0 0.0
      %2209 = vmatprep.subr.mxu0 0.0
      %2210 = vmatpush1.xpose.msra.mxu0 0.0
      %2211 = vmatprep.subr.mxu0 0.0
      %2212 = vmatpush1.xpose.msra.mxu0 0.0
      %2213 = vmatprep.subr.mxu0 0.0
      %2214 = vmatpush1.xpose.msra.mxu0 0.0
      %2215 = vmatprep.subr.mxu0 0.0
      %2216 = vmatpush1.xpose.msra.mxu0 0.0
      %2217 = vmatprep.subr.mxu0 0.0
      %2218 = vmatpush1.xpose.msra.mxu0 0.0
      %2219 = vmatprep.subr.mxu0 0.0
      %2220 = vmatpush1.xpose.msra.mxu0 0.0
      %2221 = vmatprep.subr.mxu0 0.0
      %2222 = vmatpush1.xpose.msra.mxu0 0.0
      %2223 = vmatprep.subr.mxu0 0.0
      %2224 = vmatpush1.xpose.msra.mxu0 0.0
      %2225 = vmatprep.subr.mxu0 0.0
      %2226 = vmatpush1.xpose.msra.mxu0 0.0
      %2227 = vmatprep.subr.mxu0 0.0
      %2228 = vmatpush1.xpose.msra.mxu0 0.0
      %2229 = vmatprep.subr.mxu0 0.0
      %2230 = vmatpush1.xpose.msra.mxu0 0.0
      %2231 = vmatprep.subr.mxu0 0.0
      %2232 = vmatpush1.xpose.msra.mxu0 0.0
      %2233 = vmatprep.mubr.f32.mxu0 0.0
      %2234 = vmatmul.mubr.f32.gmra.mrb[0].mxu0 %v2161
      %v2235 = vpop.f32.mrb[0].mxu0
      %v2236 = vadd.f32 0.0, %v2235
      %v2237 = vpop.f32.mrb[0].mxu0
      %2238 = vmatprep.mubr.f32.mxu0 0.0
      %2239 = vmatmul.mubr.f32.gmra.mrb[0].mxu0 %v2163
      %v2240 = vpop.f32.mrb[0].mxu0
      %v2241 = vadd.f32 0.0, %v2240
      %v2242 = vpop.f32.mrb[0].mxu0
      %2243 = vdwg.mxu0
      %2244 = vrot.lane.b32.xlu0 %v369, 112
      %v2245 = vpop.permute.xlu0 %2244
      %2246 = vrot.lane.b32.xlu0 %v374, 112
      %v2247 = vpop.permute.xlu0 %2246
      %2248 = vrot.lane.b32.xlu0 %v369, 80
      %v2249 = vpop.permute.xlu0 %2248
      %2250 = vrot.lane.b32.xlu0 %v374, 80
      %v2251 = vpop.permute.xlu0 %2250
      %v2252 = vsel %vm383, %v2245, 0
      %v2254 = vsel %vm383, %v2247, 0
      %v2256 = vsel %vm383, %v2249, 0
      %v2258 = vsel %vm383, %v2251, 0
      %2260 = vmatprep.subr.mxu0 0.0
      %2261 = vmatpush1.xpose.msra.mxu0 %v2256
      %2262 = vmatprep.subr.mxu0 0.0
      %2263 = vmatpush1.xpose.msra.mxu0 %v2258
      %2264 = vmatprep.subr.mxu0 0.0
      %2265 = vmatpush1.xpose.msra.mxu0 0.0
      %2266 = vmatprep.subr.mxu0 0.0
      %2267 = vmatpush1.xpose.msra.mxu0 0.0
      %2268 = vmatprep.subr.mxu0 0.0
      %2269 = vmatpush1.xpose.msra.mxu0 0.0
      %2270 = vmatprep.subr.mxu0 0.0
      %2271 = vmatpush1.xpose.msra.mxu0 0.0
      %2272 = vmatprep.subr.mxu0 0.0
      %2273 = vmatpush1.xpose.msra.mxu0 0.0
      %2274 = vmatprep.subr.mxu0 0.0
      %2275 = vmatpush1.xpose.msra.mxu0 0.0
      %2276 = vmatprep.subr.mxu0 0.0
      %2277 = vmatpush1.xpose.msra.mxu0 0.0
      %2278 = vmatprep.subr.mxu0 0.0
      %2279 = vmatpush1.xpose.msra.mxu0 0.0
      %2280 = vmatprep.subr.mxu0 0.0
      %2281 = vmatpush1.xpose.msra.mxu0 0.0
      %2282 = vmatprep.subr.mxu0 0.0
      %2283 = vmatpush1.xpose.msra.mxu0 0.0
      %2284 = vmatprep.subr.mxu0 0.0
      %2285 = vmatpush1.xpose.msra.mxu0 0.0
      %2286 = vmatprep.subr.mxu0 0.0
      %2287 = vmatpush1.xpose.msra.mxu0 0.0
      %2288 = vmatprep.subr.mxu0 0.0
      %2289 = vmatpush1.xpose.msra.mxu0 0.0
      %2290 = vmatprep.subr.mxu0 0.0
      %2291 = vmatpush1.xpose.msra.mxu0 0.0
      %2292 = vmatprep.subr.mxu0 0.0
      %2293 = vmatpush1.xpose.msra.mxu0 0.0
      %2294 = vmatprep.subr.mxu0 0.0
      %2295 = vmatpush1.xpose.msra.mxu0 0.0
      %2296 = vmatprep.subr.mxu0 0.0
      %2297 = vmatpush1.xpose.msra.mxu0 0.0
      %2298 = vmatprep.subr.mxu0 0.0
      %2299 = vmatpush1.xpose.msra.mxu0 0.0
      %2300 = vmatprep.subr.mxu0 0.0
      %2301 = vmatpush1.xpose.msra.mxu0 0.0
      %2302 = vmatprep.subr.mxu0 0.0
      %2303 = vmatpush1.xpose.msra.mxu0 0.0
      %2304 = vmatprep.subr.mxu0 0.0
      %2305 = vmatpush1.xpose.msra.mxu0 0.0
      %2306 = vmatprep.subr.mxu0 0.0
      %2307 = vmatpush1.xpose.msra.mxu0 0.0
      %2308 = vmatprep.subr.mxu0 0.0
      %2309 = vmatpush1.xpose.msra.mxu0 0.0
      %2310 = vmatprep.subr.mxu0 0.0
      %2311 = vmatpush1.xpose.msra.mxu0 0.0
      %2312 = vmatprep.subr.mxu0 0.0
      %2313 = vmatpush1.xpose.msra.mxu0 0.0
      %2314 = vmatprep.subr.mxu0 0.0
      %2315 = vmatpush1.xpose.msra.mxu0 0.0
      %2316 = vmatprep.subr.mxu0 0.0
      %2317 = vmatpush1.xpose.msra.mxu0 0.0
      %2318 = vmatprep.subr.mxu0 0.0
      %2319 = vmatpush1.xpose.msra.mxu0 0.0
      %2320 = vmatprep.subr.mxu0 0.0
      %2321 = vmatpush1.xpose.msra.mxu0 0.0
      %2322 = vmatprep.subr.mxu0 0.0
      %2323 = vmatpush1.xpose.msra.mxu0 0.0
      %2324 = vmatprep.mubr.f32.mxu0 0.0
      %2325 = vmatmul.mubr.f32.gmra.mrb[0].mxu0 %v2252
      %v2326 = vpop.f32.mrb[0].mxu0
      %v2327 = vadd.f32 0.0, %v2326
      %v2328 = vpop.f32.mrb[0].mxu0
      %2329 = vmatprep.mubr.f32.mxu0 0.0
      %2330 = vmatmul.mubr.f32.gmra.mrb[0].mxu0 %v2254
      %v2331 = vpop.f32.mrb[0].mxu0
      %v2332 = vadd.f32 0.0, %v2331
      %v2333 = vpop.f32.mrb[0].mxu0
      %2334 = vdwg.mxu0
      %v2335 = vsel %vm734, %v2054, -inf
      %2336 = vmax.xlane.f32.xlu0 %v2335
      %v2337 = vpop.xlane.xlu0 %2336
      %v2338 = vsel %vm734, %v2059, -inf
      %2339 = vmax.xlane.f32.xlu0 %v2338
      %v2340 = vpop.xlane.xlu0 %2339
      %v2341 = vsel %vm734, %v2145, -inf
      %2342 = vmax.xlane.f32.xlu0 %v2341
      %v2343 = vpop.xlane.xlu0 %2342
      %v2344 = vsel %vm734, %v2150, -inf
      %2345 = vmax.xlane.f32.xlu0 %v2344
      %v2346 = vpop.xlane.xlu0 %2345
      %v2347 = vsel %vm734, %v2236, -inf
      %2348 = vmax.xlane.f32.xlu0 %v2347
      %v2349 = vpop.xlane.xlu0 %2348
      %v2350 = vsel %vm734, %v2241, -inf
      %2351 = vmax.xlane.f32.xlu0 %v2350
      %v2352 = vpop.xlane.xlu0 %2351
      %v2353 = vsel %vm734, %v2327, -inf
      %2354 = vmax.xlane.f32.xlu0 %v2353
      %v2355 = vpop.xlane.xlu0 %2354
      %v2356 = vsel %vm734, %v2332, -inf
      %2357 = vmax.xlane.f32.xlu0 %v2356
      %v2358 = vpop.xlane.xlu0 %2357
      %v2359 = vsub.f32 %v2054, %v2337
      %v2360 = vsub.f32 %v2059, %v2340
      %v2361 = vsub.f32 %v2145, %v2343
      %v2362 = vsub.f32 %v2150, %v2346
      %v2363 = vsub.f32 %v2236, %v2349
      %v2364 = vsub.f32 %v2241, %v2352
      %v2365 = vsub.f32 %v2327, %v2355
      %v2366 = vsub.f32 %v2332, %v2358
      %v2367 = vmul.f32 %v2359, 1.442695
      %v2368 = vpow.pop %v2367
      %v2369 = vmul.f32 %v2360, 1.442695
      %v2370 = vpow.pop %v2369
      %v2371 = vmul.f32 %v2361, 1.442695
      %v2372 = vpow.pop %v2371
      %v2373 = vmul.f32 %v2362, 1.442695
      %v2374 = vpow.pop %v2373
      %v2375 = vmul.f32 %v2363, 1.442695
      %v2376 = vpow.pop %v2375
      %v2377 = vmul.f32 %v2364, 1.442695
      %v2378 = vpow.pop %v2377
      %v2379 = vmul.f32 %v2365, 1.442695
      %v2380 = vpow.pop %v2379
      %v2381 = vmul.f32 %v2366, 1.442695
      %v2382 = vpow.pop %v2381
      %v2383 = vsel %vm734, %v2368, 0.0
      %2384 = vadd.xlane.f32.xlu0 %v2383
      %v2385 = vpop.xlane.xlu0 %2384
      %v2386 = vsel %vm734, %v2370, 0.0
      %2387 = vadd.xlane.f32.xlu0 %v2386
      %v2388 = vpop.xlane.xlu0 %2387
      %v2389 = vsel %vm734, %v2372, 0.0
      %2390 = vadd.xlane.f32.xlu0 %v2389
      %v2391 = vpop.xlane.xlu0 %2390
      %v2392 = vsel %vm734, %v2374, 0.0
      %2393 = vadd.xlane.f32.xlu0 %v2392
      %v2394 = vpop.xlane.xlu0 %2393
      %v2395 = vsel %vm734, %v2376, 0.0
      %2396 = vadd.xlane.f32.xlu0 %v2395
      %v2397 = vpop.xlane.xlu0 %2396
      %v2398 = vsel %vm734, %v2378, 0.0
      %2399 = vadd.xlane.f32.xlu0 %v2398
      %v2400 = vpop.xlane.xlu0 %2399
      %v2401 = vsel %vm734, %v2380, 0.0
      %2402 = vadd.xlane.f32.xlu0 %v2401
      %v2403 = vpop.xlane.xlu0 %2402
      %v2404 = vsel %vm734, %v2382, 0.0
      %2405 = vadd.xlane.f32.xlu0 %v2404
      %v2406 = vpop.xlane.xlu0 %2405
      %v2407 = vrcp.pop %v2385
      %v2408 = vrcp.pop %v2388
      %v2409 = vrcp.pop %v2391
      %v2410 = vrcp.pop %v2394
      %v2411 = vrcp.pop %v2397
      %v2412 = vrcp.pop %v2400
      %v2413 = vrcp.pop %v2403
      %v2414 = vrcp.pop %v2406
      %v2415 = vmul.f32 %v2368, %v2407
      %v2416 = vmul.f32 %v2370, %v2408
      %v2417 = vmul.f32 %v2372, %v2409
      %v2418 = vmul.f32 %v2374, %v2410
      %v2419 = vmul.f32 %v2376, %v2411
      %v2420 = vmul.f32 %v2378, %v2412
      %v2421 = vmul.f32 %v2380, %v2413
      %v2422 = vmul.f32 %v2382, %v2414
      %2423 = vrot.lane.b32.xlu0 %v339, 48
      %v2424 = vpop.permute.xlu0 %2423
      %2425 = vrot.lane.b32.xlu0 %v344, 48
      %v2426 = vpop.permute.xlu0 %2425
      %v2430 = vsel %vm734, %v2415, 0
      %v2433 = vsel %vm734, %v2416, 0
      %2435 = vmatprep.subr.mxu0 0.0
      %2436 = vmatpush1.msra.mxu0 %v2424
      %2437 = vmatprep.subr.mxu0 0.0
      %2438 = vmatpush1.msra.mxu0 %v2426
      %2439 = vmatprep.subr.mxu0 0.0
      %2440 = vmatpush1.msra.mxu0 0.0
      %2441 = vmatprep.subr.mxu0 0.0
      %2442 = vmatpush1.msra.mxu0 0.0
      %2443 = vmatprep.subr.mxu0 0.0
      %2444 = vmatpush1.msra.mxu0 0.0
      %2445 = vmatprep.subr.mxu0 0.0
      %2446 = vmatpush1.msra.mxu0 0.0
      %2447 = vmatprep.subr.mxu0 0.0
      %2448 = vmatpush1.msra.mxu0 0.0
      %2449 = vmatprep.subr.mxu0 0.0
      %2450 = vmatpush1.msra.mxu0 0.0
      %2451 = vmatprep.subr.mxu0 0.0
      %2452 = vmatpush1.msra.mxu0 0.0
      %2453 = vmatprep.subr.mxu0 0.0
      %2454 = vmatpush1.msra.mxu0 0.0
      %2455 = vmatprep.subr.mxu0 0.0
      %2456 = vmatpush1.msra.mxu0 0.0
      %2457 = vmatprep.subr.mxu0 0.0
      %2458 = vmatpush1.msra.mxu0 0.0
      %2459 = vmatprep.subr.mxu0 0.0
      %2460 = vmatpush1.msra.mxu0 0.0
      %2461 = vmatprep.subr.mxu0 0.0
      %2462 = vmatpush1.msra.mxu0 0.0
      %2463 = vmatprep.subr.mxu0 0.0
      %2464 = vmatpush1.msra.mxu0 0.0
      %2465 = vmatprep.subr.mxu0 0.0
      %2466 = vmatpush1.msra.mxu0 0.0
      %2467 = vmatprep.subr.mxu0 0.0
      %2468 = vmatpush1.msra.mxu0 0.0
      %2469 = vmatprep.subr.mxu0 0.0
      %2470 = vmatpush1.msra.mxu0 0.0
      %2471 = vmatprep.subr.mxu0 0.0
      %2472 = vmatpush1.msra.mxu0 0.0
      %2473 = vmatprep.subr.mxu0 0.0
      %2474 = vmatpush1.msra.mxu0 0.0
      %2475 = vmatprep.subr.mxu0 0.0
      %2476 = vmatpush1.msra.mxu0 0.0
      %2477 = vmatprep.subr.mxu0 0.0
      %2478 = vmatpush1.msra.mxu0 0.0
      %2479 = vmatprep.subr.mxu0 0.0
      %2480 = vmatpush1.msra.mxu0 0.0
      %2481 = vmatprep.subr.mxu0 0.0
      %2482 = vmatpush1.msra.mxu0 0.0
      %2483 = vmatprep.subr.mxu0 0.0
      %2484 = vmatpush1.msra.mxu0 0.0
      %2485 = vmatprep.subr.mxu0 0.0
      %2486 = vmatpush1.msra.mxu0 0.0
      %2487 = vmatprep.subr.mxu0 0.0
      %2488 = vmatpush1.msra.mxu0 0.0
      %2489 = vmatprep.subr.mxu0 0.0
      %2490 = vmatpush1.msra.mxu0 0.0
      %2491 = vmatprep.subr.mxu0 0.0
      %2492 = vmatpush1.msra.mxu0 0.0
      %2493 = vmatprep.subr.mxu0 0.0
      %2494 = vmatpush1.msra.mxu0 0.0
      %2495 = vmatprep.subr.mxu0 0.0
      %2496 = vmatpush1.msra.mxu0 0.0
      %2497 = vmatprep.subr.mxu0 0.0
      %2498 = vmatpush1.msra.mxu0 0.0
      %2499 = vmatprep.mubr.f32.mxu0 0.0
      %2500 = vmatmul.mubr.f32.gmra.mrb[0].mxu0 %v2430
      %v2501 = vpop.f32.mrb[0].mxu0
      %v2502 = vadd.f32 0.0, %v2501
      %v2503 = vpop.f32.mrb[0].mxu0
      %2504 = vmatprep.mubr.f32.mxu0 0.0
      %2505 = vmatmul.mubr.f32.gmra.mrb[0].mxu0 %v2433
      %v2506 = vpop.f32.mrb[0].mxu0
      %v2507 = vadd.f32 0.0, %v2506
      %v2508 = vpop.f32.mrb[0].mxu0
      %2509 = vdwg.mxu0
      %2510 = vrot.lane.b32.xlu0 %v349, 48
      %v2511 = vpop.permute.xlu0 %2510
      %2512 = vrot.lane.b32.xlu0 %v354, 48
      %v2513 = vpop.permute.xlu0 %2512
      %v2517 = vsel %vm734, %v2417, 0
      %v2520 = vsel %vm734, %v2418, 0
      %2522 = vmatprep.subr.mxu0 0.0
      %2523 = vmatpush1.msra.mxu0 %v2511
      %2524 = vmatprep.subr.mxu0 0.0
      %2525 = vmatpush1.msra.mxu0 %v2513
      %2526 = vmatprep.subr.mxu0 0.0
      %2527 = vmatpush1.msra.mxu0 0.0
      %2528 = vmatprep.subr.mxu0 0.0
      %2529 = vmatpush1.msra.mxu0 0.0
      %2530 = vmatprep.subr.mxu0 0.0
      %2531 = vmatpush1.msra.mxu0 0.0
      %2532 = vmatprep.subr.mxu0 0.0
      %2533 = vmatpush1.msra.mxu0 0.0
      %2534 = vmatprep.subr.mxu0 0.0
      %2535 = vmatpush1.msra.mxu0 0.0
      %2536 = vmatprep.subr.mxu0 0.0
      %2537 = vmatpush1.msra.mxu0 0.0
      %2538 = vmatprep.subr.mxu0 0.0
      %2539 = vmatpush1.msra.mxu0 0.0
      %2540 = vmatprep.subr.mxu0 0.0
      %2541 = vmatpush1.msra.mxu0 0.0
      %2542 = vmatprep.subr.mxu0 0.0
      %2543 = vmatpush1.msra.mxu0 0.0
      %2544 = vmatprep.subr.mxu0 0.0
      %2545 = vmatpush1.msra.mxu0 0.0
      %2546 = vmatprep.subr.mxu0 0.0
      %2547 = vmatpush1.msra.mxu0 0.0
      %2548 = vmatprep.subr.mxu0 0.0
      %2549 = vmatpush1.msra.mxu0 0.0
      %2550 = vmatprep.subr.mxu0 0.0
      %2551 = vmatpush1.msra.mxu0 0.0
      %2552 = vmatprep.subr.mxu0 0.0
      %2553 = vmatpush1.msra.mxu0 0.0
      %2554 = vmatprep.subr.mxu0 0.0
      %2555 = vmatpush1.msra.mxu0 0.0
      %2556 = vmatprep.subr.mxu0 0.0
      %2557 = vmatpush1.msra.mxu0 0.0
      %2558 = vmatprep.subr.mxu0 0.0
      %2559 = vmatpush1.msra.mxu0 0.0
      %2560 = vmatprep.subr.mxu0 0.0
      %2561 = vmatpush1.msra.mxu0 0.0
      %2562 = vmatprep.subr.mxu0 0.0
      %2563 = vmatpush1.msra.mxu0 0.0
      %2564 = vmatprep.subr.mxu0 0.0
      %2565 = vmatpush1.msra.mxu0 0.0
      %2566 = vmatprep.subr.mxu0 0.0
      %2567 = vmatpush1.msra.mxu0 0.0
      %2568 = vmatprep.subr.mxu0 0.0
      %2569 = vmatpush1.msra.mxu0 0.0
      %2570 = vmatprep.subr.mxu0 0.0
      %2571 = vmatpush1.msra.mxu0 0.0
      %2572 = vmatprep.subr.mxu0 0.0
      %2573 = vmatpush1.msra.mxu0 0.0
      %2574 = vmatprep.subr.mxu0 0.0
      %2575 = vmatpush1.msra.mxu0 0.0
      %2576 = vmatprep.subr.mxu0 0.0
      %2577 = vmatpush1.msra.mxu0 0.0
      %2578 = vmatprep.subr.mxu0 0.0
      %2579 = vmatpush1.msra.mxu0 0.0
      %2580 = vmatprep.subr.mxu0 0.0
      %2581 = vmatpush1.msra.mxu0 0.0
      %2582 = vmatprep.subr.mxu0 0.0
      %2583 = vmatpush1.msra.mxu0 0.0
      %2584 = vmatprep.subr.mxu0 0.0
      %2585 = vmatpush1.msra.mxu0 0.0
      %2586 = vmatprep.mubr.f32.mxu0 0.0
      %2587 = vmatmul.mubr.f32.gmra.mrb[0].mxu0 %v2517
      %v2588 = vpop.f32.mrb[0].mxu0
      %v2589 = vadd.f32 0.0, %v2588
      %v2590 = vpop.f32.mrb[0].mxu0
      %2591 = vmatprep.mubr.f32.mxu0 0.0
      %2592 = vmatmul.mubr.f32.gmra.mrb[0].mxu0 %v2520
      %v2593 = vpop.f32.mrb[0].mxu0
      %v2594 = vadd.f32 0.0, %v2593
      %v2595 = vpop.f32.mrb[0].mxu0
      %2596 = vdwg.mxu0
      %2597 = vrot.lane.b32.xlu0 %v359, 48
      %v2598 = vpop.permute.xlu0 %2597
      %2599 = vrot.lane.b32.xlu0 %v364, 48
      %v2600 = vpop.permute.xlu0 %2599
      %v2604 = vsel %vm734, %v2419, 0
      %v2607 = vsel %vm734, %v2420, 0
      %2609 = vmatprep.subr.mxu0 0.0
      %2610 = vmatpush1.msra.mxu0 %v2598
      %2611 = vmatprep.subr.mxu0 0.0
      %2612 = vmatpush1.msra.mxu0 %v2600
      %2613 = vmatprep.subr.mxu0 0.0
      %2614 = vmatpush1.msra.mxu0 0.0
      %2615 = vmatprep.subr.mxu0 0.0
      %2616 = vmatpush1.msra.mxu0 0.0
      %2617 = vmatprep.subr.mxu0 0.0
      %2618 = vmatpush1.msra.mxu0 0.0
      %2619 = vmatprep.subr.mxu0 0.0
      %2620 = vmatpush1.msra.mxu0 0.0
      %2621 = vmatprep.subr.mxu0 0.0
      %2622 = vmatpush1.msra.mxu0 0.0
      %2623 = vmatprep.subr.mxu0 0.0
      %2624 = vmatpush1.msra.mxu0 0.0
      %2625 = vmatprep.subr.mxu0 0.0
      %2626 = vmatpush1.msra.mxu0 0.0
      %2627 = vmatprep.subr.mxu0 0.0
      %2628 = vmatpush1.msra.mxu0 0.0
      %2629 = vmatprep.subr.mxu0 0.0
      %2630 = vmatpush1.msra.mxu0 0.0
      %2631 = vmatprep.subr.mxu0 0.0
      %2632 = vmatpush1.msra.mxu0 0.0
      %2633 = vmatprep.subr.mxu0 0.0
      %2634 = vmatpush1.msra.mxu0 0.0
      %2635 = vmatprep.subr.mxu0 0.0
      %2636 = vmatpush1.msra.mxu0 0.0
      %2637 = vmatprep.subr.mxu0 0.0
      %2638 = vmatpush1.msra.mxu0 0.0
      %2639 = vmatprep.subr.mxu0 0.0
      %2640 = vmatpush1.msra.mxu0 0.0
      %2641 = vmatprep.subr.mxu0 0.0
      %2642 = vmatpush1.msra.mxu0 0.0
      %2643 = vmatprep.subr.mxu0 0.0
      %2644 = vmatpush1.msra.mxu0 0.0
      %2645 = vmatprep.subr.mxu0 0.0
      %2646 = vmatpush1.msra.mxu0 0.0
      %2647 = vmatprep.subr.mxu0 0.0
      %2648 = vmatpush1.msra.mxu0 0.0
      %2649 = vmatprep.subr.mxu0 0.0
      %2650 = vmatpush1.msra.mxu0 0.0
      %2651 = vmatprep.subr.mxu0 0.0
      %2652 = vmatpush1.msra.mxu0 0.0
      %2653 = vmatprep.subr.mxu0 0.0
      %2654 = vmatpush1.msra.mxu0 0.0
      %2655 = vmatprep.subr.mxu0 0.0
      %2656 = vmatpush1.msra.mxu0 0.0
      %2657 = vmatprep.subr.mxu0 0.0
      %2658 = vmatpush1.msra.mxu0 0.0
      %2659 = vmatprep.subr.mxu0 0.0
      %2660 = vmatpush1.msra.mxu0 0.0
      %2661 = vmatprep.subr.mxu0 0.0
      %2662 = vmatpush1.msra.mxu0 0.0
      %2663 = vmatprep.subr.mxu0 0.0
      %2664 = vmatpush1.msra.mxu0 0.0
      %2665 = vmatprep.subr.mxu0 0.0
      %2666 = vmatpush1.msra.mxu0 0.0
      %2667 = vmatprep.subr.mxu0 0.0
      %2668 = vmatpush1.msra.mxu0 0.0
      %2669 = vmatprep.subr.mxu0 0.0
      %2670 = vmatpush1.msra.mxu0 0.0
      %2671 = vmatprep.subr.mxu0 0.0
      %2672 = vmatpush1.msra.mxu0 0.0
      %2673 = vmatprep.mubr.f32.mxu0 0.0
      %2674 = vmatmul.mubr.f32.gmra.mrb[0].mxu0 %v2604
      %v2675 = vpop.f32.mrb[0].mxu0
      %v2676 = vadd.f32 0.0, %v2675
      %v2677 = vpop.f32.mrb[0].mxu0
      %2678 = vmatprep.mubr.f32.mxu0 0.0
      %2679 = vmatmul.mubr.f32.gmra.mrb[0].mxu0 %v2607
      %v2680 = vpop.f32.mrb[0].mxu0
      %v2681 = vadd.f32 0.0, %v2680
      %v2682 = vpop.f32.mrb[0].mxu0
      %2683 = vdwg.mxu0
      %2684 = vrot.lane.b32.xlu0 %v369, 48
      %v2685 = vpop.permute.xlu0 %2684
      %2686 = vrot.lane.b32.xlu0 %v374, 48
      %v2687 = vpop.permute.xlu0 %2686
      %v2691 = vsel %vm734, %v2421, 0
      %v2694 = vsel %vm734, %v2422, 0
      %2696 = vmatprep.subr.mxu0 0.0
      %2697 = vmatpush1.msra.mxu0 %v2685
      %2698 = vmatprep.subr.mxu0 0.0
      %2699 = vmatpush1.msra.mxu0 %v2687
      %2700 = vmatprep.subr.mxu0 0.0
      %2701 = vmatpush1.msra.mxu0 0.0
      %2702 = vmatprep.subr.mxu0 0.0
      %2703 = vmatpush1.msra.mxu0 0.0
      %2704 = vmatprep.subr.mxu0 0.0
      %2705 = vmatpush1.msra.mxu0 0.0
      %2706 = vmatprep.subr.mxu0 0.0
      %2707 = vmatpush1.msra.mxu0 0.0
      %2708 = vmatprep.subr.mxu0 0.0
      %2709 = vmatpush1.msra.mxu0 0.0
      %2710 = vmatprep.subr.mxu0 0.0
      %2711 = vmatpush1.msra.mxu0 0.0
      %2712 = vmatprep.subr.mxu0 0.0
      %2713 = vmatpush1.msra.mxu0 0.0
      %2714 = vmatprep.subr.mxu0 0.0
      %2715 = vmatpush1.msra.mxu0 0.0
      %2716 = vmatprep.subr.mxu0 0.0
      %2717 = vmatpush1.msra.mxu0 0.0
      %2718 = vmatprep.subr.mxu0 0.0
      %2719 = vmatpush1.msra.mxu0 0.0
      %2720 = vmatprep.subr.mxu0 0.0
      %2721 = vmatpush1.msra.mxu0 0.0
      %2722 = vmatprep.subr.mxu0 0.0
      %2723 = vmatpush1.msra.mxu0 0.0
      %2724 = vmatprep.subr.mxu0 0.0
      %2725 = vmatpush1.msra.mxu0 0.0
      %2726 = vmatprep.subr.mxu0 0.0
      %2727 = vmatpush1.msra.mxu0 0.0
      %2728 = vmatprep.subr.mxu0 0.0
      %2729 = vmatpush1.msra.mxu0 0.0
      %2730 = vmatprep.subr.mxu0 0.0
      %2731 = vmatpush1.msra.mxu0 0.0
      %2732 = vmatprep.subr.mxu0 0.0
      %2733 = vmatpush1.msra.mxu0 0.0
      %2734 = vmatprep.subr.mxu0 0.0
      %2735 = vmatpush1.msra.mxu0 0.0
      %2736 = vmatprep.subr.mxu0 0.0
      %2737 = vmatpush1.msra.mxu0 0.0
      %2738 = vmatprep.subr.mxu0 0.0
      %2739 = vmatpush1.msra.mxu0 0.0
      %2740 = vmatprep.subr.mxu0 0.0
      %2741 = vmatpush1.msra.mxu0 0.0
      %2742 = vmatprep.subr.mxu0 0.0
      %2743 = vmatpush1.msra.mxu0 0.0
      %2744 = vmatprep.subr.mxu0 0.0
      %2745 = vmatpush1.msra.mxu0 0.0
      %2746 = vmatprep.subr.mxu0 0.0
      %2747 = vmatpush1.msra.mxu0 0.0
      %2748 = vmatprep.subr.mxu0 0.0
      %2749 = vmatpush1.msra.mxu0 0.0
      %2750 = vmatprep.subr.mxu0 0.0
      %2751 = vmatpush1.msra.mxu0 0.0
      %2752 = vmatprep.subr.mxu0 0.0
      %2753 = vmatpush1.msra.mxu0 0.0
      %2754 = vmatprep.subr.mxu0 0.0
      %2755 = vmatpush1.msra.mxu0 0.0
      %2756 = vmatprep.subr.mxu0 0.0
      %2757 = vmatpush1.msra.mxu0 0.0
      %2758 = vmatprep.subr.mxu0 0.0
      %2759 = vmatpush1.msra.mxu0 0.0
      %2760 = vmatprep.mubr.f32.mxu0 0.0
      %2761 = vmatmul.mubr.f32.gmra.mrb[0].mxu0 %v2691
      %v2762 = vpop.f32.mrb[0].mxu0
      %v2763 = vadd.f32 0.0, %v2762
      %v2764 = vpop.f32.mrb[0].mxu0
      %2765 = vmatprep.mubr.f32.mxu0 0.0
      %2766 = vmatmul.mubr.f32.gmra.mrb[0].mxu0 %v2694
      %v2767 = vpop.f32.mrb[0].mxu0
      %v2768 = vadd.f32 0.0, %v2767
      %v2769 = vpop.f32.mrb[0].mxu0
      %2770 = vdwg.mxu0
      %2771 = vrot.lane.b32.xlu0 %v339, 104
      %v2772 = vpop.permute.xlu0 %2771
      %2773 = vrot.lane.b32.xlu0 %v344, 104
      %v2774 = vpop.permute.xlu0 %2773
      %2775 = vrot.lane.b32.xlu0 %v339, 72
      %v2776 = vpop.permute.xlu0 %2775
      %2777 = vrot.lane.b32.xlu0 %v344, 72
      %v2778 = vpop.permute.xlu0 %2777
      %v2779 = vsel %vm383, %v2772, 0
      %v2781 = vsel %vm383, %v2774, 0
      %v2783 = vsel %vm383, %v2776, 0
      %v2785 = vsel %vm383, %v2778, 0
      %2787 = vmatprep.subr.mxu0 0.0
      %2788 = vmatpush1.xpose.msra.mxu0 %v2783
      %2789 = vmatprep.subr.mxu0 0.0
      %2790 = vmatpush1.xpose.msra.mxu0 %v2785
      %2791 = vmatprep.subr.mxu0 0.0
      %2792 = vmatpush1.xpose.msra.mxu0 0.0
      %2793 = vmatprep.subr.mxu0 0.0
      %2794 = vmatpush1.xpose.msra.mxu0 0.0
      %2795 = vmatprep.subr.mxu0 0.0
      %2796 = vmatpush1.xpose.msra.mxu0 0.0
      %2797 = vmatprep.subr.mxu0 0.0
      %2798 = vmatpush1.xpose.msra.mxu0 0.0
      %2799 = vmatprep.subr.mxu0 0.0
      %2800 = vmatpush1.xpose.msra.mxu0 0.0
      %2801 = vmatprep.subr.mxu0 0.0
      %2802 = vmatpush1.xpose.msra.mxu0 0.0
      %2803 = vmatprep.subr.mxu0 0.0
      %2804 = vmatpush1.xpose.msra.mxu0 0.0
      %2805 = vmatprep.subr.mxu0 0.0
      %2806 = vmatpush1.xpose.msra.mxu0 0.0
      %2807 = vmatprep.subr.mxu0 0.0
      %2808 = vmatpush1.xpose.msra.mxu0 0.0
      %2809 = vmatprep.subr.mxu0 0.0
      %2810 = vmatpush1.xpose.msra.mxu0 0.0
      %2811 = vmatprep.subr.mxu0 0.0
      %2812 = vmatpush1.xpose.msra.mxu0 0.0
      %2813 = vmatprep.subr.mxu0 0.0
      %2814 = vmatpush1.xpose.msra.mxu0 0.0
      %2815 = vmatprep.subr.mxu0 0.0
      %2816 = vmatpush1.xpose.msra.mxu0 0.0
      %2817 = vmatprep.subr.mxu0 0.0
      %2818 = vmatpush1.xpose.msra.mxu0 0.0
      %2819 = vmatprep.subr.mxu0 0.0
      %2820 = vmatpush1.xpose.msra.mxu0 0.0
      %2821 = vmatprep.subr.mxu0 0.0
      %2822 = vmatpush1.xpose.msra.mxu0 0.0
      %2823 = vmatprep.subr.mxu0 0.0
      %2824 = vmatpush1.xpose.msra.mxu0 0.0
      %2825 = vmatprep.subr.mxu0 0.0
      %2826 = vmatpush1.xpose.msra.mxu0 0.0
      %2827 = vmatprep.subr.mxu0 0.0
      %2828 = vmatpush1.xpose.msra.mxu0 0.0
      %2829 = vmatprep.subr.mxu0 0.0
      %2830 = vmatpush1.xpose.msra.mxu0 0.0
      %2831 = vmatprep.subr.mxu0 0.0
      %2832 = vmatpush1.xpose.msra.mxu0 0.0
      %2833 = vmatprep.subr.mxu0 0.0
      %2834 = vmatpush1.xpose.msra.mxu0 0.0
      %2835 = vmatprep.subr.mxu0 0.0
      %2836 = vmatpush1.xpose.msra.mxu0 0.0
      %2837 = vmatprep.subr.mxu0 0.0
      %2838 = vmatpush1.xpose.msra.mxu0 0.0
      %2839 = vmatprep.subr.mxu0 0.0
      %2840 = vmatpush1.xpose.msra.mxu0 0.0
      %2841 = vmatprep.subr.mxu0 0.0
      %2842 = vmatpush1.xpose.msra.mxu0 0.0
      %2843 = vmatprep.subr.mxu0 0.0
      %2844 = vmatpush1.xpose.msra.mxu0 0.0
      %2845 = vmatprep.subr.mxu0 0.0
      %2846 = vmatpush1.xpose.msra.mxu0 0.0
      %2847 = vmatprep.subr.mxu0 0.0
      %2848 = vmatpush1.xpose.msra.mxu0 0.0
      %2849 = vmatprep.subr.mxu0 0.0
      %2850 = vmatpush1.xpose.msra.mxu0 0.0
      %2851 = vmatprep.mubr.f32.mxu0 0.0
      %2852 = vmatmul.mubr.f32.gmra.mrb[0].mxu0 %v2779
      %v2853 = vpop.f32.mrb[0].mxu0
      %v2854 = vadd.f32 0.0, %v2853
      %v2855 = vpop.f32.mrb[0].mxu0
      %2856 = vmatprep.mubr.f32.mxu0 0.0
      %2857 = vmatmul.mubr.f32.gmra.mrb[0].mxu0 %v2781
      %v2858 = vpop.f32.mrb[0].mxu0
      %v2859 = vadd.f32 0.0, %v2858
      %v2860 = vpop.f32.mrb[0].mxu0
      %2861 = vdwg.mxu0
      %2862 = vrot.lane.b32.xlu0 %v349, 104
      %v2863 = vpop.permute.xlu0 %2862
      %2864 = vrot.lane.b32.xlu0 %v354, 104
      %v2865 = vpop.permute.xlu0 %2864
      %2866 = vrot.lane.b32.xlu0 %v349, 72
      %v2867 = vpop.permute.xlu0 %2866
      %2868 = vrot.lane.b32.xlu0 %v354, 72
      %v2869 = vpop.permute.xlu0 %2868
      %v2870 = vsel %vm383, %v2863, 0
      %v2872 = vsel %vm383, %v2865, 0
      %v2874 = vsel %vm383, %v2867, 0
      %v2876 = vsel %vm383, %v2869, 0
      %2878 = vmatprep.subr.mxu0 0.0
      %2879 = vmatpush1.xpose.msra.mxu0 %v2874
      %2880 = vmatprep.subr.mxu0 0.0
      %2881 = vmatpush1.xpose.msra.mxu0 %v2876
      %2882 = vmatprep.subr.mxu0 0.0
      %2883 = vmatpush1.xpose.msra.mxu0 0.0
      %2884 = vmatprep.subr.mxu0 0.0
      %2885 = vmatpush1.xpose.msra.mxu0 0.0
      %2886 = vmatprep.subr.mxu0 0.0
      %2887 = vmatpush1.xpose.msra.mxu0 0.0
      %2888 = vmatprep.subr.mxu0 0.0
      %2889 = vmatpush1.xpose.msra.mxu0 0.0
      %2890 = vmatprep.subr.mxu0 0.0
      %2891 = vmatpush1.xpose.msra.mxu0 0.0
      %2892 = vmatprep.subr.mxu0 0.0
      %2893 = vmatpush1.xpose.msra.mxu0 0.0
      %2894 = vmatprep.subr.mxu0 0.0
      %2895 = vmatpush1.xpose.msra.mxu0 0.0
      %2896 = vmatprep.subr.mxu0 0.0
      %2897 = vmatpush1.xpose.msra.mxu0 0.0
      %2898 = vmatprep.subr.mxu0 0.0
      %2899 = vmatpush1.xpose.msra.mxu0 0.0
      %2900 = vmatprep.subr.mxu0 0.0
      %2901 = vmatpush1.xpose.msra.mxu0 0.0
      %2902 = vmatprep.subr.mxu0 0.0
      %2903 = vmatpush1.xpose.msra.mxu0 0.0
      %2904 = vmatprep.subr.mxu0 0.0
      %2905 = vmatpush1.xpose.msra.mxu0 0.0
      %2906 = vmatprep.subr.mxu0 0.0
      %2907 = vmatpush1.xpose.msra.mxu0 0.0
      %2908 = vmatprep.subr.mxu0 0.0
      %2909 = vmatpush1.xpose.msra.mxu0 0.0
      %2910 = vmatprep.subr.mxu0 0.0
      %2911 = vmatpush1.xpose.msra.mxu0 0.0
      %2912 = vmatprep.subr.mxu0 0.0
      %2913 = vmatpush1.xpose.msra.mxu0 0.0
      %2914 = vmatprep.subr.mxu0 0.0
      %2915 = vmatpush1.xpose.msra.mxu0 0.0
      %2916 = vmatprep.subr.mxu0 0.0
      %2917 = vmatpush1.xpose.msra.mxu0 0.0
      %2918 = vmatprep.subr.mxu0 0.0
      %2919 = vmatpush1.xpose.msra.mxu0 0.0
      %2920 = vmatprep.subr.mxu0 0.0
      %2921 = vmatpush1.xpose.msra.mxu0 0.0
      %2922 = vmatprep.subr.mxu0 0.0
      %2923 = vmatpush1.xpose.msra.mxu0 0.0
      %2924 = vmatprep.subr.mxu0 0.0
      %2925 = vmatpush1.xpose.msra.mxu0 0.0
      %2926 = vmatprep.subr.mxu0 0.0
      %2927 = vmatpush1.xpose.msra.mxu0 0.0
      %2928 = vmatprep.subr.mxu0 0.0
      %2929 = vmatpush1.xpose.msra.mxu0 0.0
      %2930 = vmatprep.subr.mxu0 0.0
      %2931 = vmatpush1.xpose.msra.mxu0 0.0
      %2932 = vmatprep.subr.mxu0 0.0
      %2933 = vmatpush1.xpose.msra.mxu0 0.0
      %2934 = vmatprep.subr.mxu0 0.0
      %2935 = vmatpush1.xpose.msra.mxu0 0.0
      %2936 = vmatprep.subr.mxu0 0.0
      %2937 = vmatpush1.xpose.msra.mxu0 0.0
      %2938 = vmatprep.subr.mxu0 0.0
      %2939 = vmatpush1.xpose.msra.mxu0 0.0
      %2940 = vmatprep.subr.mxu0 0.0
      %2941 = vmatpush1.xpose.msra.mxu0 0.0
      %2942 = vmatprep.mubr.f32.mxu0 0.0
      %2943 = vmatmul.mubr.f32.gmra.mrb[0].mxu0 %v2870
      %v2944 = vpop.f32.mrb[0].mxu0
      %v2945 = vadd.f32 0.0, %v2944
      %v2946 = vpop.f32.mrb[0].mxu0
      %2947 = vmatprep.mubr.f32.mxu0 0.0
      %2948 = vmatmul.mubr.f32.gmra.mrb[0].mxu0 %v2872
      %v2949 = vpop.f32.mrb[0].mxu0
      %v2950 = vadd.f32 0.0, %v2949
      %v2951 = vpop.f32.mrb[0].mxu0
      %2952 = vdwg.mxu0
      %2953 = vrot.lane.b32.xlu0 %v359, 104
      %v2954 = vpop.permute.xlu0 %2953
      %2955 = vrot.lane.b32.xlu0 %v364, 104
      %v2956 = vpop.permute.xlu0 %2955
      %2957 = vrot.lane.b32.xlu0 %v359, 72
      %v2958 = vpop.permute.xlu0 %2957
      %2959 = vrot.lane.b32.xlu0 %v364, 72
      %v2960 = vpop.permute.xlu0 %2959
      %v2961 = vsel %vm383, %v2954, 0
      %v2963 = vsel %vm383, %v2956, 0
      %v2965 = vsel %vm383, %v2958, 0
      %v2967 = vsel %vm383, %v2960, 0
      %2969 = vmatprep.subr.mxu0 0.0
      %2970 = vmatpush1.xpose.msra.mxu0 %v2965
      %2971 = vmatprep.subr.mxu0 0.0
      %2972 = vmatpush1.xpose.msra.mxu0 %v2967
      %2973 = vmatprep.subr.mxu0 0.0
      %2974 = vmatpush1.xpose.msra.mxu0 0.0
      %2975 = vmatprep.subr.mxu0 0.0
      %2976 = vmatpush1.xpose.msra.mxu0 0.0
      %2977 = vmatprep.subr.mxu0 0.0
      %2978 = vmatpush1.xpose.msra.mxu0 0.0
      %2979 = vmatprep.subr.mxu0 0.0
      %2980 = vmatpush1.xpose.msra.mxu0 0.0
      %2981 = vmatprep.subr.mxu0 0.0
      %2982 = vmatpush1.xpose.msra.mxu0 0.0
      %2983 = vmatprep.subr.mxu0 0.0
      %2984 = vmatpush1.xpose.msra.mxu0 0.0
      %2985 = vmatprep.subr.mxu0 0.0
      %2986 = vmatpush1.xpose.msra.mxu0 0.0
      %2987 = vmatprep.subr.mxu0 0.0
      %2988 = vmatpush1.xpose.msra.mxu0 0.0
      %2989 = vmatprep.subr.mxu0 0.0
      %2990 = vmatpush1.xpose.msra.mxu0 0.0
      %2991 = vmatprep.subr.mxu0 0.0
      %2992 = vmatpush1.xpose.msra.mxu0 0.0
      %2993 = vmatprep.subr.mxu0 0.0
      %2994 = vmatpush1.xpose.msra.mxu0 0.0
      %2995 = vmatprep.subr.mxu0 0.0
      %2996 = vmatpush1.xpose.msra.mxu0 0.0
      %2997 = vmatprep.subr.mxu0 0.0
      %2998 = vmatpush1.xpose.msra.mxu0 0.0
      %2999 = vmatprep.subr.mxu0 0.0
      %3000 = vmatpush1.xpose.msra.mxu0 0.0
      %3001 = vmatprep.subr.mxu0 0.0
      %3002 = vmatpush1.xpose.msra.mxu0 0.0
      %3003 = vmatprep.subr.mxu0 0.0
      %3004 = vmatpush1.xpose.msra.mxu0 0.0
      %3005 = vmatprep.subr.mxu0 0.0
      %3006 = vmatpush1.xpose.msra.mxu0 0.0
      %3007 = vmatprep.subr.mxu0 0.0
      %3008 = vmatpush1.xpose.msra.mxu0 0.0
      %3009 = vmatprep.subr.mxu0 0.0
      %3010 = vmatpush1.xpose.msra.mxu0 0.0
      %3011 = vmatprep.subr.mxu0 0.0
      %3012 = vmatpush1.xpose.msra.mxu0 0.0
      %3013 = vmatprep.subr.mxu0 0.0
      %3014 = vmatpush1.xpose.msra.mxu0 0.0
      %3015 = vmatprep.subr.mxu0 0.0
      %3016 = vmatpush1.xpose.msra.mxu0 0.0
      %3017 = vmatprep.subr.mxu0 0.0
      %3018 = vmatpush1.xpose.msra.mxu0 0.0
      %3019 = vmatprep.subr.mxu0 0.0
      %3020 = vmatpush1.xpose.msra.mxu0 0.0
      %3021 = vmatprep.subr.mxu0 0.0
      %3022 = vmatpush1.xpose.msra.mxu0 0.0
      %3023 = vmatprep.subr.mxu0 0.0
      %3024 = vmatpush1.xpose.msra.mxu0 0.0
      %3025 = vmatprep.subr.mxu0 0.0
      %3026 = vmatpush1.xpose.msra.mxu0 0.0
      %3027 = vmatprep.subr.mxu0 0.0
      %3028 = vmatpush1.xpose.msra.mxu0 0.0
      %3029 = vmatprep.subr.mxu0 0.0
      %3030 = vmatpush1.xpose.msra.mxu0 0.0
      %3031 = vmatprep.subr.mxu0 0.0
      %3032 = vmatpush1.xpose.msra.mxu0 0.0
      %3033 = vmatprep.mubr.f32.mxu0 0.0
      %3034 = vmatmul.mubr.f32.gmra.mrb[0].mxu0 %v2961
      %v3035 = vpop.f32.mrb[0].mxu0
      %v3036 = vadd.f32 0.0, %v3035
      %v3037 = vpop.f32.mrb[0].mxu0
      %3038 = vmatprep.mubr.f32.mxu0 0.0
      %3039 = vmatmul.mubr.f32.gmra.mrb[0].mxu0 %v2963
      %v3040 = vpop.f32.mrb[0].mxu0
      %v3041 = vadd.f32 0.0, %v3040
      %v3042 = vpop.f32.mrb[0].mxu0
      %3043 = vdwg.mxu0
      %3044 = vrot.lane.b32.xlu0 %v369, 104
      %v3045 = vpop.permute.xlu0 %3044
      %3046 = vrot.lane.b32.xlu0 %v374, 104
      %v3047 = vpop.permute.xlu0 %3046
      %3048 = vrot.lane.b32.xlu0 %v369, 72
      %v3049 = vpop.permute.xlu0 %3048
      %3050 = vrot.lane.b32.xlu0 %v374, 72
      %v3051 = vpop.permute.xlu0 %3050
      %v3052 = vsel %vm383, %v3045, 0
      %v3054 = vsel %vm383, %v3047, 0
      %v3056 = vsel %vm383, %v3049, 0
      %v3058 = vsel %vm383, %v3051, 0
      %3060 = vmatprep.subr.mxu0 0.0
      %3061 = vmatpush1.xpose.msra.mxu0 %v3056
      %3062 = vmatprep.subr.mxu0 0.0
      %3063 = vmatpush1.xpose.msra.mxu0 %v3058
      %3064 = vmatprep.subr.mxu0 0.0
      %3065 = vmatpush1.xpose.msra.mxu0 0.0
      %3066 = vmatprep.subr.mxu0 0.0
      %3067 = vmatpush1.xpose.msra.mxu0 0.0
      %3068 = vmatprep.subr.mxu0 0.0
      %3069 = vmatpush1.xpose.msra.mxu0 0.0
      %3070 = vmatprep.subr.mxu0 0.0
      %3071 = vmatpush1.xpose.msra.mxu0 0.0
      %3072 = vmatprep.subr.mxu0 0.0
      %3073 = vmatpush1.xpose.msra.mxu0 0.0
      %3074 = vmatprep.subr.mxu0 0.0
      %3075 = vmatpush1.xpose.msra.mxu0 0.0
      %3076 = vmatprep.subr.mxu0 0.0
      %3077 = vmatpush1.xpose.msra.mxu0 0.0
      %3078 = vmatprep.subr.mxu0 0.0
      %3079 = vmatpush1.xpose.msra.mxu0 0.0
      %3080 = vmatprep.subr.mxu0 0.0
      %3081 = vmatpush1.xpose.msra.mxu0 0.0
      %3082 = vmatprep.subr.mxu0 0.0
      %3083 = vmatpush1.xpose.msra.mxu0 0.0
      %3084 = vmatprep.subr.mxu0 0.0
      %3085 = vmatpush1.xpose.msra.mxu0 0.0
      %3086 = vmatprep.subr.mxu0 0.0
      %3087 = vmatpush1.xpose.msra.mxu0 0.0
      %3088 = vmatprep.subr.mxu0 0.0
      %3089 = vmatpush1.xpose.msra.mxu0 0.0
      %3090 = vmatprep.subr.mxu0 0.0
      %3091 = vmatpush1.xpose.msra.mxu0 0.0
      %3092 = vmatprep.subr.mxu0 0.0
      %3093 = vmatpush1.xpose.msra.mxu0 0.0
      %3094 = vmatprep.subr.mxu0 0.0
      %3095 = vmatpush1.xpose.msra.mxu0 0.0
      %3096 = vmatprep.subr.mxu0 0.0
      %3097 = vmatpush1.xpose.msra.mxu0 0.0
      %3098 = vmatprep.subr.mxu0 0.0
      %3099 = vmatpush1.xpose.msra.mxu0 0.0
      %3100 = vmatprep.subr.mxu0 0.0
      %3101 = vmatpush1.xpose.msra.mxu0 0.0
      %3102 = vmatprep.subr.mxu0 0.0
      %3103 = vmatpush1.xpose.msra.mxu0 0.0
      %3104 = vmatprep.subr.mxu0 0.0
      %3105 = vmatpush1.xpose.msra.mxu0 0.0
      %3106 = vmatprep.subr.mxu0 0.0
      %3107 = vmatpush1.xpose.msra.mxu0 0.0
      %3108 = vmatprep.subr.mxu0 0.0
      %3109 = vmatpush1.xpose.msra.mxu0 0.0
      %3110 = vmatprep.subr.mxu0 0.0
      %3111 = vmatpush1.xpose.msra.mxu0 0.0
      %3112 = vmatprep.subr.mxu0 0.0
      %3113 = vmatpush1.xpose.msra.mxu0 0.0
      %3114 = vmatprep.subr.mxu0 0.0
      %3115 = vmatpush1.xpose.msra.mxu0 0.0
      %3116 = vmatprep.subr.mxu0 0.0
      %3117 = vmatpush1.xpose.msra.mxu0 0.0
      %3118 = vmatprep.subr.mxu0 0.0
      %3119 = vmatpush1.xpose.msra.mxu0 0.0
      %3120 = vmatprep.subr.mxu0 0.0
      %3121 = vmatpush1.xpose.msra.mxu0 0.0
      %3122 = vmatprep.subr.mxu0 0.0
      %3123 = vmatpush1.xpose.msra.mxu0 0.0
      %3124 = vmatprep.mubr.f32.mxu0 0.0
      %3125 = vmatmul.mubr.f32.gmra.mrb[0].mxu0 %v3052
      %v3126 = vpop.f32.mrb[0].mxu0
      %v3127 = vadd.f32 0.0, %v3126
      %v3128 = vpop.f32.mrb[0].mxu0
      %3129 = vmatprep.mubr.f32.mxu0 0.0
      %3130 = vmatmul.mubr.f32.gmra.mrb[0].mxu0 %v3054
      %v3131 = vpop.f32.mrb[0].mxu0
      %v3132 = vadd.f32 0.0, %v3131
      %v3133 = vpop.f32.mrb[0].mxu0
      %3134 = vdwg.mxu0
      %v3135 = vsel %vm734, %v2854, -inf
      %3136 = vmax.xlane.f32.xlu0 %v3135
      %v3137 = vpop.xlane.xlu0 %3136
      %v3138 = vsel %vm734, %v2859, -inf
      %3139 = vmax.xlane.f32.xlu0 %v3138
      %v3140 = vpop.xlane.xlu0 %3139
      %v3141 = vsel %vm734, %v2945, -inf
      %3142 = vmax.xlane.f32.xlu0 %v3141
      %v3143 = vpop.xlane.xlu0 %3142
      %v3144 = vsel %vm734, %v2950, -inf
      %3145 = vmax.xlane.f32.xlu0 %v3144
      %v3146 = vpop.xlane.xlu0 %3145
      %v3147 = vsel %vm734, %v3036, -inf
      %3148 = vmax.xlane.f32.xlu0 %v3147
      %v3149 = vpop.xlane.xlu0 %3148
      %v3150 = vsel %vm734, %v3041, -inf
      %3151 = vmax.xlane.f32.xlu0 %v3150
      %v3152 = vpop.xlane.xlu0 %3151
      %v3153 = vsel %vm734, %v3127, -inf
      %3154 = vmax.xlane.f32.xlu0 %v3153
      %v3155 = vpop.xlane.xlu0 %3154
      %v3156 = vsel %vm734, %v3132, -inf
      %3157 = vmax.xlane.f32.xlu0 %v3156
      %v3158 = vpop.xlane.xlu0 %3157
      %v3159 = vsub.f32 %v2854, %v3137
      %v3160 = vsub.f32 %v2859, %v3140
      %v3161 = vsub.f32 %v2945, %v3143
      %v3162 = vsub.f32 %v2950, %v3146
      %v3163 = vsub.f32 %v3036, %v3149
      %v3164 = vsub.f32 %v3041, %v3152
      %v3165 = vsub.f32 %v3127, %v3155
      %v3166 = vsub.f32 %v3132, %v3158
      %v3167 = vmul.f32 %v3159, 1.442695
      %v3168 = vpow.pop %v3167
      %v3169 = vmul.f32 %v3160, 1.442695
      %v3170 = vpow.pop %v3169
      %v3171 = vmul.f32 %v3161, 1.442695
      %v3172 = vpow.pop %v3171
      %v3173 = vmul.f32 %v3162, 1.442695
      %v3174 = vpow.pop %v3173
      %v3175 = vmul.f32 %v3163, 1.442695
      %v3176 = vpow.pop %v3175
      %v3177 = vmul.f32 %v3164, 1.442695
      %v3178 = vpow.pop %v3177
      %v3179 = vmul.f32 %v3165, 1.442695
      %v3180 = vpow.pop %v3179
      %v3181 = vmul.f32 %v3166, 1.442695
      %v3182 = vpow.pop %v3181
      %v3183 = vsel %vm734, %v3168, 0.0
      %3184 = vadd.xlane.f32.xlu0 %v3183
      %v3185 = vpop.xlane.xlu0 %3184
      %v3186 = vsel %vm734, %v3170, 0.0
      %3187 = vadd.xlane.f32.xlu0 %v3186
      %v3188 = vpop.xlane.xlu0 %3187
      %v3189 = vsel %vm734, %v3172, 0.0
      %3190 = vadd.xlane.f32.xlu0 %v3189
      %v3191 = vpop.xlane.xlu0 %3190
      %v3192 = vsel %vm734, %v3174, 0.0
      %3193 = vadd.xlane.f32.xlu0 %v3192
      %v3194 = vpop.xlane.xlu0 %3193
      %v3195 = vsel %vm734, %v3176, 0.0
      %3196 = vadd.xlane.f32.xlu0 %v3195
      %v3197 = vpop.xlane.xlu0 %3196
      %v3198 = vsel %vm734, %v3178, 0.0
      %3199 = vadd.xlane.f32.xlu0 %v3198
      %v3200 = vpop.xlane.xlu0 %3199
      %v3201 = vsel %vm734, %v3180, 0.0
      %3202 = vadd.xlane.f32.xlu0 %v3201
      %v3203 = vpop.xlane.xlu0 %3202
      %v3204 = vsel %vm734, %v3182, 0.0
      %3205 = vadd.xlane.f32.xlu0 %v3204
      %v3206 = vpop.xlane.xlu0 %3205
      %v3207 = vrcp.pop %v3185
      %v3208 = vrcp.pop %v3188
      %v3209 = vrcp.pop %v3191
      %v3210 = vrcp.pop %v3194
      %v3211 = vrcp.pop %v3197
      %v3212 = vrcp.pop %v3200
      %v3213 = vrcp.pop %v3203
      %v3214 = vrcp.pop %v3206
      %v3215 = vmul.f32 %v3168, %v3207
      %v3216 = vmul.f32 %v3170, %v3208
      %v3217 = vmul.f32 %v3172, %v3209
      %v3218 = vmul.f32 %v3174, %v3210
      %v3219 = vmul.f32 %v3176, %v3211
      %v3220 = vmul.f32 %v3178, %v3212
      %v3221 = vmul.f32 %v3180, %v3213
      %v3222 = vmul.f32 %v3182, %v3214
      %3223 = vrot.lane.b32.xlu0 %v339, 40
      %v3224 = vpop.permute.xlu0 %3223
      %3225 = vrot.lane.b32.xlu0 %v344, 40
      %v3226 = vpop.permute.xlu0 %3225
      %v3230 = vsel %vm734, %v3215, 0
      %v3233 = vsel %vm734, %v3216, 0
      %3235 = vmatprep.subr.mxu0 0.0
      %3236 = vmatpush1.msra.mxu0 %v3224
      %3237 = vmatprep.subr.mxu0 0.0
      %3238 = vmatpush1.msra.mxu0 %v3226
      %3239 = vmatprep.subr.mxu0 0.0
      %3240 = vmatpush1.msra.mxu0 0.0
      %3241 = vmatprep.subr.mxu0 0.0
      %3242 = vmatpush1.msra.mxu0 0.0
      %3243 = vmatprep.subr.mxu0 0.0
      %3244 = vmatpush1.msra.mxu0 0.0
      %3245 = vmatprep.subr.mxu0 0.0
      %3246 = vmatpush1.msra.mxu0 0.0
      %3247 = vmatprep.subr.mxu0 0.0
      %3248 = vmatpush1.msra.mxu0 0.0
      %3249 = vmatprep.subr.mxu0 0.0
      %3250 = vmatpush1.msra.mxu0 0.0
      %3251 = vmatprep.subr.mxu0 0.0
      %3252 = vmatpush1.msra.mxu0 0.0
      %3253 = vmatprep.subr.mxu0 0.0
      %3254 = vmatpush1.msra.mxu0 0.0
      %3255 = vmatprep.subr.mxu0 0.0
      %3256 = vmatpush1.msra.mxu0 0.0
      %3257 = vmatprep.subr.mxu0 0.0
      %3258 = vmatpush1.msra.mxu0 0.0
      %3259 = vmatprep.subr.mxu0 0.0
      %3260 = vmatpush1.msra.mxu0 0.0
      %3261 = vmatprep.subr.mxu0 0.0
      %3262 = vmatpush1.msra.mxu0 0.0
      %3263 = vmatprep.subr.mxu0 0.0
      %3264 = vmatpush1.msra.mxu0 0.0
      %3265 = vmatprep.subr.mxu0 0.0
      %3266 = vmatpush1.msra.mxu0 0.0
      %3267 = vmatprep.subr.mxu0 0.0
      %3268 = vmatpush1.msra.mxu0 0.0
      %3269 = vmatprep.subr.mxu0 0.0
      %3270 = vmatpush1.msra.mxu0 0.0
      %3271 = vmatprep.subr.mxu0 0.0
      %3272 = vmatpush1.msra.mxu0 0.0
      %3273 = vmatprep.subr.mxu0 0.0
      %3274 = vmatpush1.msra.mxu0 0.0
      %3275 = vmatprep.subr.mxu0 0.0
      %3276 = vmatpush1.msra.mxu0 0.0
      %3277 = vmatprep.subr.mxu0 0.0
      %3278 = vmatpush1.msra.mxu0 0.0
      %3279 = vmatprep.subr.mxu0 0.0
      %3280 = vmatpush1.msra.mxu0 0.0
      %3281 = vmatprep.subr.mxu0 0.0
      %3282 = vmatpush1.msra.mxu0 0.0
      %3283 = vmatprep.subr.mxu0 0.0
      %3284 = vmatpush1.msra.mxu0 0.0
      %3285 = vmatprep.subr.mxu0 0.0
      %3286 = vmatpush1.msra.mxu0 0.0
      %3287 = vmatprep.subr.mxu0 0.0
      %3288 = vmatpush1.msra.mxu0 0.0
      %3289 = vmatprep.subr.mxu0 0.0
      %3290 = vmatpush1.msra.mxu0 0.0
      %3291 = vmatprep.subr.mxu0 0.0
      %3292 = vmatpush1.msra.mxu0 0.0
      %3293 = vmatprep.subr.mxu0 0.0
      %3294 = vmatpush1.msra.mxu0 0.0
      %3295 = vmatprep.subr.mxu0 0.0
      %3296 = vmatpush1.msra.mxu0 0.0
      %3297 = vmatprep.subr.mxu0 0.0
      %3298 = vmatpush1.msra.mxu0 0.0
      %3299 = vmatprep.mubr.f32.mxu0 0.0
      %3300 = vmatmul.mubr.f32.gmra.mrb[0].mxu0 %v3230
      %v3301 = vpop.f32.mrb[0].mxu0
      %v3302 = vadd.f32 0.0, %v3301
      %v3303 = vpop.f32.mrb[0].mxu0
      %3304 = vmatprep.mubr.f32.mxu0 0.0
      %3305 = vmatmul.mubr.f32.gmra.mrb[0].mxu0 %v3233
      %v3306 = vpop.f32.mrb[0].mxu0
      %v3307 = vadd.f32 0.0, %v3306
      %v3308 = vpop.f32.mrb[0].mxu0
      %3309 = vdwg.mxu0
      %3310 = vrot.lane.b32.xlu0 %v349, 40
      %v3311 = vpop.permute.xlu0 %3310
      %3312 = vrot.lane.b32.xlu0 %v354, 40
      %v3313 = vpop.permute.xlu0 %3312
      %v3317 = vsel %vm734, %v3217, 0
      %v3320 = vsel %vm734, %v3218, 0
      %3322 = vmatprep.subr.mxu0 0.0
      %3323 = vmatpush1.msra.mxu0 %v3311
      %3324 = vmatprep.subr.mxu0 0.0
      %3325 = vmatpush1.msra.mxu0 %v3313
      %3326 = vmatprep.subr.mxu0 0.0
      %3327 = vmatpush1.msra.mxu0 0.0
      %3328 = vmatprep.subr.mxu0 0.0
      %3329 = vmatpush1.msra.mxu0 0.0
      %3330 = vmatprep.subr.mxu0 0.0
      %3331 = vmatpush1.msra.mxu0 0.0
      %3332 = vmatprep.subr.mxu0 0.0
      %3333 = vmatpush1.msra.mxu0 0.0
      %3334 = vmatprep.subr.mxu0 0.0
      %3335 = vmatpush1.msra.mxu0 0.0
      %3336 = vmatprep.subr.mxu0 0.0
      %3337 = vmatpush1.msra.mxu0 0.0
      %3338 = vmatprep.subr.mxu0 0.0
      %3339 = vmatpush1.msra.mxu0 0.0
      %3340 = vmatprep.subr.mxu0 0.0
      %3341 = vmatpush1.msra.mxu0 0.0
      %3342 = vmatprep.subr.mxu0 0.0
      %3343 = vmatpush1.msra.mxu0 0.0
      %3344 = vmatprep.subr.mxu0 0.0
      %3345 = vmatpush1.msra.mxu0 0.0
      %3346 = vmatprep.subr.mxu0 0.0
      %3347 = vmatpush1.msra.mxu0 0.0
      %3348 = vmatprep.subr.mxu0 0.0
      %3349 = vmatpush1.msra.mxu0 0.0
      %3350 = vmatprep.subr.mxu0 0.0
      %3351 = vmatpush1.msra.mxu0 0.0
      %3352 = vmatprep.subr.mxu0 0.0
      %3353 = vmatpush1.msra.mxu0 0.0
      %3354 = vmatprep.subr.mxu0 0.0
      %3355 = vmatpush1.msra.mxu0 0.0
      %3356 = vmatprep.subr.mxu0 0.0
      %3357 = vmatpush1.msra.mxu0 0.0
      %3358 = vmatprep.subr.mxu0 0.0
      %3359 = vmatpush1.msra.mxu0 0.0
      %3360 = vmatprep.subr.mxu0 0.0
      %3361 = vmatpush1.msra.mxu0 0.0
      %3362 = vmatprep.subr.mxu0 0.0
      %3363 = vmatpush1.msra.mxu0 0.0
      %3364 = vmatprep.subr.mxu0 0.0
      %3365 = vmatpush1.msra.mxu0 0.0
      %3366 = vmatprep.subr.mxu0 0.0
      %3367 = vmatpush1.msra.mxu0 0.0
      %3368 = vmatprep.subr.mxu0 0.0
      %3369 = vmatpush1.msra.mxu0 0.0
      %3370 = vmatprep.subr.mxu0 0.0
      %3371 = vmatpush1.msra.mxu0 0.0
      %3372 = vmatprep.subr.mxu0 0.0
      %3373 = vmatpush1.msra.mxu0 0.0
      %3374 = vmatprep.subr.mxu0 0.0
      %3375 = vmatpush1.msra.mxu0 0.0
      %3376 = vmatprep.subr.mxu0 0.0
      %3377 = vmatpush1.msra.mxu0 0.0
      %3378 = vmatprep.subr.mxu0 0.0
      %3379 = vmatpush1.msra.mxu0 0.0
      %3380 = vmatprep.subr.mxu0 0.0
      %3381 = vmatpush1.msra.mxu0 0.0
      %3382 = vmatprep.subr.mxu0 0.0
      %3383 = vmatpush1.msra.mxu0 0.0
      %3384 = vmatprep.subr.mxu0 0.0
      %3385 = vmatpush1.msra.mxu0 0.0
      %3386 = vmatprep.mubr.f32.mxu0 0.0
      %3387 = vmatmul.mubr.f32.gmra.mrb[0].mxu0 %v3317
      %v3388 = vpop.f32.mrb[0].mxu0
      %v3389 = vadd.f32 0.0, %v3388
      %v3390 = vpop.f32.mrb[0].mxu0
      %3391 = vmatprep.mubr.f32.mxu0 0.0
      %3392 = vmatmul.mubr.f32.gmra.mrb[0].mxu0 %v3320
      %v3393 = vpop.f32.mrb[0].mxu0
      %v3394 = vadd.f32 0.0, %v3393
      %v3395 = vpop.f32.mrb[0].mxu0
      %3396 = vdwg.mxu0
      %3397 = vrot.lane.b32.xlu0 %v359, 40
      %v3398 = vpop.permute.xlu0 %3397
      %3399 = vrot.lane.b32.xlu0 %v364, 40
      %v3400 = vpop.permute.xlu0 %3399
      %v3404 = vsel %vm734, %v3219, 0
      %v3407 = vsel %vm734, %v3220, 0
      %3409 = vmatprep.subr.mxu0 0.0
      %3410 = vmatpush1.msra.mxu0 %v3398
      %3411 = vmatprep.subr.mxu0 0.0
      %3412 = vmatpush1.msra.mxu0 %v3400
      %3413 = vmatprep.subr.mxu0 0.0
      %3414 = vmatpush1.msra.mxu0 0.0
      %3415 = vmatprep.subr.mxu0 0.0
      %3416 = vmatpush1.msra.mxu0 0.0
      %3417 = vmatprep.subr.mxu0 0.0
      %3418 = vmatpush1.msra.mxu0 0.0
      %3419 = vmatprep.subr.mxu0 0.0
      %3420 = vmatpush1.msra.mxu0 0.0
      %3421 = vmatprep.subr.mxu0 0.0
      %3422 = vmatpush1.msra.mxu0 0.0
      %3423 = vmatprep.subr.mxu0 0.0
      %3424 = vmatpush1.msra.mxu0 0.0
      %3425 = vmatprep.subr.mxu0 0.0
      %3426 = vmatpush1.msra.mxu0 0.0
      %3427 = vmatprep.subr.mxu0 0.0
      %3428 = vmatpush1.msra.mxu0 0.0
      %3429 = vmatprep.subr.mxu0 0.0
      %3430 = vmatpush1.msra.mxu0 0.0
      %3431 = vmatprep.subr.mxu0 0.0
      %3432 = vmatpush1.msra.mxu0 0.0
      %3433 = vmatprep.subr.mxu0 0.0
      %3434 = vmatpush1.msra.mxu0 0.0
      %3435 = vmatprep.subr.mxu0 0.0
      %3436 = vmatpush1.msra.mxu0 0.0
      %3437 = vmatprep.subr.mxu0 0.0
      %3438 = vmatpush1.msra.mxu0 0.0
      %3439 = vmatprep.subr.mxu0 0.0
      %3440 = vmatpush1.msra.mxu0 0.0
      %3441 = vmatprep.subr.mxu0 0.0
      %3442 = vmatpush1.msra.mxu0 0.0
      %3443 = vmatprep.subr.mxu0 0.0
      %3444 = vmatpush1.msra.mxu0 0.0
      %3445 = vmatprep.subr.mxu0 0.0
      %3446 = vmatpush1.msra.mxu0 0.0
      %3447 = vmatprep.subr.mxu0 0.0
      %3448 = vmatpush1.msra.mxu0 0.0
      %3449 = vmatprep.subr.mxu0 0.0
      %3450 = vmatpush1.msra.mxu0 0.0
      %3451 = vmatprep.subr.mxu0 0.0
      %3452 = vmatpush1.msra.mxu0 0.0
      %3453 = vmatprep.subr.mxu0 0.0
      %3454 = vmatpush1.msra.mxu0 0.0
      %3455 = vmatprep.subr.mxu0 0.0
      %3456 = vmatpush1.msra.mxu0 0.0
      %3457 = vmatprep.subr.mxu0 0.0
      %3458 = vmatpush1.msra.mxu0 0.0
      %3459 = vmatprep.subr.mxu0 0.0
      %3460 = vmatpush1.msra.mxu0 0.0
      %3461 = vmatprep.subr.mxu0 0.0
      %3462 = vmatpush1.msra.mxu0 0.0
      %3463 = vmatprep.subr.mxu0 0.0
      %3464 = vmatpush1.msra.mxu0 0.0
      %3465 = vmatprep.subr.mxu0 0.0
      %3466 = vmatpush1.msra.mxu0 0.0
      %3467 = vmatprep.subr.mxu0 0.0
      %3468 = vmatpush1.msra.mxu0 0.0
      %3469 = vmatprep.subr.mxu0 0.0
      %3470 = vmatpush1.msra.mxu0 0.0
      %3471 = vmatprep.subr.mxu0 0.0
      %3472 = vmatpush1.msra.mxu0 0.0
      %3473 = vmatprep.mubr.f32.mxu0 0.0
      %3474 = vmatmul.mubr.f32.gmra.mrb[0].mxu0 %v3404
      %v3475 = vpop.f32.mrb[0].mxu0
      %v3476 = vadd.f32 0.0, %v3475
      %v3477 = vpop.f32.mrb[0].mxu0
      %3478 = vmatprep.mubr.f32.mxu0 0.0
      %3479 = vmatmul.mubr.f32.gmra.mrb[0].mxu0 %v3407
      %v3480 = vpop.f32.mrb[0].mxu0
      %v3481 = vadd.f32 0.0, %v3480
      %v3482 = vpop.f32.mrb[0].mxu0
      %3483 = vdwg.mxu0
      %3484 = vrot.lane.b32.xlu0 %v369, 40
      %v3485 = vpop.permute.xlu0 %3484
      %3486 = vrot.lane.b32.xlu0 %v374, 40
      %v3487 = vpop.permute.xlu0 %3486
      %v3491 = vsel %vm734, %v3221, 0
      %v3494 = vsel %vm734, %v3222, 0
      %3496 = vmatprep.subr.mxu0 0.0
      %3497 = vmatpush1.msra.mxu0 %v3485
      %3498 = vmatprep.subr.mxu0 0.0
      %3499 = vmatpush1.msra.mxu0 %v3487
      %3500 = vmatprep.subr.mxu0 0.0
      %3501 = vmatpush1.msra.mxu0 0.0
      %3502 = vmatprep.subr.mxu0 0.0
      %3503 = vmatpush1.msra.mxu0 0.0
      %3504 = vmatprep.subr.mxu0 0.0
      %3505 = vmatpush1.msra.mxu0 0.0
      %3506 = vmatprep.subr.mxu0 0.0
      %3507 = vmatpush1.msra.mxu0 0.0
      %3508 = vmatprep.subr.mxu0 0.0
      %3509 = vmatpush1.msra.mxu0 0.0
      %3510 = vmatprep.subr.mxu0 0.0
      %3511 = vmatpush1.msra.mxu0 0.0
      %3512 = vmatprep.subr.mxu0 0.0
      %3513 = vmatpush1.msra.mxu0 0.0
      %3514 = vmatprep.subr.mxu0 0.0
      %3515 = vmatpush1.msra.mxu0 0.0
      %3516 = vmatprep.subr.mxu0 0.0
      %3517 = vmatpush1.msra.mxu0 0.0
      %3518 = vmatprep.subr.mxu0 0.0
      %3519 = vmatpush1.msra.mxu0 0.0
      %3520 = vmatprep.subr.mxu0 0.0
      %3521 = vmatpush1.msra.mxu0 0.0
      %3522 = vmatprep.subr.mxu0 0.0
      %3523 = vmatpush1.msra.mxu0 0.0
      %3524 = vmatprep.subr.mxu0 0.0
      %3525 = vmatpush1.msra.mxu0 0.0
      %3526 = vmatprep.subr.mxu0 0.0
      %3527 = vmatpush1.msra.mxu0 0.0
      %3528 = vmatprep.subr.mxu0 0.0
      %3529 = vmatpush1.msra.mxu0 0.0
      %3530 = vmatprep.subr.mxu0 0.0
      %3531 = vmatpush1.msra.mxu0 0.0
      %3532 = vmatprep.subr.mxu0 0.0
      %3533 = vmatpush1.msra.mxu0 0.0
      %3534 = vmatprep.subr.mxu0 0.0
      %3535 = vmatpush1.msra.mxu0 0.0
      %3536 = vmatprep.subr.mxu0 0.0
      %3537 = vmatpush1.msra.mxu0 0.0
      %3538 = vmatprep.subr.mxu0 0.0
      %3539 = vmatpush1.msra.mxu0 0.0
      %3540 = vmatprep.subr.mxu0 0.0
      %3541 = vmatpush1.msra.mxu0 0.0
      %3542 = vmatprep.subr.mxu0 0.0
      %3543 = vmatpush1.msra.mxu0 0.0
      %3544 = vmatprep.subr.mxu0 0.0
      %3545 = vmatpush1.msra.mxu0 0.0
      %3546 = vmatprep.subr.mxu0 0.0
      %3547 = vmatpush1.msra.mxu0 0.0
      %3548 = vmatprep.subr.mxu0 0.0
      %3549 = vmatpush1.msra.mxu0 0.0
      %3550 = vmatprep.subr.mxu0 0.0
      %3551 = vmatpush1.msra.mxu0 0.0
      %3552 = vmatprep.subr.mxu0 0.0
      %3553 = vmatpush1.msra.mxu0 0.0
      %3554 = vmatprep.subr.mxu0 0.0
      %3555 = vmatpush1.msra.mxu0 0.0
      %3556 = vmatprep.subr.mxu0 0.0
      %3557 = vmatpush1.msra.mxu0 0.0
      %3558 = vmatprep.subr.mxu0 0.0
      %3559 = vmatpush1.msra.mxu0 0.0
      %3560 = vmatprep.mubr.f32.mxu0 0.0
      %3561 = vmatmul.mubr.f32.gmra.mrb[0].mxu0 %v3491
      %v3562 = vpop.f32.mrb[0].mxu0
      %v3563 = vadd.f32 0.0, %v3562
      %v3564 = vpop.f32.mrb[0].mxu0
      %3565 = vmatprep.mubr.f32.mxu0 0.0
      %3566 = vmatmul.mubr.f32.gmra.mrb[0].mxu0 %v3494
      %v3567 = vpop.f32.mrb[0].mxu0
      %v3568 = vadd.f32 0.0, %v3567
      %v3569 = vpop.f32.mrb[0].mxu0
      %3570 = vdwg.mxu0
      %3579 = vrot.lane.b32.xlu0 %v1702, 8
      %v3580 = vpop.permute.xlu0 %3579
      %3581 = vrot.lane.b32.xlu0 %v1707, 8
      %v3582 = vpop.permute.xlu0 %3581
      %3583 = vrot.lane.b32.xlu0 %v1789, 8
      %v3584 = vpop.permute.xlu0 %3583
      %3585 = vrot.lane.b32.xlu0 %v1794, 8
      %v3586 = vpop.permute.xlu0 %3585
      %3587 = vrot.lane.b32.xlu0 %v1876, 8
      %v3588 = vpop.permute.xlu0 %3587
      %3589 = vrot.lane.b32.xlu0 %v1881, 8
      %v3590 = vpop.permute.xlu0 %3589
      %3591 = vrot.lane.b32.xlu0 %v1963, 8
      %v3592 = vpop.permute.xlu0 %3591
      %3593 = vrot.lane.b32.xlu0 %v1968, 8
      %v3594 = vpop.permute.xlu0 %3593
      %3611 = vrot.lane.b32.xlu0 %v2502, 16
      %v3612 = vpop.permute.xlu0 %3611
      %3613 = vrot.lane.b32.xlu0 %v2507, 16
      %v3614 = vpop.permute.xlu0 %3613
      %3615 = vrot.lane.b32.xlu0 %v2589, 16
      %v3616 = vpop.permute.xlu0 %3615
      %3617 = vrot.lane.b32.xlu0 %v2594, 16
      %v3618 = vpop.permute.xlu0 %3617
      %3619 = vrot.lane.b32.xlu0 %v2676, 16
      %v3620 = vpop.permute.xlu0 %3619
      %3621 = vrot.lane.b32.xlu0 %v2681, 16
      %v3622 = vpop.permute.xlu0 %3621
      %3623 = vrot.lane.b32.xlu0 %v2763, 16
      %v3624 = vpop.permute.xlu0 %3623
      %3625 = vrot.lane.b32.xlu0 %v2768, 16
      %v3626 = vpop.permute.xlu0 %3625
      %3643 = vrot.lane.b32.xlu0 %v3302, 24
      %v3644 = vpop.permute.xlu0 %3643
      %3645 = vrot.lane.b32.xlu0 %v3307, 24
      %v3646 = vpop.permute.xlu0 %3645
      %3647 = vrot.lane.b32.xlu0 %v3389, 24
      %v3648 = vpop.permute.xlu0 %3647
      %3649 = vrot.lane.b32.xlu0 %v3394, 24
      %v3650 = vpop.permute.xlu0 %3649
      %3651 = vrot.lane.b32.xlu0 %v3476, 24
      %v3652 = vpop.permute.xlu0 %3651
      %3653 = vrot.lane.b32.xlu0 %v3481, 24
      %v3654 = vpop.permute.xlu0 %3653
      %3655 = vrot.lane.b32.xlu0 %v3563, 24
      %v3656 = vpop.permute.xlu0 %3655
      %3657 = vrot.lane.b32.xlu0 %v3568, 24
      %v3658 = vpop.permute.xlu0 %3657
      %v3667 = vsel %vm383, %v902, %v3580
      %v3668 = vsel %vm383, %v907, %v3582
      %v3669 = vsel %vm383, %v989, %v3584
      %v3670 = vsel %vm383, %v994, %v3586
      %v3671 = vsel %vm383, %v1076, %v3588
      %v3672 = vsel %vm383, %v1081, %v3590
      %v3673 = vsel %vm383, %v1163, %v3592
      %v3674 = vsel %vm383, %v1168, %v3594
      %v3675 = vsel %vm734, %v3667, %v3612
      %v3676 = vsel %vm734, %v3668, %v3614
      %v3677 = vsel %vm734, %v3669, %v3616
      %v3678 = vsel %vm734, %v3670, %v3618
      %v3679 = vsel %vm734, %v3671, %v3620
      %v3680 = vsel %vm734, %v3672, %v3622
      %v3681 = vsel %vm734, %v3673, %v3624
      %v3682 = vsel %vm734, %v3674, %v3626
      %vm3683 = vcmask 195584
      %v3684 = vsel %vm3683, %v3675, %v3644
      %v3685 = vsel %vm3683, %v3676, %v3646
      %v3686 = vsel %vm3683, %v3677, %v3648
      %v3687 = vsel %vm3683, %v3678, %v3650
      %v3688 = vsel %vm3683, %v3679, %v3652
      %v3689 = vsel %vm3683, %v3680, %v3654
      %v3690 = vsel %vm3683, %v3681, %v3656
      %v3691 = vsel %vm3683, %v3682, %v3658
      %v3692 = vadd.f32 %v3684, %v228
      %v3693 = vadd.f32 %v3685, %v229
      %v3694 = vadd.f32 %v3686, %v230
      %v3695 = vadd.f32 %v3687, %v231
      %v3696 = vadd.f32 %v3688, %v232
      %v3697 = vadd.f32 %v3689, %v233
      %v3698 = vadd.f32 %v3690, %v234
      %v3699 = vadd.f32 %v3691, %v235
      %v3700 = vsel %vm247, %v3692, 0.0
      %3701 = vadd.xlane.f32.xlu0 %v3700
      %v3702 = vpop.xlane.xlu0 %3701
      %v3703 = vsel %vm247, %v3693, 0.0
      %3704 = vadd.xlane.f32.xlu0 %v3703
      %v3705 = vpop.xlane.xlu0 %3704
      %v3706 = vsel %vm247, %v3694, 0.0
      %3707 = vadd.xlane.f32.xlu0 %v3706
      %v3708 = vpop.xlane.xlu0 %3707
      %v3709 = vsel %vm247, %v3695, 0.0
      %3710 = vadd.xlane.f32.xlu0 %v3709
      %v3711 = vpop.xlane.xlu0 %3710
      %v3712 = vsel %vm247, %v3696, 0.0
      %3713 = vadd.xlane.f32.xlu0 %v3712
      %v3714 = vpop.xlane.xlu0 %3713
      %v3715 = vsel %vm247, %v3697, 0.0
      %3716 = vadd.xlane.f32.xlu0 %v3715
      %v3717 = vpop.xlane.xlu0 %3716
      %v3718 = vsel %vm247, %v3698, 0.0
      %3719 = vadd.xlane.f32.xlu0 %v3718
      %v3720 = vpop.xlane.xlu0 %3719
      %v3721 = vsel %vm247, %v3699, 0.0
      %3722 = vadd.xlane.f32.xlu0 %v3721
      %v3723 = vpop.xlane.xlu0 %3722
      %v3724 = vrcp.pop 32.0
      %v3725 = vmul.f32 %v3702, %v3724
      %v3726 = vmul.f32 %v3705, %v3724
      %v3727 = vmul.f32 %v3708, %v3724
      %v3728 = vmul.f32 %v3711, %v3724
      %v3729 = vmul.f32 %v3714, %v3724
      %v3730 = vmul.f32 %v3717, %v3724
      %v3731 = vmul.f32 %v3720, %v3724
      %v3732 = vmul.f32 %v3723, %v3724
      %v3733 = vsub.f32 %v3692, %v3725
      %v3734 = vsub.f32 %v3693, %v3726
      %v3735 = vsub.f32 %v3694, %v3727
      %v3736 = vsub.f32 %v3695, %v3728
      %v3737 = vsub.f32 %v3696, %v3729
      %v3738 = vsub.f32 %v3697, %v3730
      %v3739 = vsub.f32 %v3698, %v3731
      %v3740 = vsub.f32 %v3699, %v3732
      %v3741 = vmul.f32 %v3733, %v3733
      %v3742 = vmul.f32 %v3734, %v3734
      %v3743 = vmul.f32 %v3735, %v3735
      %v3744 = vmul.f32 %v3736, %v3736
      %v3745 = vmul.f32 %v3737, %v3737
      %v3746 = vmul.f32 %v3738, %v3738
      %v3747 = vmul.f32 %v3739, %v3739
      %v3748 = vmul.f32 %v3740, %v3740
      %v3749 = vsel %vm247, %v3741, 0.0
      %3750 = vadd.xlane.f32.xlu0 %v3749
      %v3751 = vpop.xlane.xlu0 %3750
      %v3752 = vsel %vm247, %v3742, 0.0
      %3753 = vadd.xlane.f32.xlu0 %v3752
      %v3754 = vpop.xlane.xlu0 %3753
      %v3755 = vsel %vm247, %v3743, 0.0
      %3756 = vadd.xlane.f32.xlu0 %v3755
      %v3757 = vpop.xlane.xlu0 %3756
      %v3758 = vsel %vm247, %v3744, 0.0
      %3759 = vadd.xlane.f32.xlu0 %v3758
      %v3760 = vpop.xlane.xlu0 %3759
      %v3761 = vsel %vm247, %v3745, 0.0
      %3762 = vadd.xlane.f32.xlu0 %v3761
      %v3763 = vpop.xlane.xlu0 %3762
      %v3764 = vsel %vm247, %v3746, 0.0
      %3765 = vadd.xlane.f32.xlu0 %v3764
      %v3766 = vpop.xlane.xlu0 %3765
      %v3767 = vsel %vm247, %v3747, 0.0
      %3768 = vadd.xlane.f32.xlu0 %v3767
      %v3769 = vpop.xlane.xlu0 %3768
      %v3770 = vsel %vm247, %v3748, 0.0
      %3771 = vadd.xlane.f32.xlu0 %v3770
      %v3772 = vpop.xlane.xlu0 %3771
      %v3773 = vmul.f32 %v3751, %v3724
      %v3774 = vmul.f32 %v3754, %v3724
      %v3775 = vmul.f32 %v3757, %v3724
      %v3776 = vmul.f32 %v3760, %v3724
      %v3777 = vmul.f32 %v3763, %v3724
      %v3778 = vmul.f32 %v3766, %v3724
      %v3779 = vmul.f32 %v3769, %v3724
      %v3780 = vmul.f32 %v3772, %v3724
      %v3781 = vadd.f32 %v3773, 1e-05
      %v3782 = vadd.f32 %v3774, 1e-05
      %v3783 = vadd.f32 %v3775, 1e-05
      %v3784 = vadd.f32 %v3776, 1e-05
      %v3785 = vadd.f32 %v3777, 1e-05
      %v3786 = vadd.f32 %v3778, 1e-05
      %v3787 = vadd.f32 %v3779, 1e-05
      %v3788 = vadd.f32 %v3780, 1e-05
      %v3789 = vrsqrt.pop %v3781
      %v3790 = vrsqrt.pop %v3782
      %v3791 = vrsqrt.pop %v3783
      %v3792 = vrsqrt.pop %v3784
      %v3793 = vrsqrt.pop %v3785
      %v3794 = vrsqrt.pop %v3786
      %v3795 = vrsqrt.pop %v3787
      %v3796 = vrsqrt.pop %v3788
      %v3797 = vmul.f32 %v3733, %v3789
      %v3798 = vmul.f32 %v3734, %v3790
      %v3799 = vmul.f32 %v3735, %v3791
      %v3800 = vmul.f32 %v3736, %v3792
      %v3801 = vmul.f32 %v3737, %v3793
      %v3802 = vmul.f32 %v3738, %v3794
      %v3803 = vmul.f32 %v3739, %v3795
      %v3804 = vmul.f32 %v3740, %v3796
      %v3805 = vld [vmem:[%s3] sm:$0x1]
      %v3807 = vlaneseq
      %v3808 = vshrl.u32 %v3807, 7
      %v3809 = vsub.s32 0, %v3808
      %v3810 = vrot.slane %v3805, %v3809
      %v3812 = vmul.f32 %v3797, %v3810
      %v3813 = vmul.f32 %v3798, %v3810
      %v3814 = vmul.f32 %v3799, %v3810
      %v3815 = vmul.f32 %v3800, %v3810
      %v3816 = vmul.f32 %v3801, %v3810
      %v3817 = vmul.f32 %v3802, %v3810
      %v3818 = vmul.f32 %v3803, %v3810
      %v3819 = vmul.f32 %v3804, %v3810
      %v3820 = vld [vmem:[%s4] sm:$0x1]
      %v3822 = vlaneseq
      %v3823 = vshrl.u32 %v3822, 7
      %v3824 = vsub.s32 0, %v3823
      %v3825 = vrot.slane %v3820, %v3824
      %v3827 = vadd.f32 %v3812, %v3825
      %v3828 = vadd.f32 %v3813, %v3825
      %v3829 = vadd.f32 %v3814, %v3825
      %v3830 = vadd.f32 %v3815, %v3825
      %v3831 = vadd.f32 %v3816, %v3825
      %v3832 = vadd.f32 %v3817, %v3825
      %v3833 = vadd.f32 %v3818, %v3825
      %v3834 = vadd.f32 %v3819, %v3825
      %3835 = vst.msk [vmem:[%s226] sm:$0xff] %vm247, %v3827
      %3836 = vst.msk [vmem:[%s226 + $0x8] sm:$0xff] %vm247, %v3828
      %3837 = vst.msk [vmem:[%s226 + $0x10] sm:$0xff] %vm247, %v3829
      %3838 = vst.msk [vmem:[%s226 + $0x18] sm:$0xff] %vm247, %v3830
      %3839 = vst.msk [vmem:[%s226 + $0x20] sm:$0xff] %vm247, %v3831
      %3840 = vst.msk [vmem:[%s226 + $0x28] sm:$0xff] %vm247, %v3832
      %3841 = vst.msk [vmem:[%s226 + $0x30] sm:$0xff] %vm247, %v3833
      %3842 = vst.msk [vmem:[%s226 + $0x38] sm:$0xff] %vm247, %v3834
      %s3843 = smul.u32 8, %s16
      %p3844 = scmp.lt.s32.totalorder %s3843, 15
      %s3845 = scalar_select %p3844, %s3843, 15
      %s3846 = smul.addr %s3845, 8
      %s3847 = scalar_lea.vmem %s5, %s3846
      // Predicated region
      $region41: #{tpu_custom_call.1} parent=39 // pred_check
        %p3848 = pneg %p144
      $region42: #{tpu_custom_call.1} parent=39 // pred_check_branch
        %3850 = sbr.rel (%p3848) target = $region44
      $region43: #{tpu_custom_call.1} parent=39 // pred_region
        %s3851 = smul.u32 8, %s16
      $region44: #{tpu_custom_call.1} parent=39 // pred_fallthru
        _
    $region40: #{tpu_custom_call.1} parent=5 // pred_fallthru
      _
    %p3852 = scmp.le.s32.totalorder 2, %s11
    // Predicated region
    $region45: #{tpu_custom_call.1} parent=5 // pred_check
      %p3853 = pneg %p3852
    $region46: #{tpu_custom_call.1} parent=5 // pred_check_branch
      %3855 = sbr.rel (%p3853) target = $region48
    $region47: #{tpu_custom_call.1} parent=5 // pred_region
      %s3856 = ssub.s32 %s11, 2
      // Predicated region
      $region49: #{tpu_custom_call.1} parent=47 // pred_check
        %p3857 = pneg %p150
      $region50: #{tpu_custom_call.1} parent=47 // pred_check_branch
        %3859 = sbr.rel (%p3857) target = $region52
      $region51: #{tpu_custom_call.1} parent=47 // pred_region
        %s3860 = smul.u32 8, %s17
        %p3861 = scmp.lt.s32.totalorder %s3860, 15
        %s3862 = scalar_select %p3861, %s3860, 15
        %s3863 = smul.addr %s3862, 8
        %s3864 = scalar_lea.vmem %s5, %s3863
      $region52: #{tpu_custom_call.1} parent=47 // pred_fallthru
        _
    $region48: #{tpu_custom_call.1} parent=5 // pred_fallthru
      _
  $region6: #{tpu_custom_call.1} parent=0 // loop_footer
    %s15 = sadd.s32 1, %s11
  $region7: #{tpu_custom_call.1} parent=0 // loop_footer_branch
    %10 = sbr.rel target = $region3
  $region8: #{tpu_custom_call.1} parent=0 // loop_exit
    _

</llo_original>
